<compile_context>
chip_gen: v7x
topology: tpu7x:2x2x1
jax: 0.10.0
libtpu: 0.0.40
codegen_flags: <defaults>
</compile_context>

<pallas_src>
import jax
import jax.numpy as jnp
from jax.experimental import pallas as pl
from jax.experimental.pallas import tpu as pltpu


# ----------------------------------------------------------------------------
# Fused kernel
# ----------------------------------------------------------------------------
def _bilstm_fused_kernel(
    x_ref,                                   # (S*Bp, 2C)  [natural | reversed] time-major
    wih0_ref, whh0_ref, b0_ref,              # layer 0: (2C,8H), (2H,8H), (1,8H)
    wih1_ref, whh1_ref, b1_ref,              # layer 1: (4H,8H), (2H,8H), (1,8H)
    wih2f_ref, whh2f_ref, b2f_ref,           # layer 2 fwd: (2H,4H), (H,4H), (1,4H)
    wih2b_ref, b2b_ref,                      # layer 2 bwd (first step only): (2H,4H), (1,4H)
    fc1w_ref, fc1b_ref,                      # (2H, FP), (1, FP)
    fc2w_ref, fc2b_ref,                      # (1, FP), (1, 1)
    out_ref,                                 # (Bp, 1)
):
    Bp = out_ref.shape[0]
    SB = x_ref.shape[0]
    S = SB // Bp
    H2 = whh0_ref.shape[0]                   # 2H
    H = H2 // 2

    def sig(v):                              # sigmoid via a single tanh EUP push
        return 0.5 * jnp.tanh(0.5 * v) + 0.5

    def bidir_layer(xg, whh):
        """One bidirectional layer, both directions fused.

        xg:  (S*Bp, 8H) pre-scheduled gate projections (+bias).  Gate columns are
             [i_f|i_b|f_f|f_b|o_f|o_b|g_f|g_b]; row block t already holds input
             position t in the forward columns and position S-1-t in the
             backward columns (scheduling baked into the packed weights).
        whh: (2H, 8H) block recurrent weights for the packed state [h_f | h_b].
        Returns hs[t] = (Bp, 2H) = [h_f at position t | h_b at position S-1-t].
        """
        h = jnp.zeros((Bp, H2), jnp.float32)
        c = jnp.zeros((Bp, H2), jnp.float32)
        hs = []
        for t in range(S):                   # S is small & static: full unroll
            g = xg[t * Bp:(t + 1) * Bp, :]
            if t > 0:                        # state is exactly zero at t == 0
                g = g + jnp.dot(h, whh, preferred_element_type=jnp.float32)
            sg = sig(g[:, 0:6 * H])          # [i | f | o], both directions (192 lanes)
            gg = jnp.tanh(g[:, 6 * H:8 * H])                 # [g], both directions
            c = sg[:, 2 * H:4 * H] * c + sg[:, 0:2 * H] * gg
            h = sg[:, 4 * H:6 * H] * jnp.tanh(c)
            hs.append(h)
        return hs

    def stack_bidir(hs):
        """Layer output sequence in natural and reversed time order, (S*Bp, 2H) each."""
        rows = [jnp.concatenate([hs[p][:, 0:H], hs[S - 1 - p][:, H:H2]], axis=-1)
                for p in range(S)]
        return jnp.concatenate(rows, axis=0), jnp.concatenate(rows[::-1], axis=0)

    # ---- layer 0 ----
    xg0 = (jnp.dot(x_ref[...], wih0_ref[...], preferred_element_type=jnp.float32)
           + b0_ref[...])
    nat0, rev0 = stack_bidir(bidir_layer(xg0, whh0_ref[...]))

    # ---- layer 1 ----
    xg1 = (jnp.dot(jnp.concatenate([nat0, rev0], axis=-1), wih1_ref[...],
                   preferred_element_type=jnp.float32) + b1_ref[...])
    nat1, _ = stack_bidir(bidir_layer(xg1, whh1_ref[...]))

    # ---- layer 2, forward direction (full recurrence; only last h is used) ----
    # gate columns [i|f|o|g]
    xg2 = (jnp.dot(nat1, wih2f_ref[...], preferred_element_type=jnp.float32)
           + b2f_ref[...])
    whh2 = whh2f_ref[...]
    h_f = jnp.zeros((Bp, H), jnp.float32)
    c_f = jnp.zeros((Bp, H), jnp.float32)
    for t in range(S):
        g = xg2[t * Bp:(t + 1) * Bp, :]
        if t > 0:
            g = g + jnp.dot(h_f, whh2, preferred_element_type=jnp.float32)
        sg = sig(g[:, 0:3 * H])                              # [i | f | o]
        gg = jnp.tanh(g[:, 3 * H:4 * H])
        c_f = sg[:, H:2 * H] * c_f + sg[:, 0:H] * gg
        h_f = sg[:, 2 * H:3 * H] * jnp.tanh(c_f)

    # ---- layer 2, backward direction: the head only reads position S-1, which
    # is the backward pass's FIRST step (zero initial state) -> pure gate math.
    gb = (jnp.dot(nat1[(S - 1) * Bp:S * Bp, :], wih2b_ref[...],
                  preferred_element_type=jnp.float32) + b2b_ref[...])
    sgb = sig(gb[:, 0:3 * H])
    c_b = sgb[:, 0:H] * jnp.tanh(gb[:, 3 * H:4 * H])         # f-gate * c0 == 0
    h_b = sgb[:, 2 * H:3 * H] * jnp.tanh(c_b)

    # ---- head: fc1 -> relu -> fc2 ----
    # TODO(synk): nn.Dropout training-mode stochastic masking not implemented;
    # dropout is an identity here (eval semantics).
    last = jnp.concatenate([h_f, h_b], axis=-1)              # (Bp, 2H)
    hid = (jnp.dot(last, fc1w_ref[...], preferred_element_type=jnp.float32)
           + fc1b_ref[...])
    hid = jnp.maximum(hid, 0.0)
    # fc2 as VPU multiply + lane reduce (fc2 weight stored as a (1, FP) row).
    out_ref[...] = (jnp.sum(hid * fc2w_ref[...], axis=-1, keepdims=True)
                    + fc2b_ref[...])


# ----------------------------------------------------------------------------
# Wrapper
# ----------------------------------------------------------------------------
def _full_spec(shape):
    zeros = (0,) * len(shape)
    return pl.BlockSpec(shape, lambda i, _z=zeros: _z)


@jax.jit
def bilstm_forward(x, packed):
    """x: (B, S, C) float32 -> (B, 1) float32."""
    B, S, C = x.shape
    Bp = ((max(B, 8) + 7) // 8) * 8                      # pad batch to 8-sublane tile
    xp = jnp.zeros((Bp, S, C), jnp.float32).at[:B].set(x)
    x_tm = jnp.transpose(xp, (1, 0, 2))                  # (S, Bp, C) time-major
    x_nat = x_tm.reshape(S * Bp, C)
    x_rev = x_tm[::-1].reshape(S * Bp, C)
    x_comb = jnp.concatenate([x_nat, x_rev], axis=-1)    # (S*Bp, 2C)
    args = (x_comb, *packed)
    out = pl.pallas_call(
        _bilstm_fused_kernel,
        out_shape=jax.ShapeDtypeStruct((Bp, 1), jnp.float32),
        grid=(1,),
        in_specs=[_full_spec(a.shape) for a in args],
        out_specs=_full_spec((Bp, 1)),
        compiler_params=pltpu.CompilerParams(dimension_semantics=("arbitrary",)),
    )(*args)
    return out[:B]


# ----------------------------------------------------------------------------
# Parameter packing (PyTorch layout -> fused-kernel layout)
# ----------------------------------------------------------------------------
def pack_params(raw):
    H = raw["lstm"][0][0][1].shape[1]                    # whh_f is (4H, H)
    G = 4 * H

    def gate_cols(w_t):
        # w_t: (Din, 4H), PyTorch gate column order [i|f|g|o]
        return (w_t[:, 0:H], w_t[:, H:2 * H], w_t[:, 2 * H:3 * H], w_t[:, 3 * H:4 * H])

    def pack_bidir(wf_t, wb_t):
        # -> (Din, 8H) kernel layout [i_f|i_b|f_f|f_b|o_f|o_b|g_f|g_b]
        i_f, f_f, g_f, o_f = gate_cols(wf_t)
        i_b, f_b, g_b, o_b = gate_cols(wb_t)
        return jnp.concatenate([i_f, i_b, f_f, f_b, o_f, o_b, g_f, g_b], axis=1)

    def pack_uni(w_t):
        # -> (Din, 4H) kernel layout [i|f|o|g] (single direction)
        i, f, g, o = gate_cols(w_t)
        return jnp.concatenate([i, f, o, g], axis=1)

    flat = []
    for l in range(2):                                   # layers 0, 1: fused directions
        (wih_f, whh_f, bih_f, bhh_f), (wih_b, whh_b, bih_b, bhh_b) = raw["lstm"][l]
        din = wih_f.shape[1]
        zi = jnp.zeros((din, G), jnp.float32)
        zh = jnp.zeros((H, G), jnp.float32)
        # Input projection consumes [natural-order rows | reversed-order rows]:
        # top rows feed the forward gate columns, bottom rows the backward ones.
        wih = pack_bidir(jnp.concatenate([wih_f.T, zi], axis=0),
                         jnp.concatenate([zi, wih_b.T], axis=0))        # (2*din, 8H)
        # Recurrence consumes the packed state [h_f | h_b].
        whh = pack_bidir(jnp.concatenate([whh_f.T, zh], axis=0),
                         jnp.concatenate([zh, whh_b.T], axis=0))        # (2H, 8H)
        bias = pack_bidir((bih_f + bhh_f)[None, :], (bih_b + bhh_b)[None, :])  # (1, 8H)
        flat += [wih, whh, bias]

    # layer 2: forward recurrence only; backward contributes only its first step.
    (wih_f, whh_f, bih_f, bhh_f), (wih_b, whh_b, bih_b, bhh_b) = raw["lstm"][2]
    flat += [pack_uni(wih_f.T), pack_uni(whh_f.T), pack_uni((bih_f + bhh_f)[None, :]),
             pack_uni(wih_b.T), pack_uni((bih_b + bhh_b)[None, :])]

    # head: pad width 1600 -> multiple of 128 with zeros (numerics unchanged);
    # fc2 kept as a (1, FP) row for the in-kernel multiply + lane reduce.
    fc1_w, fc1_b = raw["fc1_w"], raw["fc1_b"]            # (1600, 2H), (1600,)
    fc2_w, fc2_b = raw["fc2_w"], raw["fc2_b"]            # (1, 1600),  (1,)
    F = fc1_w.shape[0]
    FP = ((F + 127) // 128) * 128
    fc1w = jnp.zeros((2 * H, FP), jnp.float32).at[:, :F].set(fc1_w.T)
    fc1b = jnp.zeros((1, FP), jnp.float32).at[:, :F].set(fc1_b)
    fc2w = jnp.zeros((1, FP), jnp.float32).at[:, :F].set(fc2_w)
    fc2b = fc2_b.reshape(1, 1)
    flat += [fc1w, fc1b, fc2w, fc2b]
    return flat


# ----------------------------------------------------------------------------
# Deterministic parameter init (shapes follow the nn.Module __init__)
# ----------------------------------------------------------------------------
def init_params(key, input_size, hidden, num_layers):
    raw = {"lstm": []}
    stdv = 1.0 / float(hidden) ** 0.5
    for l in range(num_layers):
        in_dim = input_size if l == 0 else 2 * hidden
        dirs = []
        for _d in range(2):  # forward, backward
            key, k1, k2, k3, k4 = jax.random.split(key, 5)
            wih = jax.random.uniform(k1, (4 * hidden, in_dim), jnp.float32, -stdv, stdv)
            whh = jax.random.uniform(k2, (4 * hidden, hidden), jnp.float32, -stdv, stdv)
            bih = jax.random.uniform(k3, (4 * hidden,), jnp.float32, -stdv, stdv)
            bhh = jax.random.uniform(k4, (4 * hidden,), jnp.float32, -stdv, stdv)
            dirs.append((wih, whh, bih, bhh))
        raw["lstm"].append(dirs)
    key, k1, k2, k3, k4 = jax.random.split(key, 5)
    fc1_in, fc1_out = 2 * hidden, 1600
    s1 = 1.0 / float(fc1_in) ** 0.5
    s2 = 1.0 / float(fc1_out) ** 0.5
    raw["fc1_w"] = jax.random.uniform(k1, (fc1_out, fc1_in), jnp.float32, -s1, s1)
    raw["fc1_b"] = jax.random.uniform(k2, (fc1_out,), jnp.float32, -s1, s1)
    raw["fc2_w"] = jax.random.uniform(k3, (1, fc1_out), jnp.float32, -s2, s2)
    raw["fc2_b"] = jax.random.uniform(k4, (1,), jnp.float32, -s2, s2)
    return raw


# ----------------------------------------------------------------------------
# Pure-JAX reference (straight port of the PyTorch module, eval mode)
# ----------------------------------------------------------------------------
def reference_forward(x, raw):
    B, S, _ = x.shape
    H = raw["lstm"][0][0][1].shape[1]

    def cell(x_t, h, c, wih, whh, bih, bhh):
        g = x_t @ wih.T + bih + h @ whh.T + bhh
        i = jax.nn.sigmoid(g[:, 0:H])
        f = jax.nn.sigmoid(g[:, H:2 * H])
        gg = jnp.tanh(g[:, 2 * H:3 * H])
        o = jax.nn.sigmoid(g[:, 3 * H:4 * H])
        c = f * c + i * gg
        return o * jnp.tanh(c), c

    seq = x
    for (pf, pb) in raw["lstm"]:
        hf = jnp.zeros((B, H)); cf = jnp.zeros((B, H))
        hb = jnp.zeros((B, H)); cb = jnp.zeros((B, H))
        outs_f = [None] * S
        outs_b = [None] * S
        for t in range(S):
            hf, cf = cell(seq[:, t, :], hf, cf, *pf)
            outs_f[t] = hf
            tb = S - 1 - t
            hb, cb = cell(seq[:, tb, :], hb, cb, *pb)
            outs_b[tb] = hb
        seq = jnp.stack([jnp.concatenate([outs_f[t], outs_b[t]], -1) for t in range(S)],
                        axis=1)
    last = seq[:, -1, :]
    hid = jnp.maximum(last @ raw["fc1_w"].T + raw["fc1_b"], 0.0)
    return hid @ raw["fc2_w"].T + raw["fc2_b"]


# ----------------------------------------------------------------------------
if __name__ == "__main__":
    # config: 4 dynamic labels (input channels), hidden=32, 3 layers, seq len 8
    BATCH, SEQ, CHANNELS, HIDDEN, LAYERS = 2, 8, 4, 32, 3

    key = jax.random.PRNGKey(0)
    key, pkey, xkey = jax.random.split(key, 3)
    raw = init_params(pkey, CHANNELS, HIDDEN, LAYERS)
    packed = pack_params(raw)
    x = jax.random.normal(xkey, (BATCH, SEQ, CHANNELS), jnp.float32)

    out = bilstm_forward(x, packed)
    jax.block_until_ready(out)
    assert out.shape == (BATCH, 1), out.shape

    ref = reference_forward(x, raw)
    assert jnp.allclose(out, ref, atol=2e-4, rtol=2e-4), (out, ref)

    print("KERNEL_OK")
</pallas_src>

<mosaic_0001>
module attributes {stable_mosaic.version = 11 : i64} {
  func.func @_bilstm_fused_kernel(%arg0: i32, %arg1: memref<64x8xf32, #tpu.memory_space<vmem>>, %arg2: memref<8x256xf32, #tpu.memory_space<vmem>>, %arg3: memref<64x256xf32, #tpu.memory_space<vmem>>, %arg4: memref<1x256xf32, #tpu.memory_space<vmem>>, %arg5: memref<128x256xf32, #tpu.memory_space<vmem>>, %arg6: memref<64x256xf32, #tpu.memory_space<vmem>>, %arg7: memref<1x256xf32, #tpu.memory_space<vmem>>, %arg8: memref<64x128xf32, #tpu.memory_space<vmem>>, %arg9: memref<32x128xf32, #tpu.memory_space<vmem>>, %arg10: memref<1x128xf32, #tpu.memory_space<vmem>>, %arg11: memref<64x128xf32, #tpu.memory_space<vmem>>, %arg12: memref<1x128xf32, #tpu.memory_space<vmem>>, %arg13: memref<64x1664xf32, #tpu.memory_space<vmem>>, %arg14: memref<1x1664xf32, #tpu.memory_space<vmem>>, %arg15: memref<1x1664xf32, #tpu.memory_space<vmem>>, %arg16: memref<1x1xf32, #tpu.memory_space<vmem>>, %arg17: memref<8x1xf32, #tpu.memory_space<vmem>>) attributes {dimension_semantics = [#tpu.dimension_semantics<arbitrary>], iteration_bounds = array<i64: 1>, scalar_prefetch = 0 : i64, scratch_operands = 0 : i64, tpu.core_type = #tpu.core_type<tc>, window_params = [{pipeline_mode = #tpu.pipeline_mode<synchronous>, transform_indices = @transform_0, window_bounds = array<i64: 64, 8>}, {pipeline_mode = #tpu.pipeline_mode<synchronous>, transform_indices = @transform_1, window_bounds = array<i64: 8, 256>}, {pipeline_mode = #tpu.pipeline_mode<synchronous>, transform_indices = @transform_2, window_bounds = array<i64: 64, 256>}, {pipeline_mode = #tpu.pipeline_mode<synchronous>, transform_indices = @transform_3, window_bounds = array<i64: 1, 256>}, {pipeline_mode = #tpu.pipeline_mode<synchronous>, transform_indices = @transform_4, window_bounds = array<i64: 128, 256>}, {pipeline_mode = #tpu.pipeline_mode<synchronous>, transform_indices = @transform_5, window_bounds = array<i64: 64, 256>}, {pipeline_mode = #tpu.pipeline_mode<synchronous>, transform_indices = @transform_6, window_bounds = array<i64: 1, 256>}, {pipeline_mode = #tpu.pipeline_mode<synchronous>, transform_indices = @transform_7, window_bounds = array<i64: 64, 128>}, {pipeline_mode = #tpu.pipeline_mode<synchronous>, transform_indices = @transform_8, window_bounds = array<i64: 32, 128>}, {pipeline_mode = #tpu.pipeline_mode<synchronous>, transform_indices = @transform_9, window_bounds = array<i64: 1, 128>}, {pipeline_mode = #tpu.pipeline_mode<synchronous>, transform_indices = @transform_10, window_bounds = array<i64: 64, 128>}, {pipeline_mode = #tpu.pipeline_mode<synchronous>, transform_indices = @transform_11, window_bounds = array<i64: 1, 128>}, {pipeline_mode = #tpu.pipeline_mode<synchronous>, transform_indices = @transform_12, window_bounds = array<i64: 64, 1664>}, {pipeline_mode = #tpu.pipeline_mode<synchronous>, transform_indices = @transform_13, window_bounds = array<i64: 1, 1664>}, {pipeline_mode = #tpu.pipeline_mode<synchronous>, transform_indices = @transform_14, window_bounds = array<i64: 1, 1664>}, {pipeline_mode = #tpu.pipeline_mode<synchronous>, transform_indices = @transform_15, window_bounds = array<i64: 1, 1>}, {pipeline_mode = #tpu.pipeline_mode<synchronous>, transform_indices = @transform_16, window_bounds = array<i64: 8, 1>}]} {
    %c0 = arith.constant 0 : index
    %c0_0 = arith.constant 0 : index
    %0 = vector.load %arg1[%c0, %c0_0] : memref<64x8xf32, #tpu.memory_space<vmem>>, vector<64x8xf32>
    %c0_1 = arith.constant 0 : index
    %c0_2 = arith.constant 0 : index
    %1 = vector.load %arg2[%c0_1, %c0_2] : memref<8x256xf32, #tpu.memory_space<vmem>>, vector<8x256xf32>
    %cst = arith.constant dense<0.000000e+00> : vector<64x256xf32>
    %2 = tpu.matmul %0, %1, %cst {dimension_numbers = #tpu.dot_dimension_numbers<[1], [0], [0], [1], [0, 0, 1, 1], [], []>} : vector<64x8xf32>, vector<8x256xf32>, vector<64x256xf32> -> vector<64x256xf32>
    %c0_3 = arith.constant 0 : index
    %c0_4 = arith.constant 0 : index
    %3 = vector.load %arg4[%c0_3, %c0_4] : memref<1x256xf32, #tpu.memory_space<vmem>>, vector<1x256xf32>
    %4 = vector.broadcast %3 : vector<1x256xf32> to vector<64x256xf32>
    %5 = arith.addf %2, %4 : vector<64x256xf32>
    %c0_5 = arith.constant 0 : index
    %c0_6 = arith.constant 0 : index
    %6 = vector.load %arg3[%c0_5, %c0_6] : memref<64x256xf32, #tpu.memory_space<vmem>>, vector<64x256xf32>
    %cst_7 = arith.constant 0.000000e+00 : f32
    %7 = vector.broadcast %cst_7 : f32 to vector<8x64xf32>
    %8 = vector.extract_strided_slice %5 {offsets = [0, 0], sizes = [8, 256], strides = [1, 1]} : vector<64x256xf32> to vector<8x256xf32>
    %9 = vector.extract_strided_slice %8 {offsets = [0, 0], sizes = [8, 192], strides = [1, 1]} : vector<8x256xf32> to vector<8x192xf32>
    %cst_8 = arith.constant 5.000000e-01 : f32
    %10 = vector.broadcast %cst_8 : f32 to vector<8x192xf32>
    %11 = arith.mulf %10, %9 : vector<8x192xf32>
    %12 = math.tanh %11 : vector<8x192xf32>
    %cst_9 = arith.constant 5.000000e-01 : f32
    %13 = vector.broadcast %cst_9 : f32 to vector<8x192xf32>
    %14 = arith.mulf %13, %12 : vector<8x192xf32>
    %cst_10 = arith.constant 5.000000e-01 : f32
    %15 = vector.broadcast %cst_10 : f32 to vector<8x192xf32>
    %16 = arith.addf %14, %15 : vector<8x192xf32>
    %17 = vector.extract_strided_slice %8 {offsets = [0, 192], sizes = [8, 64], strides = [1, 1]} : vector<8x256xf32> to vector<8x64xf32>
    %18 = math.tanh %17 : vector<8x64xf32>
    %19 = vector.extract_strided_slice %16 {offsets = [0, 64], sizes = [8, 64], strides = [1, 1]} : vector<8x192xf32> to vector<8x64xf32>
    %20 = arith.mulf %19, %7 : vector<8x64xf32>
    %21 = vector.extract_strided_slice %16 {offsets = [0, 0], sizes = [8, 64], strides = [1, 1]} : vector<8x192xf32> to vector<8x64xf32>
    %22 = arith.mulf %21, %18 : vector<8x64xf32>
    %23 = arith.addf %20, %22 : vector<8x64xf32>
    %24 = vector.extract_strided_slice %16 {offsets = [0, 128], sizes = [8, 64], strides = [1, 1]} : vector<8x192xf32> to vector<8x64xf32>
    %25 = math.tanh %23 : vector<8x64xf32>
    %26 = arith.mulf %24, %25 : vector<8x64xf32>
    %27 = vector.extract_strided_slice %5 {offsets = [8, 0], sizes = [8, 256], strides = [1, 1]} : vector<64x256xf32> to vector<8x256xf32>
    %cst_11 = arith.constant dense<0.000000e+00> : vector<8x256xf32>
    %28 = tpu.matmul %26, %6, %cst_11 {dimension_numbers = #tpu.dot_dimension_numbers<[1], [0], [0], [1], [0, 0, 1, 1], [], []>} : vector<8x64xf32>, vector<64x256xf32>, vector<8x256xf32> -> vector<8x256xf32>
    %29 = arith.addf %27, %28 : vector<8x256xf32>
    %30 = vector.extract_strided_slice %29 {offsets = [0, 0], sizes = [8, 192], strides = [1, 1]} : vector<8x256xf32> to vector<8x192xf32>
    %cst_12 = arith.constant 5.000000e-01 : f32
    %31 = vector.broadcast %cst_12 : f32 to vector<8x192xf32>
    %32 = arith.mulf %31, %30 : vector<8x192xf32>
    %33 = math.tanh %32 : vector<8x192xf32>
    %cst_13 = arith.constant 5.000000e-01 : f32
    %34 = vector.broadcast %cst_13 : f32 to vector<8x192xf32>
    %35 = arith.mulf %34, %33 : vector<8x192xf32>
    %cst_14 = arith.constant 5.000000e-01 : f32
    %36 = vector.broadcast %cst_14 : f32 to vector<8x192xf32>
    %37 = arith.addf %35, %36 : vector<8x192xf32>
    %38 = vector.extract_strided_slice %29 {offsets = [0, 192], sizes = [8, 64], strides = [1, 1]} : vector<8x256xf32> to vector<8x64xf32>
    %39 = math.tanh %38 : vector<8x64xf32>
    %40 = vector.extract_strided_slice %37 {offsets = [0, 64], sizes = [8, 64], strides = [1, 1]} : vector<8x192xf32> to vector<8x64xf32>
    %41 = arith.mulf %40, %23 : vector<8x64xf32>
    %42 = vector.extract_strided_slice %37 {offsets = [0, 0], sizes = [8, 64], strides = [1, 1]} : vector<8x192xf32> to vector<8x64xf32>
    %43 = arith.mulf %42, %39 : vector<8x64xf32>
    %44 = arith.addf %41, %43 : vector<8x64xf32>
    %45 = vector.extract_strided_slice %37 {offsets = [0, 128], sizes = [8, 64], strides = [1, 1]} : vector<8x192xf32> to vector<8x64xf32>
    %46 = math.tanh %44 : vector<8x64xf32>
    %47 = arith.mulf %45, %46 : vector<8x64xf32>
    %48 = vector.extract_strided_slice %5 {offsets = [16, 0], sizes = [8, 256], strides = [1, 1]} : vector<64x256xf32> to vector<8x256xf32>
    %cst_15 = arith.constant dense<0.000000e+00> : vector<8x256xf32>
    %49 = tpu.matmul %47, %6, %cst_15 {dimension_numbers = #tpu.dot_dimension_numbers<[1], [0], [0], [1], [0, 0, 1, 1], [], []>} : vector<8x64xf32>, vector<64x256xf32>, vector<8x256xf32> -> vector<8x256xf32>
    %50 = arith.addf %48, %49 : vector<8x256xf32>
    %51 = vector.extract_strided_slice %50 {offsets = [0, 0], sizes = [8, 192], strides = [1, 1]} : vector<8x256xf32> to vector<8x192xf32>
    %cst_16 = arith.constant 5.000000e-01 : f32
    %52 = vector.broadcast %cst_16 : f32 to vector<8x192xf32>
    %53 = arith.mulf %52, %51 : vector<8x192xf32>
    %54 = math.tanh %53 : vector<8x192xf32>
    %cst_17 = arith.constant 5.000000e-01 : f32
    %55 = vector.broadcast %cst_17 : f32 to vector<8x192xf32>
    %56 = arith.mulf %55, %54 : vector<8x192xf32>
    %cst_18 = arith.constant 5.000000e-01 : f32
    %57 = vector.broadcast %cst_18 : f32 to vector<8x192xf32>
    %58 = arith.addf %56, %57 : vector<8x192xf32>
    %59 = vector.extract_strided_slice %50 {offsets = [0, 192], sizes = [8, 64], strides = [1, 1]} : vector<8x256xf32> to vector<8x64xf32>
    %60 = math.tanh %59 : vector<8x64xf32>
    %61 = vector.extract_strided_slice %58 {offsets = [0, 64], sizes = [8, 64], strides = [1, 1]} : vector<8x192xf32> to vector<8x64xf32>
    %62 = arith.mulf %61, %44 : vector<8x64xf32>
    %63 = vector.extract_strided_slice %58 {offsets = [0, 0], sizes = [8, 64], strides = [1, 1]} : vector<8x192xf32> to vector<8x64xf32>
    %64 = arith.mulf %63, %60 : vector<8x64xf32>
    %65 = arith.addf %62, %64 : vector<8x64xf32>
    %66 = vector.extract_strided_slice %58 {offsets = [0, 128], sizes = [8, 64], strides = [1, 1]} : vector<8x192xf32> to vector<8x64xf32>
    %67 = math.tanh %65 : vector<8x64xf32>
    %68 = arith.mulf %66, %67 : vector<8x64xf32>
    %69 = vector.extract_strided_slice %5 {offsets = [24, 0], sizes = [8, 256], strides = [1, 1]} : vector<64x256xf32> to vector<8x256xf32>
    %cst_19 = arith.constant dense<0.000000e+00> : vector<8x256xf32>
    %70 = tpu.matmul %68, %6, %cst_19 {dimension_numbers = #tpu.dot_dimension_numbers<[1], [0], [0], [1], [0, 0, 1, 1], [], []>} : vector<8x64xf32>, vector<64x256xf32>, vector<8x256xf32> -> vector<8x256xf32>
    %71 = arith.addf %69, %70 : vector<8x256xf32>
    %72 = vector.extract_strided_slice %71 {offsets = [0, 0], sizes = [8, 192], strides = [1, 1]} : vector<8x256xf32> to vector<8x192xf32>
    %cst_20 = arith.constant 5.000000e-01 : f32
    %73 = vector.broadcast %cst_20 : f32 to vector<8x192xf32>
    %74 = arith.mulf %73, %72 : vector<8x192xf32>
    %75 = math.tanh %74 : vector<8x192xf32>
    %cst_21 = arith.constant 5.000000e-01 : f32
    %76 = vector.broadcast %cst_21 : f32 to vector<8x192xf32>
    %77 = arith.mulf %76, %75 : vector<8x192xf32>
    %cst_22 = arith.constant 5.000000e-01 : f32
    %78 = vector.broadcast %cst_22 : f32 to vector<8x192xf32>
    %79 = arith.addf %77, %78 : vector<8x192xf32>
    %80 = vector.extract_strided_slice %71 {offsets = [0, 192], sizes = [8, 64], strides = [1, 1]} : vector<8x256xf32> to vector<8x64xf32>
    %81 = math.tanh %80 : vector<8x64xf32>
    %82 = vector.extract_strided_slice %79 {offsets = [0, 64], sizes = [8, 64], strides = [1, 1]} : vector<8x192xf32> to vector<8x64xf32>
    %83 = arith.mulf %82, %65 : vector<8x64xf32>
    %84 = vector.extract_strided_slice %79 {offsets = [0, 0], sizes = [8, 64], strides = [1, 1]} : vector<8x192xf32> to vector<8x64xf32>
    %85 = arith.mulf %84, %81 : vector<8x64xf32>
    %86 = arith.addf %83, %85 : vector<8x64xf32>
    %87 = vector.extract_strided_slice %79 {offsets = [0, 128], sizes = [8, 64], strides = [1, 1]} : vector<8x192xf32> to vector<8x64xf32>
    %88 = math.tanh %86 : vector<8x64xf32>
    %89 = arith.mulf %87, %88 : vector<8x64xf32>
    %90 = vector.extract_strided_slice %5 {offsets = [32, 0], sizes = [8, 256], strides = [1, 1]} : vector<64x256xf32> to vector<8x256xf32>
    %cst_23 = arith.constant dense<0.000000e+00> : vector<8x256xf32>
    %91 = tpu.matmul %89, %6, %cst_23 {dimension_numbers = #tpu.dot_dimension_numbers<[1], [0], [0], [1], [0, 0, 1, 1], [], []>} : vector<8x64xf32>, vector<64x256xf32>, vector<8x256xf32> -> vector<8x256xf32>
    %92 = arith.addf %90, %91 : vector<8x256xf32>
    %93 = vector.extract_strided_slice %92 {offsets = [0, 0], sizes = [8, 192], strides = [1, 1]} : vector<8x256xf32> to vector<8x192xf32>
    %cst_24 = arith.constant 5.000000e-01 : f32
    %94 = vector.broadcast %cst_24 : f32 to vector<8x192xf32>
    %95 = arith.mulf %94, %93 : vector<8x192xf32>
    %96 = math.tanh %95 : vector<8x192xf32>
    %cst_25 = arith.constant 5.000000e-01 : f32
    %97 = vector.broadcast %cst_25 : f32 to vector<8x192xf32>
    %98 = arith.mulf %97, %96 : vector<8x192xf32>
    %cst_26 = arith.constant 5.000000e-01 : f32
    %99 = vector.broadcast %cst_26 : f32 to vector<8x192xf32>
    %100 = arith.addf %98, %99 : vector<8x192xf32>
    %101 = vector.extract_strided_slice %92 {offsets = [0, 192], sizes = [8, 64], strides = [1, 1]} : vector<8x256xf32> to vector<8x64xf32>
    %102 = math.tanh %101 : vector<8x64xf32>
    %103 = vector.extract_strided_slice %100 {offsets = [0, 64], sizes = [8, 64], strides = [1, 1]} : vector<8x192xf32> to vector<8x64xf32>
    %104 = arith.mulf %103, %86 : vector<8x64xf32>
    %105 = vector.extract_strided_slice %100 {offsets = [0, 0], sizes = [8, 64], strides = [1, 1]} : vector<8x192xf32> to vector<8x64xf32>
    %106 = arith.mulf %105, %102 : vector<8x64xf32>
    %107 = arith.addf %104, %106 : vector<8x64xf32>
    %108 = vector.extract_strided_slice %100 {offsets = [0, 128], sizes = [8, 64], strides = [1, 1]} : vector<8x192xf32> to vector<8x64xf32>
    %109 = math.tanh %107 : vector<8x64xf32>
    %110 = arith.mulf %108, %109 : vector<8x64xf32>
    %111 = vector.extract_strided_slice %5 {offsets = [40, 0], sizes = [8, 256], strides = [1, 1]} : vector<64x256xf32> to vector<8x256xf32>
    %cst_27 = arith.constant dense<0.000000e+00> : vector<8x256xf32>
    %112 = tpu.matmul %110, %6, %cst_27 {dimension_numbers = #tpu.dot_dimension_numbers<[1], [0], [0], [1], [0, 0, 1, 1], [], []>} : vector<8x64xf32>, vector<64x256xf32>, vector<8x256xf32> -> vector<8x256xf32>
    %113 = arith.addf %111, %112 : vector<8x256xf32>
    %114 = vector.extract_strided_slice %113 {offsets = [0, 0], sizes = [8, 192], strides = [1, 1]} : vector<8x256xf32> to vector<8x192xf32>
    %cst_28 = arith.constant 5.000000e-01 : f32
    %115 = vector.broadcast %cst_28 : f32 to vector<8x192xf32>
    %116 = arith.mulf %115, %114 : vector<8x192xf32>
    %117 = math.tanh %116 : vector<8x192xf32>
    %cst_29 = arith.constant 5.000000e-01 : f32
    %118 = vector.broadcast %cst_29 : f32 to vector<8x192xf32>
    %119 = arith.mulf %118, %117 : vector<8x192xf32>
    %cst_30 = arith.constant 5.000000e-01 : f32
    %120 = vector.broadcast %cst_30 : f32 to vector<8x192xf32>
    %121 = arith.addf %119, %120 : vector<8x192xf32>
    %122 = vector.extract_strided_slice %113 {offsets = [0, 192], sizes = [8, 64], strides = [1, 1]} : vector<8x256xf32> to vector<8x64xf32>
    %123 = math.tanh %122 : vector<8x64xf32>
    %124 = vector.extract_strided_slice %121 {offsets = [0, 64], sizes = [8, 64], strides = [1, 1]} : vector<8x192xf32> to vector<8x64xf32>
    %125 = arith.mulf %124, %107 : vector<8x64xf32>
    %126 = vector.extract_strided_slice %121 {offsets = [0, 0], sizes = [8, 64], strides = [1, 1]} : vector<8x192xf32> to vector<8x64xf32>
    %127 = arith.mulf %126, %123 : vector<8x64xf32>
    %128 = arith.addf %125, %127 : vector<8x64xf32>
    %129 = vector.extract_strided_slice %121 {offsets = [0, 128], sizes = [8, 64], strides = [1, 1]} : vector<8x192xf32> to vector<8x64xf32>
    %130 = math.tanh %128 : vector<8x64xf32>
    %131 = arith.mulf %129, %130 : vector<8x64xf32>
    %132 = vector.extract_strided_slice %5 {offsets = [48, 0], sizes = [8, 256], strides = [1, 1]} : vector<64x256xf32> to vector<8x256xf32>
    %cst_31 = arith.constant dense<0.000000e+00> : vector<8x256xf32>
    %133 = tpu.matmul %131, %6, %cst_31 {dimension_numbers = #tpu.dot_dimension_numbers<[1], [0], [0], [1], [0, 0, 1, 1], [], []>} : vector<8x64xf32>, vector<64x256xf32>, vector<8x256xf32> -> vector<8x256xf32>
    %134 = arith.addf %132, %133 : vector<8x256xf32>
    %135 = vector.extract_strided_slice %134 {offsets = [0, 0], sizes = [8, 192], strides = [1, 1]} : vector<8x256xf32> to vector<8x192xf32>
    %cst_32 = arith.constant 5.000000e-01 : f32
    %136 = vector.broadcast %cst_32 : f32 to vector<8x192xf32>
    %137 = arith.mulf %136, %135 : vector<8x192xf32>
    %138 = math.tanh %137 : vector<8x192xf32>
    %cst_33 = arith.constant 5.000000e-01 : f32
    %139 = vector.broadcast %cst_33 : f32 to vector<8x192xf32>
    %140 = arith.mulf %139, %138 : vector<8x192xf32>
    %cst_34 = arith.constant 5.000000e-01 : f32
    %141 = vector.broadcast %cst_34 : f32 to vector<8x192xf32>
    %142 = arith.addf %140, %141 : vector<8x192xf32>
    %143 = vector.extract_strided_slice %134 {offsets = [0, 192], sizes = [8, 64], strides = [1, 1]} : vector<8x256xf32> to vector<8x64xf32>
    %144 = math.tanh %143 : vector<8x64xf32>
    %145 = vector.extract_strided_slice %142 {offsets = [0, 64], sizes = [8, 64], strides = [1, 1]} : vector<8x192xf32> to vector<8x64xf32>
    %146 = arith.mulf %145, %128 : vector<8x64xf32>
    %147 = vector.extract_strided_slice %142 {offsets = [0, 0], sizes = [8, 64], strides = [1, 1]} : vector<8x192xf32> to vector<8x64xf32>
    %148 = arith.mulf %147, %144 : vector<8x64xf32>
    %149 = arith.addf %146, %148 : vector<8x64xf32>
    %150 = vector.extract_strided_slice %142 {offsets = [0, 128], sizes = [8, 64], strides = [1, 1]} : vector<8x192xf32> to vector<8x64xf32>
    %151 = math.tanh %149 : vector<8x64xf32>
    %152 = arith.mulf %150, %151 : vector<8x64xf32>
    %153 = vector.extract_strided_slice %5 {offsets = [56, 0], sizes = [8, 256], strides = [1, 1]} : vector<64x256xf32> to vector<8x256xf32>
    %cst_35 = arith.constant dense<0.000000e+00> : vector<8x256xf32>
    %154 = tpu.matmul %152, %6, %cst_35 {dimension_numbers = #tpu.dot_dimension_numbers<[1], [0], [0], [1], [0, 0, 1, 1], [], []>} : vector<8x64xf32>, vector<64x256xf32>, vector<8x256xf32> -> vector<8x256xf32>
    %155 = arith.addf %153, %154 : vector<8x256xf32>
    %156 = vector.extract_strided_slice %155 {offsets = [0, 0], sizes = [8, 192], strides = [1, 1]} : vector<8x256xf32> to vector<8x192xf32>
    %cst_36 = arith.constant 5.000000e-01 : f32
    %157 = vector.broadcast %cst_36 : f32 to vector<8x192xf32>
    %158 = arith.mulf %157, %156 : vector<8x192xf32>
    %159 = math.tanh %158 : vector<8x192xf32>
    %cst_37 = arith.constant 5.000000e-01 : f32
    %160 = vector.broadcast %cst_37 : f32 to vector<8x192xf32>
    %161 = arith.mulf %160, %159 : vector<8x192xf32>
    %cst_38 = arith.constant 5.000000e-01 : f32
    %162 = vector.broadcast %cst_38 : f32 to vector<8x192xf32>
    %163 = arith.addf %161, %162 : vector<8x192xf32>
    %164 = vector.extract_strided_slice %155 {offsets = [0, 192], sizes = [8, 64], strides = [1, 1]} : vector<8x256xf32> to vector<8x64xf32>
    %165 = math.tanh %164 : vector<8x64xf32>
    %166 = vector.extract_strided_slice %163 {offsets = [0, 64], sizes = [8, 64], strides = [1, 1]} : vector<8x192xf32> to vector<8x64xf32>
    %167 = arith.mulf %166, %149 : vector<8x64xf32>
    %168 = vector.extract_strided_slice %163 {offsets = [0, 0], sizes = [8, 64], strides = [1, 1]} : vector<8x192xf32> to vector<8x64xf32>
    %169 = arith.mulf %168, %165 : vector<8x64xf32>
    %170 = arith.addf %167, %169 : vector<8x64xf32>
    %171 = vector.extract_strided_slice %163 {offsets = [0, 128], sizes = [8, 64], strides = [1, 1]} : vector<8x192xf32> to vector<8x64xf32>
    %172 = math.tanh %170 : vector<8x64xf32>
    %173 = arith.mulf %171, %172 : vector<8x64xf32>
    %174 = vector.extract_strided_slice %26 {offsets = [0, 0], sizes = [8, 32], strides = [1, 1]} : vector<8x64xf32> to vector<8x32xf32>
    %175 = vector.extract_strided_slice %173 {offsets = [0, 32], sizes = [8, 32], strides = [1, 1]} : vector<8x64xf32> to vector<8x32xf32>
    %176 = tpu.concatenate %174, %175 in 1 : vector<8x32xf32>, vector<8x32xf32> -> vector<8x64xf32>
    %177 = vector.extract_strided_slice %47 {offsets = [0, 0], sizes = [8, 32], strides = [1, 1]} : vector<8x64xf32> to vector<8x32xf32>
    %178 = vector.extract_strided_slice %152 {offsets = [0, 32], sizes = [8, 32], strides = [1, 1]} : vector<8x64xf32> to vector<8x32xf32>
    %179 = tpu.concatenate %177, %178 in 1 : vector<8x32xf32>, vector<8x32xf32> -> vector<8x64xf32>
    %180 = vector.extract_strided_slice %68 {offsets = [0, 0], sizes = [8, 32], strides = [1, 1]} : vector<8x64xf32> to vector<8x32xf32>
    %181 = vector.extract_strided_slice %131 {offsets = [0, 32], sizes = [8, 32], strides = [1, 1]} : vector<8x64xf32> to vector<8x32xf32>
    %182 = tpu.concatenate %180, %181 in 1 : vector<8x32xf32>, vector<8x32xf32> -> vector<8x64xf32>
    %183 = vector.extract_strided_slice %89 {offsets = [0, 0], sizes = [8, 32], strides = [1, 1]} : vector<8x64xf32> to vector<8x32xf32>
    %184 = vector.extract_strided_slice %110 {offsets = [0, 32], sizes = [8, 32], strides = [1, 1]} : vector<8x64xf32> to vector<8x32xf32>
    %185 = tpu.concatenate %183, %184 in 1 : vector<8x32xf32>, vector<8x32xf32> -> vector<8x64xf32>
    %186 = vector.extract_strided_slice %110 {offsets = [0, 0], sizes = [8, 32], strides = [1, 1]} : vector<8x64xf32> to vector<8x32xf32>
    %187 = vector.extract_strided_slice %89 {offsets = [0, 32], sizes = [8, 32], strides = [1, 1]} : vector<8x64xf32> to vector<8x32xf32>
    %188 = tpu.concatenate %186, %187 in 1 : vector<8x32xf32>, vector<8x32xf32> -> vector<8x64xf32>
    %189 = vector.extract_strided_slice %131 {offsets = [0, 0], sizes = [8, 32], strides = [1, 1]} : vector<8x64xf32> to vector<8x32xf32>
    %190 = vector.extract_strided_slice %68 {offsets = [0, 32], sizes = [8, 32], strides = [1, 1]} : vector<8x64xf32> to vector<8x32xf32>
    %191 = tpu.concatenate %189, %190 in 1 : vector<8x32xf32>, vector<8x32xf32> -> vector<8x64xf32>
    %192 = vector.extract_strided_slice %152 {offsets = [0, 0], sizes = [8, 32], strides = [1, 1]} : vector<8x64xf32> to vector<8x32xf32>
    %193 = vector.extract_strided_slice %47 {offsets = [0, 32], sizes = [8, 32], strides = [1, 1]} : vector<8x64xf32> to vector<8x32xf32>
    %194 = tpu.concatenate %192, %193 in 1 : vector<8x32xf32>, vector<8x32xf32> -> vector<8x64xf32>
    %195 = vector.extract_strided_slice %173 {offsets = [0, 0], sizes = [8, 32], strides = [1, 1]} : vector<8x64xf32> to vector<8x32xf32>
    %196 = vector.extract_strided_slice %26 {offsets = [0, 32], sizes = [8, 32], strides = [1, 1]} : vector<8x64xf32> to vector<8x32xf32>
    %197 = tpu.concatenate %195, %196 in 1 : vector<8x32xf32>, vector<8x32xf32> -> vector<8x64xf32>
    %198 = tpu.concatenate %176, %179, %182, %185, %188, %191, %194, %197 in 0 : vector<8x64xf32>, vector<8x64xf32>, vector<8x64xf32>, vector<8x64xf32>, vector<8x64xf32>, vector<8x64xf32>, vector<8x64xf32>, vector<8x64xf32> -> vector<64x64xf32>
    %199 = tpu.concatenate %197, %194, %191, %188, %185, %182, %179, %176 in 0 : vector<8x64xf32>, vector<8x64xf32>, vector<8x64xf32>, vector<8x64xf32>, vector<8x64xf32>, vector<8x64xf32>, vector<8x64xf32>, vector<8x64xf32> -> vector<64x64xf32>
    %200 = tpu.concatenate %198, %199 in 1 : vector<64x64xf32>, vector<64x64xf32> -> vector<64x128xf32>
    %c0_39 = arith.constant 0 : index
    %c0_40 = arith.constant 0 : index
    %201 = vector.load %arg5[%c0_39, %c0_40] : memref<128x256xf32, #tpu.memory_space<vmem>>, vector<128x256xf32>
    %cst_41 = arith.constant dense<0.000000e+00> : vector<64x256xf32>
    %202 = tpu.matmul %200, %201, %cst_41 {dimension_numbers = #tpu.dot_dimension_numbers<[1], [0], [0], [1], [0, 0, 1, 1], [], []>} : vector<64x128xf32>, vector<128x256xf32>, vector<64x256xf32> -> vector<64x256xf32>
    %c0_42 = arith.constant 0 : index
    %c0_43 = arith.constant 0 : index
    %203 = vector.load %arg7[%c0_42, %c0_43] : memref<1x256xf32, #tpu.memory_space<vmem>>, vector<1x256xf32>
    %204 = vector.broadcast %203 : vector<1x256xf32> to vector<64x256xf32>
    %205 = arith.addf %202, %204 : vector<64x256xf32>
    %c0_44 = arith.constant 0 : index
    %c0_45 = arith.constant 0 : index
    %206 = vector.load %arg6[%c0_44, %c0_45] : memref<64x256xf32, #tpu.memory_space<vmem>>, vector<64x256xf32>
    %cst_46 = arith.constant 0.000000e+00 : f32
    %207 = vector.broadcast %cst_46 : f32 to vector<8x64xf32>
    %208 = vector.extract_strided_slice %205 {offsets = [0, 0], sizes = [8, 256], strides = [1, 1]} : vector<64x256xf32> to vector<8x256xf32>
    %209 = vector.extract_strided_slice %208 {offsets = [0, 0], sizes = [8, 192], strides = [1, 1]} : vector<8x256xf32> to vector<8x192xf32>
    %cst_47 = arith.constant 5.000000e-01 : f32
    %210 = vector.broadcast %cst_47 : f32 to vector<8x192xf32>
    %211 = arith.mulf %210, %209 : vector<8x192xf32>
    %212 = math.tanh %211 : vector<8x192xf32>
    %cst_48 = arith.constant 5.000000e-01 : f32
    %213 = vector.broadcast %cst_48 : f32 to vector<8x192xf32>
    %214 = arith.mulf %213, %212 : vector<8x192xf32>
    %cst_49 = arith.constant 5.000000e-01 : f32
    %215 = vector.broadcast %cst_49 : f32 to vector<8x192xf32>
    %216 = arith.addf %214, %215 : vector<8x192xf32>
    %217 = vector.extract_strided_slice %208 {offsets = [0, 192], sizes = [8, 64], strides = [1, 1]} : vector<8x256xf32> to vector<8x64xf32>
    %218 = math.tanh %217 : vector<8x64xf32>
    %219 = vector.extract_strided_slice %216 {offsets = [0, 64], sizes = [8, 64], strides = [1, 1]} : vector<8x192xf32> to vector<8x64xf32>
    %220 = arith.mulf %219, %207 : vector<8x64xf32>
    %221 = vector.extract_strided_slice %216 {offsets = [0, 0], sizes = [8, 64], strides = [1, 1]} : vector<8x192xf32> to vector<8x64xf32>
    %222 = arith.mulf %221, %218 : vector<8x64xf32>
    %223 = arith.addf %220, %222 : vector<8x64xf32>
    %224 = vector.extract_strided_slice %216 {offsets = [0, 128], sizes = [8, 64], strides = [1, 1]} : vector<8x192xf32> to vector<8x64xf32>
    %225 = math.tanh %223 : vector<8x64xf32>
    %226 = arith.mulf %224, %225 : vector<8x64xf32>
    %227 = vector.extract_strided_slice %205 {offsets = [8, 0], sizes = [8, 256], strides = [1, 1]} : vector<64x256xf32> to vector<8x256xf32>
    %cst_50 = arith.constant dense<0.000000e+00> : vector<8x256xf32>
    %228 = tpu.matmul %226, %206, %cst_50 {dimension_numbers = #tpu.dot_dimension_numbers<[1], [0], [0], [1], [0, 0, 1, 1], [], []>} : vector<8x64xf32>, vector<64x256xf32>, vector<8x256xf32> -> vector<8x256xf32>
    %229 = arith.addf %227, %228 : vector<8x256xf32>
    %230 = vector.extract_strided_slice %229 {offsets = [0, 0], sizes = [8, 192], strides = [1, 1]} : vector<8x256xf32> to vector<8x192xf32>
    %cst_51 = arith.constant 5.000000e-01 : f32
    %231 = vector.broadcast %cst_51 : f32 to vector<8x192xf32>
    %232 = arith.mulf %231, %230 : vector<8x192xf32>
    %233 = math.tanh %232 : vector<8x192xf32>
    %cst_52 = arith.constant 5.000000e-01 : f32
    %234 = vector.broadcast %cst_52 : f32 to vector<8x192xf32>
    %235 = arith.mulf %234, %233 : vector<8x192xf32>
    %cst_53 = arith.constant 5.000000e-01 : f32
    %236 = vector.broadcast %cst_53 : f32 to vector<8x192xf32>
    %237 = arith.addf %235, %236 : vector<8x192xf32>
    %238 = vector.extract_strided_slice %229 {offsets = [0, 192], sizes = [8, 64], strides = [1, 1]} : vector<8x256xf32> to vector<8x64xf32>
    %239 = math.tanh %238 : vector<8x64xf32>
    %240 = vector.extract_strided_slice %237 {offsets = [0, 64], sizes = [8, 64], strides = [1, 1]} : vector<8x192xf32> to vector<8x64xf32>
    %241 = arith.mulf %240, %223 : vector<8x64xf32>
    %242 = vector.extract_strided_slice %237 {offsets = [0, 0], sizes = [8, 64], strides = [1, 1]} : vector<8x192xf32> to vector<8x64xf32>
    %243 = arith.mulf %242, %239 : vector<8x64xf32>
    %244 = arith.addf %241, %243 : vector<8x64xf32>
    %245 = vector.extract_strided_slice %237 {offsets = [0, 128], sizes = [8, 64], strides = [1, 1]} : vector<8x192xf32> to vector<8x64xf32>
    %246 = math.tanh %244 : vector<8x64xf32>
    %247 = arith.mulf %245, %246 : vector<8x64xf32>
    %248 = vector.extract_strided_slice %205 {offsets = [16, 0], sizes = [8, 256], strides = [1, 1]} : vector<64x256xf32> to vector<8x256xf32>
    %cst_54 = arith.constant dense<0.000000e+00> : vector<8x256xf32>
    %249 = tpu.matmul %247, %206, %cst_54 {dimension_numbers = #tpu.dot_dimension_numbers<[1], [0], [0], [1], [0, 0, 1, 1], [], []>} : vector<8x64xf32>, vector<64x256xf32>, vector<8x256xf32> -> vector<8x256xf32>
    %250 = arith.addf %248, %249 : vector<8x256xf32>
    %251 = vector.extract_strided_slice %250 {offsets = [0, 0], sizes = [8, 192], strides = [1, 1]} : vector<8x256xf32> to vector<8x192xf32>
    %cst_55 = arith.constant 5.000000e-01 : f32
    %252 = vector.broadcast %cst_55 : f32 to vector<8x192xf32>
    %253 = arith.mulf %252, %251 : vector<8x192xf32>
    %254 = math.tanh %253 : vector<8x192xf32>
    %cst_56 = arith.constant 5.000000e-01 : f32
    %255 = vector.broadcast %cst_56 : f32 to vector<8x192xf32>
    %256 = arith.mulf %255, %254 : vector<8x192xf32>
    %cst_57 = arith.constant 5.000000e-01 : f32
    %257 = vector.broadcast %cst_57 : f32 to vector<8x192xf32>
    %258 = arith.addf %256, %257 : vector<8x192xf32>
    %259 = vector.extract_strided_slice %250 {offsets = [0, 192], sizes = [8, 64], strides = [1, 1]} : vector<8x256xf32> to vector<8x64xf32>
    %260 = math.tanh %259 : vector<8x64xf32>
    %261 = vector.extract_strided_slice %258 {offsets = [0, 64], sizes = [8, 64], strides = [1, 1]} : vector<8x192xf32> to vector<8x64xf32>
    %262 = arith.mulf %261, %244 : vector<8x64xf32>
    %263 = vector.extract_strided_slice %258 {offsets = [0, 0], sizes = [8, 64], strides = [1, 1]} : vector<8x192xf32> to vector<8x64xf32>
    %264 = arith.mulf %263, %260 : vector<8x64xf32>
    %265 = arith.addf %262, %264 : vector<8x64xf32>
    %266 = vector.extract_strided_slice %258 {offsets = [0, 128], sizes = [8, 64], strides = [1, 1]} : vector<8x192xf32> to vector<8x64xf32>
    %267 = math.tanh %265 : vector<8x64xf32>
    %268 = arith.mulf %266, %267 : vector<8x64xf32>
    %269 = vector.extract_strided_slice %205 {offsets = [24, 0], sizes = [8, 256], strides = [1, 1]} : vector<64x256xf32> to vector<8x256xf32>
    %cst_58 = arith.constant dense<0.000000e+00> : vector<8x256xf32>
    %270 = tpu.matmul %268, %206, %cst_58 {dimension_numbers = #tpu.dot_dimension_numbers<[1], [0], [0], [1], [0, 0, 1, 1], [], []>} : vector<8x64xf32>, vector<64x256xf32>, vector<8x256xf32> -> vector<8x256xf32>
    %271 = arith.addf %269, %270 : vector<8x256xf32>
    %272 = vector.extract_strided_slice %271 {offsets = [0, 0], sizes = [8, 192], strides = [1, 1]} : vector<8x256xf32> to vector<8x192xf32>
    %cst_59 = arith.constant 5.000000e-01 : f32
    %273 = vector.broadcast %cst_59 : f32 to vector<8x192xf32>
    %274 = arith.mulf %273, %272 : vector<8x192xf32>
    %275 = math.tanh %274 : vector<8x192xf32>
    %cst_60 = arith.constant 5.000000e-01 : f32
    %276 = vector.broadcast %cst_60 : f32 to vector<8x192xf32>
    %277 = arith.mulf %276, %275 : vector<8x192xf32>
    %cst_61 = arith.constant 5.000000e-01 : f32
    %278 = vector.broadcast %cst_61 : f32 to vector<8x192xf32>
    %279 = arith.addf %277, %278 : vector<8x192xf32>
    %280 = vector.extract_strided_slice %271 {offsets = [0, 192], sizes = [8, 64], strides = [1, 1]} : vector<8x256xf32> to vector<8x64xf32>
    %281 = math.tanh %280 : vector<8x64xf32>
    %282 = vector.extract_strided_slice %279 {offsets = [0, 64], sizes = [8, 64], strides = [1, 1]} : vector<8x192xf32> to vector<8x64xf32>
    %283 = arith.mulf %282, %265 : vector<8x64xf32>
    %284 = vector.extract_strided_slice %279 {offsets = [0, 0], sizes = [8, 64], strides = [1, 1]} : vector<8x192xf32> to vector<8x64xf32>
    %285 = arith.mulf %284, %281 : vector<8x64xf32>
    %286 = arith.addf %283, %285 : vector<8x64xf32>
    %287 = vector.extract_strided_slice %279 {offsets = [0, 128], sizes = [8, 64], strides = [1, 1]} : vector<8x192xf32> to vector<8x64xf32>
    %288 = math.tanh %286 : vector<8x64xf32>
    %289 = arith.mulf %287, %288 : vector<8x64xf32>
    %290 = vector.extract_strided_slice %205 {offsets = [32, 0], sizes = [8, 256], strides = [1, 1]} : vector<64x256xf32> to vector<8x256xf32>
    %cst_62 = arith.constant dense<0.000000e+00> : vector<8x256xf32>
    %291 = tpu.matmul %289, %206, %cst_62 {dimension_numbers = #tpu.dot_dimension_numbers<[1], [0], [0], [1], [0, 0, 1, 1], [], []>} : vector<8x64xf32>, vector<64x256xf32>, vector<8x256xf32> -> vector<8x256xf32>
    %292 = arith.addf %290, %291 : vector<8x256xf32>
    %293 = vector.extract_strided_slice %292 {offsets = [0, 0], sizes = [8, 192], strides = [1, 1]} : vector<8x256xf32> to vector<8x192xf32>
    %cst_63 = arith.constant 5.000000e-01 : f32
    %294 = vector.broadcast %cst_63 : f32 to vector<8x192xf32>
    %295 = arith.mulf %294, %293 : vector<8x192xf32>
    %296 = math.tanh %295 : vector<8x192xf32>
    %cst_64 = arith.constant 5.000000e-01 : f32
    %297 = vector.broadcast %cst_64 : f32 to vector<8x192xf32>
    %298 = arith.mulf %297, %296 : vector<8x192xf32>
    %cst_65 = arith.constant 5.000000e-01 : f32
    %299 = vector.broadcast %cst_65 : f32 to vector<8x192xf32>
    %300 = arith.addf %298, %299 : vector<8x192xf32>
    %301 = vector.extract_strided_slice %292 {offsets = [0, 192], sizes = [8, 64], strides = [1, 1]} : vector<8x256xf32> to vector<8x64xf32>
    %302 = math.tanh %301 : vector<8x64xf32>
    %303 = vector.extract_strided_slice %300 {offsets = [0, 64], sizes = [8, 64], strides = [1, 1]} : vector<8x192xf32> to vector<8x64xf32>
    %304 = arith.mulf %303, %286 : vector<8x64xf32>
    %305 = vector.extract_strided_slice %300 {offsets = [0, 0], sizes = [8, 64], strides = [1, 1]} : vector<8x192xf32> to vector<8x64xf32>
    %306 = arith.mulf %305, %302 : vector<8x64xf32>
    %307 = arith.addf %304, %306 : vector<8x64xf32>
    %308 = vector.extract_strided_slice %300 {offsets = [0, 128], sizes = [8, 64], strides = [1, 1]} : vector<8x192xf32> to vector<8x64xf32>
    %309 = math.tanh %307 : vector<8x64xf32>
    %310 = arith.mulf %308, %309 : vector<8x64xf32>
    %311 = vector.extract_strided_slice %205 {offsets = [40, 0], sizes = [8, 256], strides = [1, 1]} : vector<64x256xf32> to vector<8x256xf32>
    %cst_66 = arith.constant dense<0.000000e+00> : vector<8x256xf32>
    %312 = tpu.matmul %310, %206, %cst_66 {dimension_numbers = #tpu.dot_dimension_numbers<[1], [0], [0], [1], [0, 0, 1, 1], [], []>} : vector<8x64xf32>, vector<64x256xf32>, vector<8x256xf32> -> vector<8x256xf32>
    %313 = arith.addf %311, %312 : vector<8x256xf32>
    %314 = vector.extract_strided_slice %313 {offsets = [0, 0], sizes = [8, 192], strides = [1, 1]} : vector<8x256xf32> to vector<8x192xf32>
    %cst_67 = arith.constant 5.000000e-01 : f32
    %315 = vector.broadcast %cst_67 : f32 to vector<8x192xf32>
    %316 = arith.mulf %315, %314 : vector<8x192xf32>
    %317 = math.tanh %316 : vector<8x192xf32>
    %cst_68 = arith.constant 5.000000e-01 : f32
    %318 = vector.broadcast %cst_68 : f32 to vector<8x192xf32>
    %319 = arith.mulf %318, %317 : vector<8x192xf32>
    %cst_69 = arith.constant 5.000000e-01 : f32
    %320 = vector.broadcast %cst_69 : f32 to vector<8x192xf32>
    %321 = arith.addf %319, %320 : vector<8x192xf32>
    %322 = vector.extract_strided_slice %313 {offsets = [0, 192], sizes = [8, 64], strides = [1, 1]} : vector<8x256xf32> to vector<8x64xf32>
    %323 = math.tanh %322 : vector<8x64xf32>
    %324 = vector.extract_strided_slice %321 {offsets = [0, 64], sizes = [8, 64], strides = [1, 1]} : vector<8x192xf32> to vector<8x64xf32>
    %325 = arith.mulf %324, %307 : vector<8x64xf32>
    %326 = vector.extract_strided_slice %321 {offsets = [0, 0], sizes = [8, 64], strides = [1, 1]} : vector<8x192xf32> to vector<8x64xf32>
    %327 = arith.mulf %326, %323 : vector<8x64xf32>
    %328 = arith.addf %325, %327 : vector<8x64xf32>
    %329 = vector.extract_strided_slice %321 {offsets = [0, 128], sizes = [8, 64], strides = [1, 1]} : vector<8x192xf32> to vector<8x64xf32>
    %330 = math.tanh %328 : vector<8x64xf32>
    %331 = arith.mulf %329, %330 : vector<8x64xf32>
    %332 = vector.extract_strided_slice %205 {offsets = [48, 0], sizes = [8, 256], strides = [1, 1]} : vector<64x256xf32> to vector<8x256xf32>
    %cst_70 = arith.constant dense<0.000000e+00> : vector<8x256xf32>
    %333 = tpu.matmul %331, %206, %cst_70 {dimension_numbers = #tpu.dot_dimension_numbers<[1], [0], [0], [1], [0, 0, 1, 1], [], []>} : vector<8x64xf32>, vector<64x256xf32>, vector<8x256xf32> -> vector<8x256xf32>
    %334 = arith.addf %332, %333 : vector<8x256xf32>
    %335 = vector.extract_strided_slice %334 {offsets = [0, 0], sizes = [8, 192], strides = [1, 1]} : vector<8x256xf32> to vector<8x192xf32>
    %cst_71 = arith.constant 5.000000e-01 : f32
    %336 = vector.broadcast %cst_71 : f32 to vector<8x192xf32>
    %337 = arith.mulf %336, %335 : vector<8x192xf32>
    %338 = math.tanh %337 : vector<8x192xf32>
    %cst_72 = arith.constant 5.000000e-01 : f32
    %339 = vector.broadcast %cst_72 : f32 to vector<8x192xf32>
    %340 = arith.mulf %339, %338 : vector<8x192xf32>
    %cst_73 = arith.constant 5.000000e-01 : f32
    %341 = vector.broadcast %cst_73 : f32 to vector<8x192xf32>
    %342 = arith.addf %340, %341 : vector<8x192xf32>
    %343 = vector.extract_strided_slice %334 {offsets = [0, 192], sizes = [8, 64], strides = [1, 1]} : vector<8x256xf32> to vector<8x64xf32>
    %344 = math.tanh %343 : vector<8x64xf32>
    %345 = vector.extract_strided_slice %342 {offsets = [0, 64], sizes = [8, 64], strides = [1, 1]} : vector<8x192xf32> to vector<8x64xf32>
    %346 = arith.mulf %345, %328 : vector<8x64xf32>
    %347 = vector.extract_strided_slice %342 {offsets = [0, 0], sizes = [8, 64], strides = [1, 1]} : vector<8x192xf32> to vector<8x64xf32>
    %348 = arith.mulf %347, %344 : vector<8x64xf32>
    %349 = arith.addf %346, %348 : vector<8x64xf32>
    %350 = vector.extract_strided_slice %342 {offsets = [0, 128], sizes = [8, 64], strides = [1, 1]} : vector<8x192xf32> to vector<8x64xf32>
    %351 = math.tanh %349 : vector<8x64xf32>
    %352 = arith.mulf %350, %351 : vector<8x64xf32>
    %353 = vector.extract_strided_slice %205 {offsets = [56, 0], sizes = [8, 256], strides = [1, 1]} : vector<64x256xf32> to vector<8x256xf32>
    %cst_74 = arith.constant dense<0.000000e+00> : vector<8x256xf32>
    %354 = tpu.matmul %352, %206, %cst_74 {dimension_numbers = #tpu.dot_dimension_numbers<[1], [0], [0], [1], [0, 0, 1, 1], [], []>} : vector<8x64xf32>, vector<64x256xf32>, vector<8x256xf32> -> vector<8x256xf32>
    %355 = arith.addf %353, %354 : vector<8x256xf32>
    %356 = vector.extract_strided_slice %355 {offsets = [0, 0], sizes = [8, 192], strides = [1, 1]} : vector<8x256xf32> to vector<8x192xf32>
    %cst_75 = arith.constant 5.000000e-01 : f32
    %357 = vector.broadcast %cst_75 : f32 to vector<8x192xf32>
    %358 = arith.mulf %357, %356 : vector<8x192xf32>
    %359 = math.tanh %358 : vector<8x192xf32>
    %cst_76 = arith.constant 5.000000e-01 : f32
    %360 = vector.broadcast %cst_76 : f32 to vector<8x192xf32>
    %361 = arith.mulf %360, %359 : vector<8x192xf32>
    %cst_77 = arith.constant 5.000000e-01 : f32
    %362 = vector.broadcast %cst_77 : f32 to vector<8x192xf32>
    %363 = arith.addf %361, %362 : vector<8x192xf32>
    %364 = vector.extract_strided_slice %355 {offsets = [0, 192], sizes = [8, 64], strides = [1, 1]} : vector<8x256xf32> to vector<8x64xf32>
    %365 = math.tanh %364 : vector<8x64xf32>
    %366 = vector.extract_strided_slice %363 {offsets = [0, 64], sizes = [8, 64], strides = [1, 1]} : vector<8x192xf32> to vector<8x64xf32>
    %367 = arith.mulf %366, %349 : vector<8x64xf32>
    %368 = vector.extract_strided_slice %363 {offsets = [0, 0], sizes = [8, 64], strides = [1, 1]} : vector<8x192xf32> to vector<8x64xf32>
    %369 = arith.mulf %368, %365 : vector<8x64xf32>
    %370 = arith.addf %367, %369 : vector<8x64xf32>
    %371 = vector.extract_strided_slice %363 {offsets = [0, 128], sizes = [8, 64], strides = [1, 1]} : vector<8x192xf32> to vector<8x64xf32>
    %372 = math.tanh %370 : vector<8x64xf32>
    %373 = arith.mulf %371, %372 : vector<8x64xf32>
    %374 = vector.extract_strided_slice %226 {offsets = [0, 0], sizes = [8, 32], strides = [1, 1]} : vector<8x64xf32> to vector<8x32xf32>
    %375 = vector.extract_strided_slice %373 {offsets = [0, 32], sizes = [8, 32], strides = [1, 1]} : vector<8x64xf32> to vector<8x32xf32>
    %376 = tpu.concatenate %374, %375 in 1 : vector<8x32xf32>, vector<8x32xf32> -> vector<8x64xf32>
    %377 = vector.extract_strided_slice %247 {offsets = [0, 0], sizes = [8, 32], strides = [1, 1]} : vector<8x64xf32> to vector<8x32xf32>
    %378 = vector.extract_strided_slice %352 {offsets = [0, 32], sizes = [8, 32], strides = [1, 1]} : vector<8x64xf32> to vector<8x32xf32>
    %379 = tpu.concatenate %377, %378 in 1 : vector<8x32xf32>, vector<8x32xf32> -> vector<8x64xf32>
    %380 = vector.extract_strided_slice %268 {offsets = [0, 0], sizes = [8, 32], strides = [1, 1]} : vector<8x64xf32> to vector<8x32xf32>
    %381 = vector.extract_strided_slice %331 {offsets = [0, 32], sizes = [8, 32], strides = [1, 1]} : vector<8x64xf32> to vector<8x32xf32>
    %382 = tpu.concatenate %380, %381 in 1 : vector<8x32xf32>, vector<8x32xf32> -> vector<8x64xf32>
    %383 = vector.extract_strided_slice %289 {offsets = [0, 0], sizes = [8, 32], strides = [1, 1]} : vector<8x64xf32> to vector<8x32xf32>
    %384 = vector.extract_strided_slice %310 {offsets = [0, 32], sizes = [8, 32], strides = [1, 1]} : vector<8x64xf32> to vector<8x32xf32>
    %385 = tpu.concatenate %383, %384 in 1 : vector<8x32xf32>, vector<8x32xf32> -> vector<8x64xf32>
    %386 = vector.extract_strided_slice %310 {offsets = [0, 0], sizes = [8, 32], strides = [1, 1]} : vector<8x64xf32> to vector<8x32xf32>
    %387 = vector.extract_strided_slice %289 {offsets = [0, 32], sizes = [8, 32], strides = [1, 1]} : vector<8x64xf32> to vector<8x32xf32>
    %388 = tpu.concatenate %386, %387 in 1 : vector<8x32xf32>, vector<8x32xf32> -> vector<8x64xf32>
    %389 = vector.extract_strided_slice %331 {offsets = [0, 0], sizes = [8, 32], strides = [1, 1]} : vector<8x64xf32> to vector<8x32xf32>
    %390 = vector.extract_strided_slice %268 {offsets = [0, 32], sizes = [8, 32], strides = [1, 1]} : vector<8x64xf32> to vector<8x32xf32>
    %391 = tpu.concatenate %389, %390 in 1 : vector<8x32xf32>, vector<8x32xf32> -> vector<8x64xf32>
    %392 = vector.extract_strided_slice %352 {offsets = [0, 0], sizes = [8, 32], strides = [1, 1]} : vector<8x64xf32> to vector<8x32xf32>
    %393 = vector.extract_strided_slice %247 {offsets = [0, 32], sizes = [8, 32], strides = [1, 1]} : vector<8x64xf32> to vector<8x32xf32>
    %394 = tpu.concatenate %392, %393 in 1 : vector<8x32xf32>, vector<8x32xf32> -> vector<8x64xf32>
    %395 = vector.extract_strided_slice %373 {offsets = [0, 0], sizes = [8, 32], strides = [1, 1]} : vector<8x64xf32> to vector<8x32xf32>
    %396 = vector.extract_strided_slice %226 {offsets = [0, 32], sizes = [8, 32], strides = [1, 1]} : vector<8x64xf32> to vector<8x32xf32>
    %397 = tpu.concatenate %395, %396 in 1 : vector<8x32xf32>, vector<8x32xf32> -> vector<8x64xf32>
    %398 = tpu.concatenate %376, %379, %382, %385, %388, %391, %394, %397 in 0 : vector<8x64xf32>, vector<8x64xf32>, vector<8x64xf32>, vector<8x64xf32>, vector<8x64xf32>, vector<8x64xf32>, vector<8x64xf32>, vector<8x64xf32> -> vector<64x64xf32>
    %c0_78 = arith.constant 0 : index
    %c0_79 = arith.constant 0 : index
    %399 = vector.load %arg8[%c0_78, %c0_79] : memref<64x128xf32, #tpu.memory_space<vmem>>, vector<64x128xf32>
    %cst_80 = arith.constant dense<0.000000e+00> : vector<64x128xf32>
    %400 = tpu.matmul %398, %399, %cst_80 {dimension_numbers = #tpu.dot_dimension_numbers<[1], [0], [0], [1], [0, 0, 1, 1], [], []>} : vector<64x64xf32>, vector<64x128xf32>, vector<64x128xf32> -> vector<64x128xf32>
    %c0_81 = arith.constant 0 : index
    %c0_82 = arith.constant 0 : index
    %401 = vector.load %arg10[%c0_81, %c0_82] : memref<1x128xf32, #tpu.memory_space<vmem>>, vector<1x128xf32>
    %402 = vector.broadcast %401 : vector<1x128xf32> to vector<64x128xf32>
    %403 = arith.addf %400, %402 : vector<64x128xf32>
    %c0_83 = arith.constant 0 : index
    %c0_84 = arith.constant 0 : index
    %404 = vector.load %arg9[%c0_83, %c0_84] : memref<32x128xf32, #tpu.memory_space<vmem>>, vector<32x128xf32>
    %cst_85 = arith.constant 0.000000e+00 : f32
    %405 = vector.broadcast %cst_85 : f32 to vector<8x32xf32>
    %406 = vector.extract_strided_slice %403 {offsets = [0, 0], sizes = [8, 128], strides = [1, 1]} : vector<64x128xf32> to vector<8x128xf32>
    %407 = vector.extract_strided_slice %406 {offsets = [0, 0], sizes = [8, 96], strides = [1, 1]} : vector<8x128xf32> to vector<8x96xf32>
    %cst_86 = arith.constant 5.000000e-01 : f32
    %408 = vector.broadcast %cst_86 : f32 to vector<8x96xf32>
    %409 = arith.mulf %408, %407 : vector<8x96xf32>
    %410 = math.tanh %409 : vector<8x96xf32>
    %cst_87 = arith.constant 5.000000e-01 : f32
    %411 = vector.broadcast %cst_87 : f32 to vector<8x96xf32>
    %412 = arith.mulf %411, %410 : vector<8x96xf32>
    %cst_88 = arith.constant 5.000000e-01 : f32
    %413 = vector.broadcast %cst_88 : f32 to vector<8x96xf32>
    %414 = arith.addf %412, %413 : vector<8x96xf32>
    %415 = vector.extract_strided_slice %406 {offsets = [0, 96], sizes = [8, 32], strides = [1, 1]} : vector<8x128xf32> to vector<8x32xf32>
    %416 = math.tanh %415 : vector<8x32xf32>
    %417 = vector.extract_strided_slice %414 {offsets = [0, 32], sizes = [8, 32], strides = [1, 1]} : vector<8x96xf32> to vector<8x32xf32>
    %418 = arith.mulf %417, %405 : vector<8x32xf32>
    %419 = vector.extract_strided_slice %414 {offsets = [0, 0], sizes = [8, 32], strides = [1, 1]} : vector<8x96xf32> to vector<8x32xf32>
    %420 = arith.mulf %419, %416 : vector<8x32xf32>
    %421 = arith.addf %418, %420 : vector<8x32xf32>
    %422 = vector.extract_strided_slice %414 {offsets = [0, 64], sizes = [8, 32], strides = [1, 1]} : vector<8x96xf32> to vector<8x32xf32>
    %423 = math.tanh %421 : vector<8x32xf32>
    %424 = arith.mulf %422, %423 : vector<8x32xf32>
    %425 = vector.extract_strided_slice %403 {offsets = [8, 0], sizes = [8, 128], strides = [1, 1]} : vector<64x128xf32> to vector<8x128xf32>
    %cst_89 = arith.constant dense<0.000000e+00> : vector<8x128xf32>
    %426 = tpu.matmul %424, %404, %cst_89 {dimension_numbers = #tpu.dot_dimension_numbers<[1], [0], [0], [1], [0, 0, 1, 1], [], []>} : vector<8x32xf32>, vector<32x128xf32>, vector<8x128xf32> -> vector<8x128xf32>
    %427 = arith.addf %425, %426 : vector<8x128xf32>
    %428 = vector.extract_strided_slice %427 {offsets = [0, 0], sizes = [8, 96], strides = [1, 1]} : vector<8x128xf32> to vector<8x96xf32>
    %cst_90 = arith.constant 5.000000e-01 : f32
    %429 = vector.broadcast %cst_90 : f32 to vector<8x96xf32>
    %430 = arith.mulf %429, %428 : vector<8x96xf32>
    %431 = math.tanh %430 : vector<8x96xf32>
    %cst_91 = arith.constant 5.000000e-01 : f32
    %432 = vector.broadcast %cst_91 : f32 to vector<8x96xf32>
    %433 = arith.mulf %432, %431 : vector<8x96xf32>
    %cst_92 = arith.constant 5.000000e-01 : f32
    %434 = vector.broadcast %cst_92 : f32 to vector<8x96xf32>
    %435 = arith.addf %433, %434 : vector<8x96xf32>
    %436 = vector.extract_strided_slice %427 {offsets = [0, 96], sizes = [8, 32], strides = [1, 1]} : vector<8x128xf32> to vector<8x32xf32>
    %437 = math.tanh %436 : vector<8x32xf32>
    %438 = vector.extract_strided_slice %435 {offsets = [0, 32], sizes = [8, 32], strides = [1, 1]} : vector<8x96xf32> to vector<8x32xf32>
    %439 = arith.mulf %438, %421 : vector<8x32xf32>
    %440 = vector.extract_strided_slice %435 {offsets = [0, 0], sizes = [8, 32], strides = [1, 1]} : vector<8x96xf32> to vector<8x32xf32>
    %441 = arith.mulf %440, %437 : vector<8x32xf32>
    %442 = arith.addf %439, %441 : vector<8x32xf32>
    %443 = vector.extract_strided_slice %435 {offsets = [0, 64], sizes = [8, 32], strides = [1, 1]} : vector<8x96xf32> to vector<8x32xf32>
    %444 = math.tanh %442 : vector<8x32xf32>
    %445 = arith.mulf %443, %444 : vector<8x32xf32>
    %446 = vector.extract_strided_slice %403 {offsets = [16, 0], sizes = [8, 128], strides = [1, 1]} : vector<64x128xf32> to vector<8x128xf32>
    %cst_93 = arith.constant dense<0.000000e+00> : vector<8x128xf32>
    %447 = tpu.matmul %445, %404, %cst_93 {dimension_numbers = #tpu.dot_dimension_numbers<[1], [0], [0], [1], [0, 0, 1, 1], [], []>} : vector<8x32xf32>, vector<32x128xf32>, vector<8x128xf32> -> vector<8x128xf32>
    %448 = arith.addf %446, %447 : vector<8x128xf32>
    %449 = vector.extract_strided_slice %448 {offsets = [0, 0], sizes = [8, 96], strides = [1, 1]} : vector<8x128xf32> to vector<8x96xf32>
    %cst_94 = arith.constant 5.000000e-01 : f32
    %450 = vector.broadcast %cst_94 : f32 to vector<8x96xf32>
    %451 = arith.mulf %450, %449 : vector<8x96xf32>
    %452 = math.tanh %451 : vector<8x96xf32>
    %cst_95 = arith.constant 5.000000e-01 : f32
    %453 = vector.broadcast %cst_95 : f32 to vector<8x96xf32>
    %454 = arith.mulf %453, %452 : vector<8x96xf32>
    %cst_96 = arith.constant 5.000000e-01 : f32
    %455 = vector.broadcast %cst_96 : f32 to vector<8x96xf32>
    %456 = arith.addf %454, %455 : vector<8x96xf32>
    %457 = vector.extract_strided_slice %448 {offsets = [0, 96], sizes = [8, 32], strides = [1, 1]} : vector<8x128xf32> to vector<8x32xf32>
    %458 = math.tanh %457 : vector<8x32xf32>
    %459 = vector.extract_strided_slice %456 {offsets = [0, 32], sizes = [8, 32], strides = [1, 1]} : vector<8x96xf32> to vector<8x32xf32>
    %460 = arith.mulf %459, %442 : vector<8x32xf32>
    %461 = vector.extract_strided_slice %456 {offsets = [0, 0], sizes = [8, 32], strides = [1, 1]} : vector<8x96xf32> to vector<8x32xf32>
    %462 = arith.mulf %461, %458 : vector<8x32xf32>
    %463 = arith.addf %460, %462 : vector<8x32xf32>
    %464 = vector.extract_strided_slice %456 {offsets = [0, 64], sizes = [8, 32], strides = [1, 1]} : vector<8x96xf32> to vector<8x32xf32>
    %465 = math.tanh %463 : vector<8x32xf32>
    %466 = arith.mulf %464, %465 : vector<8x32xf32>
    %467 = vector.extract_strided_slice %403 {offsets = [24, 0], sizes = [8, 128], strides = [1, 1]} : vector<64x128xf32> to vector<8x128xf32>
    %cst_97 = arith.constant dense<0.000000e+00> : vector<8x128xf32>
    %468 = tpu.matmul %466, %404, %cst_97 {dimension_numbers = #tpu.dot_dimension_numbers<[1], [0], [0], [1], [0, 0, 1, 1], [], []>} : vector<8x32xf32>, vector<32x128xf32>, vector<8x128xf32> -> vector<8x128xf32>
    %469 = arith.addf %467, %468 : vector<8x128xf32>
    %470 = vector.extract_strided_slice %469 {offsets = [0, 0], sizes = [8, 96], strides = [1, 1]} : vector<8x128xf32> to vector<8x96xf32>
    %cst_98 = arith.constant 5.000000e-01 : f32
    %471 = vector.broadcast %cst_98 : f32 to vector<8x96xf32>
    %472 = arith.mulf %471, %470 : vector<8x96xf32>
    %473 = math.tanh %472 : vector<8x96xf32>
    %cst_99 = arith.constant 5.000000e-01 : f32
    %474 = vector.broadcast %cst_99 : f32 to vector<8x96xf32>
    %475 = arith.mulf %474, %473 : vector<8x96xf32>
    %cst_100 = arith.constant 5.000000e-01 : f32
    %476 = vector.broadcast %cst_100 : f32 to vector<8x96xf32>
    %477 = arith.addf %475, %476 : vector<8x96xf32>
    %478 = vector.extract_strided_slice %469 {offsets = [0, 96], sizes = [8, 32], strides = [1, 1]} : vector<8x128xf32> to vector<8x32xf32>
    %479 = math.tanh %478 : vector<8x32xf32>
    %480 = vector.extract_strided_slice %477 {offsets = [0, 32], sizes = [8, 32], strides = [1, 1]} : vector<8x96xf32> to vector<8x32xf32>
    %481 = arith.mulf %480, %463 : vector<8x32xf32>
    %482 = vector.extract_strided_slice %477 {offsets = [0, 0], sizes = [8, 32], strides = [1, 1]} : vector<8x96xf32> to vector<8x32xf32>
    %483 = arith.mulf %482, %479 : vector<8x32xf32>
    %484 = arith.addf %481, %483 : vector<8x32xf32>
    %485 = vector.extract_strided_slice %477 {offsets = [0, 64], sizes = [8, 32], strides = [1, 1]} : vector<8x96xf32> to vector<8x32xf32>
    %486 = math.tanh %484 : vector<8x32xf32>
    %487 = arith.mulf %485, %486 : vector<8x32xf32>
    %488 = vector.extract_strided_slice %403 {offsets = [32, 0], sizes = [8, 128], strides = [1, 1]} : vector<64x128xf32> to vector<8x128xf32>
    %cst_101 = arith.constant dense<0.000000e+00> : vector<8x128xf32>
    %489 = tpu.matmul %487, %404, %cst_101 {dimension_numbers = #tpu.dot_dimension_numbers<[1], [0], [0], [1], [0, 0, 1, 1], [], []>} : vector<8x32xf32>, vector<32x128xf32>, vector<8x128xf32> -> vector<8x128xf32>
    %490 = arith.addf %488, %489 : vector<8x128xf32>
    %491 = vector.extract_strided_slice %490 {offsets = [0, 0], sizes = [8, 96], strides = [1, 1]} : vector<8x128xf32> to vector<8x96xf32>
    %cst_102 = arith.constant 5.000000e-01 : f32
    %492 = vector.broadcast %cst_102 : f32 to vector<8x96xf32>
    %493 = arith.mulf %492, %491 : vector<8x96xf32>
    %494 = math.tanh %493 : vector<8x96xf32>
    %cst_103 = arith.constant 5.000000e-01 : f32
    %495 = vector.broadcast %cst_103 : f32 to vector<8x96xf32>
    %496 = arith.mulf %495, %494 : vector<8x96xf32>
    %cst_104 = arith.constant 5.000000e-01 : f32
    %497 = vector.broadcast %cst_104 : f32 to vector<8x96xf32>
    %498 = arith.addf %496, %497 : vector<8x96xf32>
    %499 = vector.extract_strided_slice %490 {offsets = [0, 96], sizes = [8, 32], strides = [1, 1]} : vector<8x128xf32> to vector<8x32xf32>
    %500 = math.tanh %499 : vector<8x32xf32>
    %501 = vector.extract_strided_slice %498 {offsets = [0, 32], sizes = [8, 32], strides = [1, 1]} : vector<8x96xf32> to vector<8x32xf32>
    %502 = arith.mulf %501, %484 : vector<8x32xf32>
    %503 = vector.extract_strided_slice %498 {offsets = [0, 0], sizes = [8, 32], strides = [1, 1]} : vector<8x96xf32> to vector<8x32xf32>
    %504 = arith.mulf %503, %500 : vector<8x32xf32>
    %505 = arith.addf %502, %504 : vector<8x32xf32>
    %506 = vector.extract_strided_slice %498 {offsets = [0, 64], sizes = [8, 32], strides = [1, 1]} : vector<8x96xf32> to vector<8x32xf32>
    %507 = math.tanh %505 : vector<8x32xf32>
    %508 = arith.mulf %506, %507 : vector<8x32xf32>
    %509 = vector.extract_strided_slice %403 {offsets = [40, 0], sizes = [8, 128], strides = [1, 1]} : vector<64x128xf32> to vector<8x128xf32>
    %cst_105 = arith.constant dense<0.000000e+00> : vector<8x128xf32>
    %510 = tpu.matmul %508, %404, %cst_105 {dimension_numbers = #tpu.dot_dimension_numbers<[1], [0], [0], [1], [0, 0, 1, 1], [], []>} : vector<8x32xf32>, vector<32x128xf32>, vector<8x128xf32> -> vector<8x128xf32>
    %511 = arith.addf %509, %510 : vector<8x128xf32>
    %512 = vector.extract_strided_slice %511 {offsets = [0, 0], sizes = [8, 96], strides = [1, 1]} : vector<8x128xf32> to vector<8x96xf32>
    %cst_106 = arith.constant 5.000000e-01 : f32
    %513 = vector.broadcast %cst_106 : f32 to vector<8x96xf32>
    %514 = arith.mulf %513, %512 : vector<8x96xf32>
    %515 = math.tanh %514 : vector<8x96xf32>
    %cst_107 = arith.constant 5.000000e-01 : f32
    %516 = vector.broadcast %cst_107 : f32 to vector<8x96xf32>
    %517 = arith.mulf %516, %515 : vector<8x96xf32>
    %cst_108 = arith.constant 5.000000e-01 : f32
    %518 = vector.broadcast %cst_108 : f32 to vector<8x96xf32>
    %519 = arith.addf %517, %518 : vector<8x96xf32>
    %520 = vector.extract_strided_slice %511 {offsets = [0, 96], sizes = [8, 32], strides = [1, 1]} : vector<8x128xf32> to vector<8x32xf32>
    %521 = math.tanh %520 : vector<8x32xf32>
    %522 = vector.extract_strided_slice %519 {offsets = [0, 32], sizes = [8, 32], strides = [1, 1]} : vector<8x96xf32> to vector<8x32xf32>
    %523 = arith.mulf %522, %505 : vector<8x32xf32>
    %524 = vector.extract_strided_slice %519 {offsets = [0, 0], sizes = [8, 32], strides = [1, 1]} : vector<8x96xf32> to vector<8x32xf32>
    %525 = arith.mulf %524, %521 : vector<8x32xf32>
    %526 = arith.addf %523, %525 : vector<8x32xf32>
    %527 = vector.extract_strided_slice %519 {offsets = [0, 64], sizes = [8, 32], strides = [1, 1]} : vector<8x96xf32> to vector<8x32xf32>
    %528 = math.tanh %526 : vector<8x32xf32>
    %529 = arith.mulf %527, %528 : vector<8x32xf32>
    %530 = vector.extract_strided_slice %403 {offsets = [48, 0], sizes = [8, 128], strides = [1, 1]} : vector<64x128xf32> to vector<8x128xf32>
    %cst_109 = arith.constant dense<0.000000e+00> : vector<8x128xf32>
    %531 = tpu.matmul %529, %404, %cst_109 {dimension_numbers = #tpu.dot_dimension_numbers<[1], [0], [0], [1], [0, 0, 1, 1], [], []>} : vector<8x32xf32>, vector<32x128xf32>, vector<8x128xf32> -> vector<8x128xf32>
    %532 = arith.addf %530, %531 : vector<8x128xf32>
    %533 = vector.extract_strided_slice %532 {offsets = [0, 0], sizes = [8, 96], strides = [1, 1]} : vector<8x128xf32> to vector<8x96xf32>
    %cst_110 = arith.constant 5.000000e-01 : f32
    %534 = vector.broadcast %cst_110 : f32 to vector<8x96xf32>
    %535 = arith.mulf %534, %533 : vector<8x96xf32>
    %536 = math.tanh %535 : vector<8x96xf32>
    %cst_111 = arith.constant 5.000000e-01 : f32
    %537 = vector.broadcast %cst_111 : f32 to vector<8x96xf32>
    %538 = arith.mulf %537, %536 : vector<8x96xf32>
    %cst_112 = arith.constant 5.000000e-01 : f32
    %539 = vector.broadcast %cst_112 : f32 to vector<8x96xf32>
    %540 = arith.addf %538, %539 : vector<8x96xf32>
    %541 = vector.extract_strided_slice %532 {offsets = [0, 96], sizes = [8, 32], strides = [1, 1]} : vector<8x128xf32> to vector<8x32xf32>
    %542 = math.tanh %541 : vector<8x32xf32>
    %543 = vector.extract_strided_slice %540 {offsets = [0, 32], sizes = [8, 32], strides = [1, 1]} : vector<8x96xf32> to vector<8x32xf32>
    %544 = arith.mulf %543, %526 : vector<8x32xf32>
    %545 = vector.extract_strided_slice %540 {offsets = [0, 0], sizes = [8, 32], strides = [1, 1]} : vector<8x96xf32> to vector<8x32xf32>
    %546 = arith.mulf %545, %542 : vector<8x32xf32>
    %547 = arith.addf %544, %546 : vector<8x32xf32>
    %548 = vector.extract_strided_slice %540 {offsets = [0, 64], sizes = [8, 32], strides = [1, 1]} : vector<8x96xf32> to vector<8x32xf32>
    %549 = math.tanh %547 : vector<8x32xf32>
    %550 = arith.mulf %548, %549 : vector<8x32xf32>
    %551 = vector.extract_strided_slice %403 {offsets = [56, 0], sizes = [8, 128], strides = [1, 1]} : vector<64x128xf32> to vector<8x128xf32>
    %cst_113 = arith.constant dense<0.000000e+00> : vector<8x128xf32>
    %552 = tpu.matmul %550, %404, %cst_113 {dimension_numbers = #tpu.dot_dimension_numbers<[1], [0], [0], [1], [0, 0, 1, 1], [], []>} : vector<8x32xf32>, vector<32x128xf32>, vector<8x128xf32> -> vector<8x128xf32>
    %553 = arith.addf %551, %552 : vector<8x128xf32>
    %554 = vector.extract_strided_slice %553 {offsets = [0, 0], sizes = [8, 96], strides = [1, 1]} : vector<8x128xf32> to vector<8x96xf32>
    %cst_114 = arith.constant 5.000000e-01 : f32
    %555 = vector.broadcast %cst_114 : f32 to vector<8x96xf32>
    %556 = arith.mulf %555, %554 : vector<8x96xf32>
    %557 = math.tanh %556 : vector<8x96xf32>
    %cst_115 = arith.constant 5.000000e-01 : f32
    %558 = vector.broadcast %cst_115 : f32 to vector<8x96xf32>
    %559 = arith.mulf %558, %557 : vector<8x96xf32>
    %cst_116 = arith.constant 5.000000e-01 : f32
    %560 = vector.broadcast %cst_116 : f32 to vector<8x96xf32>
    %561 = arith.addf %559, %560 : vector<8x96xf32>
    %562 = vector.extract_strided_slice %553 {offsets = [0, 96], sizes = [8, 32], strides = [1, 1]} : vector<8x128xf32> to vector<8x32xf32>
    %563 = math.tanh %562 : vector<8x32xf32>
    %564 = vector.extract_strided_slice %561 {offsets = [0, 32], sizes = [8, 32], strides = [1, 1]} : vector<8x96xf32> to vector<8x32xf32>
    %565 = arith.mulf %564, %547 : vector<8x32xf32>
    %566 = vector.extract_strided_slice %561 {offsets = [0, 0], sizes = [8, 32], strides = [1, 1]} : vector<8x96xf32> to vector<8x32xf32>
    %567 = arith.mulf %566, %563 : vector<8x32xf32>
    %568 = arith.addf %565, %567 : vector<8x32xf32>
    %569 = vector.extract_strided_slice %561 {offsets = [0, 64], sizes = [8, 32], strides = [1, 1]} : vector<8x96xf32> to vector<8x32xf32>
    %570 = math.tanh %568 : vector<8x32xf32>
    %571 = arith.mulf %569, %570 : vector<8x32xf32>
    %572 = vector.extract_strided_slice %398 {offsets = [56, 0], sizes = [8, 64], strides = [1, 1]} : vector<64x64xf32> to vector<8x64xf32>
    %c0_117 = arith.constant 0 : index
    %c0_118 = arith.constant 0 : index
    %573 = vector.load %arg11[%c0_117, %c0_118] : memref<64x128xf32, #tpu.memory_space<vmem>>, vector<64x128xf32>
    %cst_119 = arith.constant dense<0.000000e+00> : vector<8x128xf32>
    %574 = tpu.matmul %572, %573, %cst_119 {dimension_numbers = #tpu.dot_dimension_numbers<[1], [0], [0], [1], [0, 0, 1, 1], [], []>} : vector<8x64xf32>, vector<64x128xf32>, vector<8x128xf32> -> vector<8x128xf32>
    %c0_120 = arith.constant 0 : index
    %c0_121 = arith.constant 0 : index
    %575 = vector.load %arg12[%c0_120, %c0_121] : memref<1x128xf32, #tpu.memory_space<vmem>>, vector<1x128xf32>
    %576 = vector.broadcast %575 : vector<1x128xf32> to vector<8x128xf32>
    %577 = arith.addf %574, %576 : vector<8x128xf32>
    %578 = vector.extract_strided_slice %577 {offsets = [0, 0], sizes = [8, 96], strides = [1, 1]} : vector<8x128xf32> to vector<8x96xf32>
    %cst_122 = arith.constant 5.000000e-01 : f32
    %579 = vector.broadcast %cst_122 : f32 to vector<8x96xf32>
    %580 = arith.mulf %579, %578 : vector<8x96xf32>
    %581 = math.tanh %580 : vector<8x96xf32>
    %cst_123 = arith.constant 5.000000e-01 : f32
    %582 = vector.broadcast %cst_123 : f32 to vector<8x96xf32>
    %583 = arith.mulf %582, %581 : vector<8x96xf32>
    %cst_124 = arith.constant 5.000000e-01 : f32
    %584 = vector.broadcast %cst_124 : f32 to vector<8x96xf32>
    %585 = arith.addf %583, %584 : vector<8x96xf32>
    %586 = vector.extract_strided_slice %585 {offsets = [0, 0], sizes = [8, 32], strides = [1, 1]} : vector<8x96xf32> to vector<8x32xf32>
    %587 = vector.extract_strided_slice %577 {offsets = [0, 96], sizes = [8, 32], strides = [1, 1]} : vector<8x128xf32> to vector<8x32xf32>
    %588 = math.tanh %587 : vector<8x32xf32>
    %589 = arith.mulf %586, %588 : vector<8x32xf32>
    %590 = vector.extract_strided_slice %585 {offsets = [0, 64], sizes = [8, 32], strides = [1, 1]} : vector<8x96xf32> to vector<8x32xf32>
    %591 = math.tanh %589 : vector<8x32xf32>
    %592 = arith.mulf %590, %591 : vector<8x32xf32>
    %593 = tpu.concatenate %571, %592 in 1 : vector<8x32xf32>, vector<8x32xf32> -> vector<8x64xf32>
    %c0_125 = arith.constant 0 : index
    %c0_126 = arith.constant 0 : index
    %594 = vector.load %arg13[%c0_125, %c0_126] : memref<64x1664xf32, #tpu.memory_space<vmem>>, vector<64x1664xf32>
    %cst_127 = arith.constant dense<0.000000e+00> : vector<8x1664xf32>
    %595 = tpu.matmul %593, %594, %cst_127 {dimension_numbers = #tpu.dot_dimension_numbers<[1], [0], [0], [1], [0, 0, 1, 1], [], []>} : vector<8x64xf32>, vector<64x1664xf32>, vector<8x1664xf32> -> vector<8x1664xf32>
    %c0_128 = arith.constant 0 : index
    %c0_129 = arith.constant 0 : index
    %596 = vector.load %arg14[%c0_128, %c0_129] : memref<1x1664xf32, #tpu.memory_space<vmem>>, vector<1x1664xf32>
    %597 = vector.broadcast %596 : vector<1x1664xf32> to vector<8x1664xf32>
    %598 = arith.addf %595, %597 : vector<8x1664xf32>
    %cst_130 = arith.constant 0.000000e+00 : f32
    %599 = vector.broadcast %cst_130 : f32 to vector<8x1664xf32>
    %600 = arith.maximumf %598, %599 : vector<8x1664xf32>
    %c0_131 = arith.constant 0 : index
    %c0_132 = arith.constant 0 : index
    %601 = vector.load %arg15[%c0_131, %c0_132] : memref<1x1664xf32, #tpu.memory_space<vmem>>, vector<1x1664xf32>
    %602 = vector.broadcast %601 : vector<1x1664xf32> to vector<8x1664xf32>
    %603 = arith.mulf %600, %602 : vector<8x1664xf32>
    %cst_133 = arith.constant dense<0.000000e+00> : vector<8xf32>
    %604 = vector.multi_reduction <add>, %603, %cst_133 [1] : vector<8x1664xf32> to vector<8xf32>
    %605 = vector.shape_cast %604 : vector<8xf32> to vector<8x1xf32>
    %c0_134 = arith.constant 0 : index
    %c0_135 = arith.constant 0 : index
    %606 = vector.load %arg16[%c0_134, %c0_135] : memref<1x1xf32, #tpu.memory_space<vmem>>, vector<1x1xf32>
    %607 = vector.broadcast %606 : vector<1x1xf32> to vector<8x1xf32>
    %608 = arith.addf %605, %607 : vector<8x1xf32>
    %c0_136 = arith.constant 0 : index
    %c0_137 = arith.constant 0 : index
    %609 = vector.load %arg17[%c0_136, %c0_137] : memref<8x1xf32, #tpu.memory_space<vmem>>, vector<8x1xf32>
    tpu.vector_store %arg17[%c0_136, %c0_137], %608 {strides = array<i32>} : memref<8x1xf32, #tpu.memory_space<vmem>>, vector<8x1xf32>,
    return
  }
  func.func @transform_0(%arg0: i32) -> (i32, i32) {
    %c0_i32 = arith.constant 0 : i32
    %c0_i32_0 = arith.constant 0 : i32
    %c0_i32_1 = arith.constant 0 : i32
    return %c0_i32, %c0_i32_0 : i32, i32
  }
  func.func @transform_1(%arg0: i32) -> (i32, i32) {
    %c0_i32 = arith.constant 0 : i32
    %c0_i32_0 = arith.constant 0 : i32
    %c0_i32_1 = arith.constant 0 : i32
    return %c0_i32, %c0_i32_0 : i32, i32
  }
  func.func @transform_2(%arg0: i32) -> (i32, i32) {
    %c0_i32 = arith.constant 0 : i32
    %c0_i32_0 = arith.constant 0 : i32
    %c0_i32_1 = arith.constant 0 : i32
    return %c0_i32, %c0_i32_0 : i32, i32
  }
  func.func @transform_3(%arg0: i32) -> (i32, i32) {
    %c0_i32 = arith.constant 0 : i32
    %c0_i32_0 = arith.constant 0 : i32
    %c0_i32_1 = arith.constant 0 : i32
    return %c0_i32, %c0_i32_0 : i32, i32
  }
  func.func @transform_4(%arg0: i32) -> (i32, i32) {
    %c0_i32 = arith.constant 0 : i32
    %c0_i32_0 = arith.constant 0 : i32
    %c0_i32_1 = arith.constant 0 : i32
    return %c0_i32, %c0_i32_0 : i32, i32
  }
  func.func @transform_5(%arg0: i32) -> (i32, i32) {
    %c0_i32 = arith.constant 0 : i32
    %c0_i32_0 = arith.constant 0 : i32
    %c0_i32_1 = arith.constant 0 : i32
    return %c0_i32, %c0_i32_0 : i32, i32
  }
  func.func @transform_6(%arg0: i32) -> (i32, i32) {
    %c0_i32 = arith.constant 0 : i32
    %c0_i32_0 = arith.constant 0 : i32
    %c0_i32_1 = arith.constant 0 : i32
    return %c0_i32, %c0_i32_0 : i32, i32
  }
  func.func @transform_7(%arg0: i32) -> (i32, i32) {
    %c0_i32 = arith.constant 0 : i32
    %c0_i32_0 = arith.constant 0 : i32
    %c0_i32_1 = arith.constant 0 : i32
    return %c0_i32, %c0_i32_0 : i32, i32
  }
  func.func @transform_8(%arg0: i32) -> (i32, i32) {
    %c0_i32 = arith.constant 0 : i32
    %c0_i32_0 = arith.constant 0 : i32
    %c0_i32_1 = arith.constant 0 : i32
    return %c0_i32, %c0_i32_0 : i32, i32
  }
  func.func @transform_9(%arg0: i32) -> (i32, i32) {
    %c0_i32 = arith.constant 0 : i32
    %c0_i32_0 = arith.constant 0 : i32
    %c0_i32_1 = arith.constant 0 : i32
    return %c0_i32, %c0_i32_0 : i32, i32
  }
  func.func @transform_10(%arg0: i32) -> (i32, i32) {
    %c0_i32 = arith.constant 0 : i32
    %c0_i32_0 = arith.constant 0 : i32
    %c0_i32_1 = arith.constant 0 : i32
    return %c0_i32, %c0_i32_0 : i32, i32
  }
  func.func @transform_11(%arg0: i32) -> (i32, i32) {
    %c0_i32 = arith.constant 0 : i32
    %c0_i32_0 = arith.constant 0 : i32
    %c0_i32_1 = arith.constant 0 : i32
    return %c0_i32, %c0_i32_0 : i32, i32
  }
  func.func @transform_12(%arg0: i32) -> (i32, i32) {
    %c0_i32 = arith.constant 0 : i32
    %c0_i32_0 = arith.constant 0 : i32
    %c0_i32_1 = arith.constant 0 : i32
    return %c0_i32, %c0_i32_0 : i32, i32
  }
  func.func @transform_13(%arg0: i32) -> (i32, i32) {
    %c0_i32 = arith.constant 0 : i32
    %c0_i32_0 = arith.constant 0 : i32
    %c0_i32_1 = arith.constant 0 : i32
    return %c0_i32, %c0_i32_0 : i32, i32
  }
  func.func @transform_14(%arg0: i32) -> (i32, i32) {
    %c0_i32 = arith.constant 0 : i32
    %c0_i32_0 = arith.constant 0 : i32
    %c0_i32_1 = arith.constant 0 : i32
    return %c0_i32, %c0_i32_0 : i32, i32
  }
  func.func @transform_15(%arg0: i32) -> (i32, i32) {
    %c0_i32 = arith.constant 0 : i32
    %c0_i32_0 = arith.constant 0 : i32
    %c0_i32_1 = arith.constant 0 : i32
    return %c0_i32, %c0_i32_0 : i32, i32
  }
  func.func @transform_16(%arg0: i32) -> (i32, i32) {
    %c0_i32 = arith.constant 0 : i32
    %c0_i32_0 = arith.constant 0 : i32
    %c0_i32_1 = arith.constant 0 : i32
    return %c0_i32, %c0_i32_0 : i32, i32
  }
}

</mosaic_0001>

<llo_original>
// kernel: bilstm_forward.1
$region0: #{bilstm_forward.1}
  #allocation0 [shape = 'u32[]', space=smem, size = 0x4, offset = 0x4, fixed_abs, tag = 'smem constant byte address 0x4 - core index']
  #allocation1 [shape = 'u32[144,128]{1,0:T(1,128)}', space=vmem, size = 0x12000, scoped, tag = 'internal scratch']
  #allocation2 [shape = 'f32[1,1]{1,0:T(1,128)S(1)}', space=vmem, size = 0x200, scoped, tag = 'scoped memory for bilstm_forward.1']
  %s0 = inlined_call_operand.vmem [shape: f32[64,8], index: 0, kind: input, shape index: {}]
  %s1 = inlined_call_operand.vmem [shape: f32[8,256], index: 1, kind: input, shape index: {}]
  %s2 = inlined_call_operand.vmem [shape: f32[64,256], index: 2, kind: input, shape index: {}]
  %s3 = inlined_call_operand.hbm [shape: f32[1,256], index: 3, kind: input, shape index: {}]
  %s4 = inlined_call_operand.vmem [shape: f32[128,256], index: 4, kind: input, shape index: {}]
  %s5 = inlined_call_operand.hbm [shape: f32[64,256], index: 5, kind: input, shape index: {}]
  %s6 = inlined_call_operand.hbm [shape: f32[1,256], index: 6, kind: input, shape index: {}]
  %s7 = inlined_call_operand.hbm [shape: f32[64,128], index: 7, kind: input, shape index: {}]
  %s8 = inlined_call_operand.vmem [shape: f32[32,128], index: 8, kind: input, shape index: {}]
  %s9 = inlined_call_operand.vmem [shape: f32[1,128], index: 9, kind: input, shape index: {}]
  %s10 = inlined_call_operand.hbm [shape: f32[64,128], index: 10, kind: input, shape index: {}]
  %s11 = inlined_call_operand.hbm [shape: f32[1,128], index: 11, kind: input, shape index: {}]
  %s12 = inlined_call_operand.hbm [shape: f32[64,1664], index: 12, kind: input, shape index: {}]
  %s13 = inlined_call_operand.hbm [shape: f32[1,1664], index: 13, kind: input, shape index: {}]
  %s14 = inlined_call_operand.hbm [shape: f32[1,1664], index: 14, kind: input, shape index: {}]
  %s15 = inlined_call_operand.<no memory space> [shape: f32[1,1], index: 15, kind: input, shape index: {}]
  %s16 = inlined_call_operand.vmem [shape: f32[8,1], index: 16, kind: output, shape index: {}]
  %s17 = sld [smem:[#allocation0]]
  $region110: #{bilstm_forward.1} parent=0
    _
  %s19 = ssub.s32 1, %s17
  %s20 = scalar_select 0, %s19, %s17
  %v21 = vstv %s15
  %22 = vst [vmem:[#allocation2] sm:$0x1] %v21
  $region1: #{bilstm_forward.1} parent=0
    #allocation3 [shape = 'u8[1024]{0}', space=vmem, size = 0x400, scoped, tag = 'input window, operand 3, single buffered']
    #allocation4 [shape = 's32[1]{0}', space=sflag, size = 0x4, scoped, tag = 'scoped memory for bilstm_forward.1']
    #allocation5 [shape = 'u8[65536]{0}', space=vmem, size = 0x10000, scoped, tag = 'input window, operand 5, single buffered']
    #allocation6 [shape = 's32[1]{0}', space=sflag, size = 0x4, scoped, tag = 'scoped memory for bilstm_forward.1']
    #allocation7 [shape = 'u8[1024]{0}', space=vmem, size = 0x400, scoped, tag = 'input window, operand 6, single buffered']
    #allocation8 [shape = 'u8[32768]{0}', space=vmem, size = 0x8000, scoped, tag = 'input window, operand 7, single buffered']
    #allocation9 [shape = 's32[1]{0}', space=sflag, size = 0x4, scoped, tag = 'scoped memory for bilstm_forward.1']
    #allocation10 [shape = 'u8[32768]{0}', space=vmem, size = 0x8000, scoped, tag = 'input window, operand 10, single buffered']
    #allocation11 [shape = 'u8[512]{0}', space=vmem, size = 0x400, scoped, tag = 'input window, operand 11, single buffered']
    #allocation12 [shape = 's32[1]{0}', space=sflag, size = 0x4, scoped, tag = 'scoped memory for bilstm_forward.1']
    #allocation13 [shape = 'u8[425984]{0}', space=vmem, size = 0x68000, scoped, tag = 'input window, operand 12, single buffered']
    #allocation14 [shape = 'u8[6656]{0}', space=vmem, size = 0x1c00, scoped, tag = 'input window, operand 13, single buffered']
    #allocation15 [shape = 's32[1]{0}', space=sflag, size = 0x4, scoped, tag = 'scoped memory for bilstm_forward.1']
    #allocation16 [shape = 'u8[6656]{0}', space=vmem, size = 0x1c00, scoped, tag = 'input window, operand 14, single buffered']
    %23 = vsyncpa [#allocation4], 0
    %24 = vsyncpa [#allocation6], 0
    %25 = vsyncpa [#allocation9], 0
    %26 = vsyncpa [#allocation12], 0
    %27 = vsyncpa [#allocation15], 0
    // Predicated region
    $region2: #{bilstm_forward.1} parent=1 // pred_check
      _
    $region3: #{bilstm_forward.1} parent=1 // pred_check_branch
      %29 = sbr.rel (0) target = $region5
    $region4: #{bilstm_forward.1} parent=1 // pred_region
      _
    $region5: #{bilstm_forward.1} parent=1 // pred_fallthru
      _
    // Predicated region
    $region6: #{bilstm_forward.1} parent=1 // pred_check
      _
    $region7: #{bilstm_forward.1} parent=1 // pred_check_branch
      %31 = sbr.rel (0) target = $region9
    $region8: #{bilstm_forward.1} parent=1 // pred_region
      _
    $region9: #{bilstm_forward.1} parent=1 // pred_fallthru
      _
    // Predicated region
    $region10: #{bilstm_forward.1} parent=1 // pred_check
      _
    $region11: #{bilstm_forward.1} parent=1 // pred_check_branch
      %33 = sbr.rel (0) target = $region13
    $region12: #{bilstm_forward.1} parent=1 // pred_region
      _
    $region13: #{bilstm_forward.1} parent=1 // pred_fallthru
      _
    // Predicated region
    $region14: #{bilstm_forward.1} parent=1 // pred_check
      _
    $region15: #{bilstm_forward.1} parent=1 // pred_check_branch
      %35 = sbr.rel (0) target = $region17
    $region16: #{bilstm_forward.1} parent=1 // pred_region
      %s37 = ssub.s32 32, 32
      %38 = vsyncadd [#allocation4], %s37
      %s40 = sshll.u32 [#allocation3], 4
      %s41 = int_to_ptr.vmem [resolvable:$true] %s40
      %43 = dma.hbm_to_vmem [thread:$0]  %s3, 32, %s41, [#allocation4]
    $region17: #{bilstm_forward.1} parent=1 // pred_fallthru
      _
    // Predicated region
    $region18: #{bilstm_forward.1} parent=1 // pred_check
      _
    $region19: #{bilstm_forward.1} parent=1 // pred_check_branch
      %45 = sbr.rel (0) target = $region21
    $region20: #{bilstm_forward.1} parent=1 // pred_region
      _
    $region21: #{bilstm_forward.1} parent=1 // pred_fallthru
      _
    // Predicated region
    $region22: #{bilstm_forward.1} parent=1 // pred_check
      _
    $region23: #{bilstm_forward.1} parent=1 // pred_check_branch
      %47 = sbr.rel (0) target = $region25
    $region24: #{bilstm_forward.1} parent=1 // pred_region
      %s49 = ssub.s32 2048, 2048
      %50 = vsyncadd [#allocation6], %s49
      %s51 = sshll.u32 [#allocation5], 4
      %s52 = int_to_ptr.vmem [resolvable:$true] %s51
      %57 = dma.hbm_to_vmem [thread:$0]  %s5, 2048, %s52, [#allocation6], 256, 256, 16
    $region25: #{bilstm_forward.1} parent=1 // pred_fallthru
      _
    // Predicated region
    $region26: #{bilstm_forward.1} parent=1 // pred_check
      _
    $region27: #{bilstm_forward.1} parent=1 // pred_check_branch
      %59 = sbr.rel (0) target = $region29
    $region28: #{bilstm_forward.1} parent=1 // pred_region
      %s61 = ssub.s32 32, 32
      %62 = vsyncadd [#allocation6], %s61
      %s64 = sshll.u32 [#allocation7], 4
      %s65 = int_to_ptr.vmem [resolvable:$true] %s64
      %67 = dma.hbm_to_vmem [thread:$0]  %s6, 32, %s65, [#allocation6]
    $region29: #{bilstm_forward.1} parent=1 // pred_fallthru
      _
    // Predicated region
    $region30: #{bilstm_forward.1} parent=1 // pred_check
      _
    $region31: #{bilstm_forward.1} parent=1 // pred_check_branch
      %69 = sbr.rel (0) target = $region33
    $region32: #{bilstm_forward.1} parent=1 // pred_region
      %s71 = ssub.s32 1024, 1024
      %72 = vsyncadd [#allocation9], %s71
      %s73 = sshll.u32 [#allocation8], 4
      %s74 = int_to_ptr.vmem [resolvable:$true] %s73
      %79 = dma.hbm_to_vmem [thread:$0]  %s7, 1024, %s74, [#allocation9], 128, 128, 8
    $region33: #{bilstm_forward.1} parent=1 // pred_fallthru
      _
    // Predicated region
    $region34: #{bilstm_forward.1} parent=1 // pred_check
      _
    $region35: #{bilstm_forward.1} parent=1 // pred_check_branch
      %81 = sbr.rel (0) target = $region37
    $region36: #{bilstm_forward.1} parent=1 // pred_region
      _
    $region37: #{bilstm_forward.1} parent=1 // pred_fallthru
      _
    // Predicated region
    $region38: #{bilstm_forward.1} parent=1 // pred_check
      _
    $region39: #{bilstm_forward.1} parent=1 // pred_check_branch
      %83 = sbr.rel (0) target = $region41
    $region40: #{bilstm_forward.1} parent=1 // pred_region
      _
    $region41: #{bilstm_forward.1} parent=1 // pred_fallthru
      _
    // Predicated region
    $region42: #{bilstm_forward.1} parent=1 // pred_check
      _
    $region43: #{bilstm_forward.1} parent=1 // pred_check_branch
      %85 = sbr.rel (0) target = $region45
    $region44: #{bilstm_forward.1} parent=1 // pred_region
      %s87 = ssub.s32 1024, 1024
      %88 = vsyncadd [#allocation9], %s87
      %s89 = sshll.u32 [#allocation10], 4
      %s90 = int_to_ptr.vmem [resolvable:$true] %s89
      %95 = dma.hbm_to_vmem [thread:$0]  %s10, 1024, %s90, [#allocation9], 128, 128, 8
    $region45: #{bilstm_forward.1} parent=1 // pred_fallthru
      _
    // Predicated region
    $region46: #{bilstm_forward.1} parent=1 // pred_check
      _
    $region47: #{bilstm_forward.1} parent=1 // pred_check_branch
      %97 = sbr.rel (0) target = $region49
    $region48: #{bilstm_forward.1} parent=1 // pred_region
      %s99 = ssub.s32 16, 16
      %100 = vsyncadd [#allocation12], %s99
      %s102 = sshll.u32 [#allocation11], 4
      %s103 = int_to_ptr.vmem [resolvable:$true] %s102
      %105 = dma.hbm_to_vmem [thread:$0]  %s11, 16, %s103, [#allocation12]
    $region49: #{bilstm_forward.1} parent=1 // pred_fallthru
      _
    // Predicated region
    $region50: #{bilstm_forward.1} parent=1 // pred_check
      _
    $region51: #{bilstm_forward.1} parent=1 // pred_check_branch
      %107 = sbr.rel (0) target = $region53
    $region52: #{bilstm_forward.1} parent=1 // pred_region
      %s109 = ssub.s32 13312, 13312
      %110 = vsyncadd [#allocation12], %s109
      %s111 = sshll.u32 [#allocation13], 4
      %s112 = int_to_ptr.vmem [resolvable:$true] %s111
      %117 = dma.hbm_to_vmem [thread:$0]  %s12, 13312, %s112, [#allocation12], 1664, 1664, 104
    $region53: #{bilstm_forward.1} parent=1 // pred_fallthru
      _
    // Predicated region
    $region54: #{bilstm_forward.1} parent=1 // pred_check
      _
    $region55: #{bilstm_forward.1} parent=1 // pred_check_branch
      %119 = sbr.rel (0) target = $region57
    $region56: #{bilstm_forward.1} parent=1 // pred_region
      %s121 = ssub.s32 208, 208
      %122 = vsyncadd [#allocation15], %s121
      %s124 = sshll.u32 [#allocation14], 4
      %s125 = int_to_ptr.vmem [resolvable:$true] %s124
      %127 = dma.hbm_to_vmem [thread:$0]  %s13, 208, %s125, [#allocation15]
    $region57: #{bilstm_forward.1} parent=1 // pred_fallthru
      _
    // Predicated region
    $region58: #{bilstm_forward.1} parent=1 // pred_check
      _
    $region59: #{bilstm_forward.1} parent=1 // pred_check_branch
      %129 = sbr.rel (0) target = $region61
    $region60: #{bilstm_forward.1} parent=1 // pred_region
      %s131 = ssub.s32 208, 208
      %132 = vsyncadd [#allocation15], %s131
      %s134 = sshll.u32 [#allocation16], 4
      %s135 = int_to_ptr.vmem [resolvable:$true] %s134
      %137 = dma.hbm_to_vmem [thread:$0]  %s14, 208, %s135, [#allocation15]
    $region61: #{bilstm_forward.1} parent=1 // pred_fallthru
      _
    // Predicated region
    $region62: #{bilstm_forward.1} parent=1 // pred_check
      _
    $region63: #{bilstm_forward.1} parent=1 // pred_check_branch
      %139 = sbr.rel (0) target = $region65
    $region64: #{bilstm_forward.1} parent=1 // pred_region
      _
    $region65: #{bilstm_forward.1} parent=1 // pred_fallthru
      _
    // Predicated region
    $region66: #{bilstm_forward.1} parent=1 // pred_check
      _
    $region67: #{bilstm_forward.1} parent=1 // pred_check_branch
      %141 = sbr.rel (0) target = $region69
    $region68: #{bilstm_forward.1} parent=1 // pred_region
      %142 = dma.done [#allocation4], 32
    $region69: #{bilstm_forward.1} parent=1 // pred_fallthru
      _
    // Predicated region
    $region70: #{bilstm_forward.1} parent=1 // pred_check
      _
    $region71: #{bilstm_forward.1} parent=1 // pred_check_branch
      %144 = sbr.rel (0) target = $region73
    $region72: #{bilstm_forward.1} parent=1 // pred_region
      %145 = dma.done [#allocation6], 2048
    $region73: #{bilstm_forward.1} parent=1 // pred_fallthru
      _
    // Predicated region
    $region74: #{bilstm_forward.1} parent=1 // pred_check
      _
    $region75: #{bilstm_forward.1} parent=1 // pred_check_branch
      %147 = sbr.rel (0) target = $region77
    $region76: #{bilstm_forward.1} parent=1 // pred_region
      %148 = dma.done [#allocation6], 32
    $region77: #{bilstm_forward.1} parent=1 // pred_fallthru
      _
    // Predicated region
    $region78: #{bilstm_forward.1} parent=1 // pred_check
      _
    $region79: #{bilstm_forward.1} parent=1 // pred_check_branch
      %150 = sbr.rel (0) target = $region81
    $region80: #{bilstm_forward.1} parent=1 // pred_region
      %151 = dma.done [#allocation9], 1024
    $region81: #{bilstm_forward.1} parent=1 // pred_fallthru
      _
    // Predicated region
    $region82: #{bilstm_forward.1} parent=1 // pred_check
      _
    $region83: #{bilstm_forward.1} parent=1 // pred_check_branch
      %153 = sbr.rel (0) target = $region85
    $region84: #{bilstm_forward.1} parent=1 // pred_region
      %154 = dma.done [#allocation9], 1024
    $region85: #{bilstm_forward.1} parent=1 // pred_fallthru
      _
    // Predicated region
    $region86: #{bilstm_forward.1} parent=1 // pred_check
      _
    $region87: #{bilstm_forward.1} parent=1 // pred_check_branch
      %156 = sbr.rel (0) target = $region89
    $region88: #{bilstm_forward.1} parent=1 // pred_region
      %157 = dma.done [#allocation12], 16
    $region89: #{bilstm_forward.1} parent=1 // pred_fallthru
      _
    // Predicated region
    $region90: #{bilstm_forward.1} parent=1 // pred_check
      _
    $region91: #{bilstm_forward.1} parent=1 // pred_check_branch
      %159 = sbr.rel (0) target = $region93
    $region92: #{bilstm_forward.1} parent=1 // pred_region
      %160 = dma.done [#allocation12], 13312
    $region93: #{bilstm_forward.1} parent=1 // pred_fallthru
      _
    // Predicated region
    $region94: #{bilstm_forward.1} parent=1 // pred_check
      _
    $region95: #{bilstm_forward.1} parent=1 // pred_check_branch
      %162 = sbr.rel (0) target = $region97
    $region96: #{bilstm_forward.1} parent=1 // pred_region
      %163 = dma.done [#allocation15], 208
    $region97: #{bilstm_forward.1} parent=1 // pred_fallthru
      _
    // Predicated region
    $region98: #{bilstm_forward.1} parent=1 // pred_check
      _
    $region99: #{bilstm_forward.1} parent=1 // pred_check_branch
      %165 = sbr.rel (0) target = $region101
    $region100: #{bilstm_forward.1} parent=1 // pred_region
      %166 = dma.done [#allocation15], 208
    $region101: #{bilstm_forward.1} parent=1 // pred_fallthru
      _
    %v167 = vld [vmem:[%s0] sm:$0xff]
    %v168 = vld [vmem:[%s0 + $0x8] sm:$0xff]
    %v169 = vld [vmem:[%s0 + $0x10] sm:$0xff]
    %v170 = vld [vmem:[%s0 + $0x18] sm:$0xff]
    %v171 = vld [vmem:[%s0 + $0x20] sm:$0xff]
    %v172 = vld [vmem:[%s0 + $0x28] sm:$0xff]
    %v173 = vld [vmem:[%s0 + $0x30] sm:$0xff]
    %v174 = vld [vmem:[%s0 + $0x38] sm:$0xff]
    %v175 = vld [vmem:[%s1] sm:$0xff]
    %v176 = vld [vmem:[%s1 + $0x8] sm:$0xff]
    %v177 = vld [vmem:[#allocation3] sm:$0x3]
    %v179 = vlaneseq
    %v180 = vshrl.u32 %v179, 7
    %v181 = vsub.s32 0, %v180
    %v182 = vrot.slane %v177, %v181
    %v183 = vlaneseq
    %v184 = vshrl.u32 %v183, 7
    %v185 = vsub.s32 1, %v184
    %v186 = vrot.slane %v177, %v185
    %vm189 = vcmask 64512
    %v191 = vsel %vm189, %v167, 0
    %v194 = vsel %vm189, %v168, 0
    %v197 = vsel %vm189, %v169, 0
    %v200 = vsel %vm189, %v170, 0
    %v203 = vsel %vm189, %v171, 0
    %v206 = vsel %vm189, %v172, 0
    %v209 = vsel %vm189, %v173, 0
    %v212 = vsel %vm189, %v174, 0
    %214 = vmatprep.subr.mxu0 %v176
    %215 = vmatpush1.msra.mxu0 %v175
    %216 = vmatprep.subr.mxu0 0.0
    %217 = vmatpush1.msra.mxu0 0.0
    %218 = vmatprep.subr.mxu0 0.0
    %219 = vmatpush1.msra.mxu0 0.0
    %220 = vmatprep.subr.mxu0 0.0
    %221 = vmatpush1.msra.mxu0 0.0
    %222 = vmatprep.subr.mxu0 0.0
    %223 = vmatpush1.msra.mxu0 0.0
    %224 = vmatprep.subr.mxu0 0.0
    %225 = vmatpush1.msra.mxu0 0.0
    %226 = vmatprep.subr.mxu0 0.0
    %227 = vmatpush1.msra.mxu0 0.0
    %228 = vmatprep.subr.mxu0 0.0
    %229 = vmatpush1.msra.mxu0 0.0
    %230 = vmatprep.subr.mxu0 0.0
    %231 = vmatpush1.msra.mxu0 0.0
    %232 = vmatprep.subr.mxu0 0.0
    %233 = vmatpush1.msra.mxu0 0.0
    %234 = vmatprep.subr.mxu0 0.0
    %235 = vmatpush1.msra.mxu0 0.0
    %236 = vmatprep.subr.mxu0 0.0
    %237 = vmatpush1.msra.mxu0 0.0
    %238 = vmatprep.subr.mxu0 0.0
    %239 = vmatpush1.msra.mxu0 0.0
    %240 = vmatprep.subr.mxu0 0.0
    %241 = vmatpush1.msra.mxu0 0.0
    %242 = vmatprep.subr.mxu0 0.0
    %243 = vmatpush1.msra.mxu0 0.0
    %244 = vmatprep.subr.mxu0 0.0
    %245 = vmatpush1.msra.mxu0 0.0
    %246 = vmatprep.subr.mxu0 0.0
    %247 = vmatpush1.msra.mxu0 0.0
    %248 = vmatprep.subr.mxu0 0.0
    %249 = vmatpush1.msra.mxu0 0.0
    %250 = vmatprep.subr.mxu0 0.0
    %251 = vmatpush1.msra.mxu0 0.0
    %252 = vmatprep.subr.mxu0 0.0
    %253 = vmatpush1.msra.mxu0 0.0
    %254 = vmatprep.subr.mxu0 0.0
    %255 = vmatpush1.msra.mxu0 0.0
    %256 = vmatprep.subr.mxu0 0.0
    %257 = vmatpush1.msra.mxu0 0.0
    %258 = vmatprep.subr.mxu0 0.0
    %259 = vmatpush1.msra.mxu0 0.0
    %260 = vmatprep.subr.mxu0 0.0
    %261 = vmatpush1.msra.mxu0 0.0
    %262 = vmatprep.subr.mxu0 0.0
    %263 = vmatpush1.msra.mxu0 0.0
    %264 = vmatprep.subr.mxu0 0.0
    %265 = vmatpush1.msra.mxu0 0.0
    %266 = vmatprep.subr.mxu0 0.0
    %267 = vmatpush1.msra.mxu0 0.0
    %268 = vmatprep.subr.mxu0 0.0
    %269 = vmatpush1.msra.mxu0 0.0
    %270 = vmatprep.subr.mxu0 0.0
    %271 = vmatpush1.msra.mxu0 0.0
    %272 = vmatprep.subr.mxu0 0.0
    %273 = vmatpush1.msra.mxu0 0.0
    %274 = vmatprep.subr.mxu0 0.0
    %275 = vmatpush1.msra.mxu0 0.0
    %276 = vmatprep.subr.mxu0 0.0
    %277 = vmatpush1.msra.mxu0 0.0
    %278 = vmatprep.mubr.f32.mxu0 0.0
    %279 = vmatmul.mubr.f32.gmra.mrb[0].mxu0 %v191
    %v280 = vpop.f32.mrb[0].mxu0
    %v281 = vadd.f32 %v182, %v280
    %v282 = vpop.f32.mrb[0].mxu0
    %v283 = vadd.f32 %v186, %v282
    %284 = vmatprep.mubr.f32.mxu0 0.0
    %285 = vmatmul.mubr.f32.gmra.mrb[0].mxu0 %v194
    %v286 = vpop.f32.mrb[0].mxu0
    %v287 = vadd.f32 %v182, %v286
    %v288 = vpop.f32.mrb[0].mxu0
    %v289 = vadd.f32 %v186, %v288
    %290 = vmatprep.mubr.f32.mxu0 0.0
    %291 = vmatmul.mubr.f32.gmra.mrb[0].mxu0 %v197
    %v292 = vpop.f32.mrb[0].mxu0
    %v293 = vadd.f32 %v182, %v292
    %v294 = vpop.f32.mrb[0].mxu0
    %v295 = vadd.f32 %v186, %v294
    %296 = vmatprep.mubr.f32.mxu0 0.0
    %297 = vmatmul.mubr.f32.gmra.mrb[0].mxu0 %v200
    %v298 = vpop.f32.mrb[0].mxu0
    %v299 = vadd.f32 %v182, %v298
    %v300 = vpop.f32.mrb[0].mxu0
    %v301 = vadd.f32 %v186, %v300
    %302 = vmatprep.mubr.f32.mxu0 0.0
    %303 = vmatmul.mubr.f32.gmra.mrb[0].mxu0 %v203
    %v304 = vpop.f32.mrb[0].mxu0
    %v305 = vadd.f32 %v182, %v304
    %v306 = vpop.f32.mrb[0].mxu0
    %v307 = vadd.f32 %v186, %v306
    %308 = vmatprep.mubr.f32.mxu0 0.0
    %309 = vmatmul.mubr.f32.gmra.mrb[0].mxu0 %v206
    %v310 = vpop.f32.mrb[0].mxu0
    %v311 = vadd.f32 %v182, %v310
    %v312 = vpop.f32.mrb[0].mxu0
    %v313 = vadd.f32 %v186, %v312
    %314 = vmatprep.mubr.f32.mxu0 0.0
    %315 = vmatmul.mubr.f32.gmra.mrb[0].mxu0 %v209
    %v316 = vpop.f32.mrb[0].mxu0
    %v317 = vadd.f32 %v182, %v316
    %v318 = vpop.f32.mrb[0].mxu0
    %v319 = vadd.f32 %v186, %v318
    %320 = vmatprep.mubr.f32.mxu0 0.0
    %321 = vmatmul.mubr.f32.gmra.mrb[0].mxu0 %v212
    %v322 = vpop.f32.mrb[0].mxu0
    %v323 = vadd.f32 %v182, %v322
    %v324 = vpop.f32.mrb[0].mxu0
    %v325 = vadd.f32 %v186, %v324
    %326 = vdwg.mxu0
    %v327 = vld [vmem:[%s2] sm:$0xff]
    %v328 = vld [vmem:[%s2 + $0x8] sm:$0xff]
    %v329 = vld [vmem:[%s2 + $0x10] sm:$0xff]
    %v330 = vld [vmem:[%s2 + $0x18] sm:$0xff]
    %v331 = vld [vmem:[%s2 + $0x20] sm:$0xff]
    %v332 = vld [vmem:[%s2 + $0x28] sm:$0xff]
    %v333 = vld [vmem:[%s2 + $0x30] sm:$0xff]
    %v334 = vld [vmem:[%s2 + $0x38] sm:$0xff]
    %v335 = vld [vmem:[%s2 + $0x40] sm:$0xff]
    %v336 = vld [vmem:[%s2 + $0x48] sm:$0xff]
    %v337 = vld [vmem:[%s2 + $0x50] sm:$0xff]
    %v338 = vld [vmem:[%s2 + $0x58] sm:$0xff]
    %v339 = vld [vmem:[%s2 + $0x60] sm:$0xff]
    %v340 = vld [vmem:[%s2 + $0x68] sm:$0xff]
    %v341 = vld [vmem:[%s2 + $0x70] sm:$0xff]
    %v342 = vld [vmem:[%s2 + $0x78] sm:$0xff]
    %v343 = vmul.f32 %v281, 0.5
    %v344 = vmul.f32 %v283, 0.5
    %v345 = vtanh.pop %v343
    %v346 = vtanh.pop %v344
    %v347 = vmul.f32 %v345, 0.5
    %v348 = vmul.f32 %v346, 0.5
    %v349 = vadd.f32 %v347, 0.5
    %v350 = vadd.f32 %v348, 0.5
    %v351 = vtanh.pop %v283
    %v352 = vmul.f32 %v349, 0.0
    %354 = vrot.lane.b32.xlu0 %v351, 64
    %v355 = vpop.permute.xlu0 %354
    %v357 = vmul.f32 %v349, %v355
    %359 = vrot.lane.b32.xlu0 %v357, 64
    %v360 = vpop.permute.xlu0 %359
    %v362 = vadd.f32 %v352, %v360
    %v363 = vtanh.pop %v362
    %365 = vrot.lane.b32.xlu0 %v363, 64
    %v366 = vpop.permute.xlu0 %365
    %v368 = vmul.f32 %v350, %v366
    %vm369 = vcmask 523264
    %v371 = vsel %vm369, %v368, 0
    %373 = vmatprep.subr.mxu0 %v328
    %374 = vmatpush1.msra.mxu0 %v327
    %375 = vmatprep.subr.mxu0 %v330
    %376 = vmatpush1.msra.mxu0 %v329
    %377 = vmatprep.subr.mxu0 %v332
    %378 = vmatpush1.msra.mxu0 %v331
    %379 = vmatprep.subr.mxu0 %v334
    %380 = vmatpush1.msra.mxu0 %v333
    %381 = vmatprep.subr.mxu0 %v336
    %382 = vmatpush1.msra.mxu0 %v335
    %383 = vmatprep.subr.mxu0 %v338
    %384 = vmatpush1.msra.mxu0 %v337
    %385 = vmatprep.subr.mxu0 %v340
    %386 = vmatpush1.msra.mxu0 %v339
    %387 = vmatprep.subr.mxu0 %v342
    %388 = vmatpush1.msra.mxu0 %v341
    %389 = vmatprep.subr.mxu0 0.0
    %390 = vmatpush1.msra.mxu0 0.0
    %391 = vmatprep.subr.mxu0 0.0
    %392 = vmatpush1.msra.mxu0 0.0
    %393 = vmatprep.subr.mxu0 0.0
    %394 = vmatpush1.msra.mxu0 0.0
    %395 = vmatprep.subr.mxu0 0.0
    %396 = vmatpush1.msra.mxu0 0.0
    %397 = vmatprep.subr.mxu0 0.0
    %398 = vmatpush1.msra.mxu0 0.0
    %399 = vmatprep.subr.mxu0 0.0
    %400 = vmatpush1.msra.mxu0 0.0
    %401 = vmatprep.subr.mxu0 0.0
    %402 = vmatpush1.msra.mxu0 0.0
    %403 = vmatprep.subr.mxu0 0.0
    %404 = vmatpush1.msra.mxu0 0.0
    %405 = vmatprep.subr.mxu0 0.0
    %406 = vmatpush1.msra.mxu0 0.0
    %407 = vmatprep.subr.mxu0 0.0
    %408 = vmatpush1.msra.mxu0 0.0
    %409 = vmatprep.subr.mxu0 0.0
    %410 = vmatpush1.msra.mxu0 0.0
    %411 = vmatprep.subr.mxu0 0.0
    %412 = vmatpush1.msra.mxu0 0.0
    %413 = vmatprep.subr.mxu0 0.0
    %414 = vmatpush1.msra.mxu0 0.0
    %415 = vmatprep.subr.mxu0 0.0
    %416 = vmatpush1.msra.mxu0 0.0
    %417 = vmatprep.subr.mxu0 0.0
    %418 = vmatpush1.msra.mxu0 0.0
    %419 = vmatprep.subr.mxu0 0.0
    %420 = vmatpush1.msra.mxu0 0.0
    %421 = vmatprep.subr.mxu0 0.0
    %422 = vmatpush1.msra.mxu0 0.0
    %423 = vmatprep.subr.mxu0 0.0
    %424 = vmatpush1.msra.mxu0 0.0
    %425 = vmatprep.subr.mxu0 0.0
    %426 = vmatpush1.msra.mxu0 0.0
    %427 = vmatprep.subr.mxu0 0.0
    %428 = vmatpush1.msra.mxu0 0.0
    %429 = vmatprep.subr.mxu0 0.0
    %430 = vmatpush1.msra.mxu0 0.0
    %431 = vmatprep.subr.mxu0 0.0
    %432 = vmatpush1.msra.mxu0 0.0
    %433 = vmatprep.subr.mxu0 0.0
    %434 = vmatpush1.msra.mxu0 0.0
    %435 = vmatprep.subr.mxu0 0.0
    %436 = vmatpush1.msra.mxu0 0.0
    %437 = vmatprep.mubr.f32.mxu0 0.0
    %438 = vmatmul.mubr.f32.gmra.mrb[0].mxu0 %v371
    %v439 = vpop.f32.mrb[0].mxu0
    %v440 = vadd.f32 0.0, %v439
    %v441 = vpop.f32.mrb[0].mxu0
    %v442 = vadd.f32 0.0, %v441
    %443 = vdwg.mxu0
    %v444 = vadd.f32 %v287, %v440
    %v445 = vadd.f32 %v289, %v442
    %v446 = vmul.f32 %v444, 0.5
    %v447 = vmul.f32 %v445, 0.5
    %v448 = vtanh.pop %v446
    %v449 = vtanh.pop %v447
    %v450 = vmul.f32 %v448, 0.5
    %v451 = vmul.f32 %v449, 0.5
    %v452 = vadd.f32 %v450, 0.5
    %v453 = vadd.f32 %v451, 0.5
    %v454 = vtanh.pop %v445
    %v455 = vmul.f32 %v452, %v362
    %457 = vrot.lane.b32.xlu0 %v454, 64
    %v458 = vpop.permute.xlu0 %457
    %v460 = vmul.f32 %v452, %v458
    %462 = vrot.lane.b32.xlu0 %v460, 64
    %v463 = vpop.permute.xlu0 %462
    %v465 = vadd.f32 %v455, %v463
    %v466 = vtanh.pop %v465
    %468 = vrot.lane.b32.xlu0 %v466, 64
    %v469 = vpop.permute.xlu0 %468
    %v471 = vmul.f32 %v453, %v469
    %v473 = vsel %vm369, %v471, 0
    %475 = vmatprep.subr.mxu0 %v328
    %476 = vmatpush1.msra.mxu0 %v327
    %477 = vmatprep.subr.mxu0 %v330
    %478 = vmatpush1.msra.mxu0 %v329
    %479 = vmatprep.subr.mxu0 %v332
    %480 = vmatpush1.msra.mxu0 %v331
    %481 = vmatprep.subr.mxu0 %v334
    %482 = vmatpush1.msra.mxu0 %v333
    %483 = vmatprep.subr.mxu0 %v336
    %484 = vmatpush1.msra.mxu0 %v335
    %485 = vmatprep.subr.mxu0 %v338
    %486 = vmatpush1.msra.mxu0 %v337
    %487 = vmatprep.subr.mxu0 %v340
    %488 = vmatpush1.msra.mxu0 %v339
    %489 = vmatprep.subr.mxu0 %v342
    %490 = vmatpush1.msra.mxu0 %v341
    %491 = vmatprep.subr.mxu0 0.0
    %492 = vmatpush1.msra.mxu0 0.0
    %493 = vmatprep.subr.mxu0 0.0
    %494 = vmatpush1.msra.mxu0 0.0
    %495 = vmatprep.subr.mxu0 0.0
    %496 = vmatpush1.msra.mxu0 0.0
    %497 = vmatprep.subr.mxu0 0.0
    %498 = vmatpush1.msra.mxu0 0.0
    %499 = vmatprep.subr.mxu0 0.0
    %500 = vmatpush1.msra.mxu0 0.0
    %501 = vmatprep.subr.mxu0 0.0
    %502 = vmatpush1.msra.mxu0 0.0
    %503 = vmatprep.subr.mxu0 0.0
    %504 = vmatpush1.msra.mxu0 0.0
    %505 = vmatprep.subr.mxu0 0.0
    %506 = vmatpush1.msra.mxu0 0.0
    %507 = vmatprep.subr.mxu0 0.0
    %508 = vmatpush1.msra.mxu0 0.0
    %509 = vmatprep.subr.mxu0 0.0
    %510 = vmatpush1.msra.mxu0 0.0
    %511 = vmatprep.subr.mxu0 0.0
    %512 = vmatpush1.msra.mxu0 0.0
    %513 = vmatprep.subr.mxu0 0.0
    %514 = vmatpush1.msra.mxu0 0.0
    %515 = vmatprep.subr.mxu0 0.0
    %516 = vmatpush1.msra.mxu0 0.0
    %517 = vmatprep.subr.mxu0 0.0
    %518 = vmatpush1.msra.mxu0 0.0
    %519 = vmatprep.subr.mxu0 0.0
    %520 = vmatpush1.msra.mxu0 0.0
    %521 = vmatprep.subr.mxu0 0.0
    %522 = vmatpush1.msra.mxu0 0.0
    %523 = vmatprep.subr.mxu0 0.0
    %524 = vmatpush1.msra.mxu0 0.0
    %525 = vmatprep.subr.mxu0 0.0
    %526 = vmatpush1.msra.mxu0 0.0
    %527 = vmatprep.subr.mxu0 0.0
    %528 = vmatpush1.msra.mxu0 0.0
    %529 = vmatprep.subr.mxu0 0.0
    %530 = vmatpush1.msra.mxu0 0.0
    %531 = vmatprep.subr.mxu0 0.0
    %532 = vmatpush1.msra.mxu0 0.0
    %533 = vmatprep.subr.mxu0 0.0
    %534 = vmatpush1.msra.mxu0 0.0
    %535 = vmatprep.subr.mxu0 0.0
    %536 = vmatpush1.msra.mxu0 0.0
    %537 = vmatprep.subr.mxu0 0.0
    %538 = vmatpush1.msra.mxu0 0.0
    %539 = vmatprep.mubr.f32.mxu0 0.0
    %540 = vmatmul.mubr.f32.gmra.mrb[0].mxu0 %v473
    %v541 = vpop.f32.mrb[0].mxu0
    %v542 = vadd.f32 0.0, %v541
    %v543 = vpop.f32.mrb[0].mxu0
    %v544 = vadd.f32 0.0, %v543
    %545 = vdwg.mxu0
    %v546 = vadd.f32 %v293, %v542
    %v547 = vadd.f32 %v295, %v544
    %v548 = vmul.f32 %v546, 0.5
    %v549 = vmul.f32 %v547, 0.5
    %v550 = vtanh.pop %v548
    %v551 = vtanh.pop %v549
    %v552 = vmul.f32 %v550, 0.5
    %v553 = vmul.f32 %v551, 0.5
    %v554 = vadd.f32 %v552, 0.5
    %v555 = vadd.f32 %v553, 0.5
    %v556 = vtanh.pop %v547
    %v557 = vmul.f32 %v554, %v465
    %559 = vrot.lane.b32.xlu0 %v556, 64
    %v560 = vpop.permute.xlu0 %559
    %v562 = vmul.f32 %v554, %v560
    %564 = vrot.lane.b32.xlu0 %v562, 64
    %v565 = vpop.permute.xlu0 %564
    %v567 = vadd.f32 %v557, %v565
    %v568 = vtanh.pop %v567
    %570 = vrot.lane.b32.xlu0 %v568, 64
    %v571 = vpop.permute.xlu0 %570
    %v573 = vmul.f32 %v555, %v571
    %v575 = vsel %vm369, %v573, 0
    %577 = vmatprep.subr.mxu0 %v328
    %578 = vmatpush1.msra.mxu0 %v327
    %579 = vmatprep.subr.mxu0 %v330
    %580 = vmatpush1.msra.mxu0 %v329
    %581 = vmatprep.subr.mxu0 %v332
    %582 = vmatpush1.msra.mxu0 %v331
    %583 = vmatprep.subr.mxu0 %v334
    %584 = vmatpush1.msra.mxu0 %v333
    %585 = vmatprep.subr.mxu0 %v336
    %586 = vmatpush1.msra.mxu0 %v335
    %587 = vmatprep.subr.mxu0 %v338
    %588 = vmatpush1.msra.mxu0 %v337
    %589 = vmatprep.subr.mxu0 %v340
    %590 = vmatpush1.msra.mxu0 %v339
    %591 = vmatprep.subr.mxu0 %v342
    %592 = vmatpush1.msra.mxu0 %v341
    %593 = vmatprep.subr.mxu0 0.0
    %594 = vmatpush1.msra.mxu0 0.0
    %595 = vmatprep.subr.mxu0 0.0
    %596 = vmatpush1.msra.mxu0 0.0
    %597 = vmatprep.subr.mxu0 0.0
    %598 = vmatpush1.msra.mxu0 0.0
    %599 = vmatprep.subr.mxu0 0.0
    %600 = vmatpush1.msra.mxu0 0.0
    %601 = vmatprep.subr.mxu0 0.0
    %602 = vmatpush1.msra.mxu0 0.0
    %603 = vmatprep.subr.mxu0 0.0
    %604 = vmatpush1.msra.mxu0 0.0
    %605 = vmatprep.subr.mxu0 0.0
    %606 = vmatpush1.msra.mxu0 0.0
    %607 = vmatprep.subr.mxu0 0.0
    %608 = vmatpush1.msra.mxu0 0.0
    %609 = vmatprep.subr.mxu0 0.0
    %610 = vmatpush1.msra.mxu0 0.0
    %611 = vmatprep.subr.mxu0 0.0
    %612 = vmatpush1.msra.mxu0 0.0
    %613 = vmatprep.subr.mxu0 0.0
    %614 = vmatpush1.msra.mxu0 0.0
    %615 = vmatprep.subr.mxu0 0.0
    %616 = vmatpush1.msra.mxu0 0.0
    %617 = vmatprep.subr.mxu0 0.0
    %618 = vmatpush1.msra.mxu0 0.0
    %619 = vmatprep.subr.mxu0 0.0
    %620 = vmatpush1.msra.mxu0 0.0
    %621 = vmatprep.subr.mxu0 0.0
    %622 = vmatpush1.msra.mxu0 0.0
    %623 = vmatprep.subr.mxu0 0.0
    %624 = vmatpush1.msra.mxu0 0.0
    %625 = vmatprep.subr.mxu0 0.0
    %626 = vmatpush1.msra.mxu0 0.0
    %627 = vmatprep.subr.mxu0 0.0
    %628 = vmatpush1.msra.mxu0 0.0
    %629 = vmatprep.subr.mxu0 0.0
    %630 = vmatpush1.msra.mxu0 0.0
    %631 = vmatprep.subr.mxu0 0.0
    %632 = vmatpush1.msra.mxu0 0.0
    %633 = vmatprep.subr.mxu0 0.0
    %634 = vmatpush1.msra.mxu0 0.0
    %635 = vmatprep.subr.mxu0 0.0
    %636 = vmatpush1.msra.mxu0 0.0
    %637 = vmatprep.subr.mxu0 0.0
    %638 = vmatpush1.msra.mxu0 0.0
    %639 = vmatprep.subr.mxu0 0.0
    %640 = vmatpush1.msra.mxu0 0.0
    %641 = vmatprep.mubr.f32.mxu0 0.0
    %642 = vmatmul.mubr.f32.gmra.mrb[0].mxu0 %v575
    %v643 = vpop.f32.mrb[0].mxu0
    %v644 = vadd.f32 0.0, %v643
    %v645 = vpop.f32.mrb[0].mxu0
    %v646 = vadd.f32 0.0, %v645
    %647 = vdwg.mxu0
    %v648 = vadd.f32 %v299, %v644
    %v649 = vadd.f32 %v301, %v646
    %v650 = vmul.f32 %v648, 0.5
    %v651 = vmul.f32 %v649, 0.5
    %v652 = vtanh.pop %v650
    %v653 = vtanh.pop %v651
    %v654 = vmul.f32 %v652, 0.5
    %v655 = vmul.f32 %v653, 0.5
    %v656 = vadd.f32 %v654, 0.5
    %v657 = vadd.f32 %v655, 0.5
    %v658 = vtanh.pop %v649
    %v659 = vmul.f32 %v656, %v567
    %661 = vrot.lane.b32.xlu0 %v658, 64
    %v662 = vpop.permute.xlu0 %661
    %v664 = vmul.f32 %v656, %v662
    %666 = vrot.lane.b32.xlu0 %v664, 64
    %v667 = vpop.permute.xlu0 %666
    %v669 = vadd.f32 %v659, %v667
    %v670 = vtanh.pop %v669
    %672 = vrot.lane.b32.xlu0 %v670, 64
    %v673 = vpop.permute.xlu0 %672
    %v675 = vmul.f32 %v657, %v673
    %v677 = vsel %vm369, %v675, 0
    %679 = vmatprep.subr.mxu0 %v328
    %680 = vmatpush1.msra.mxu0 %v327
    %681 = vmatprep.subr.mxu0 %v330
    %682 = vmatpush1.msra.mxu0 %v329
    %683 = vmatprep.subr.mxu0 %v332
    %684 = vmatpush1.msra.mxu0 %v331
    %685 = vmatprep.subr.mxu0 %v334
    %686 = vmatpush1.msra.mxu0 %v333
    %687 = vmatprep.subr.mxu0 %v336
    %688 = vmatpush1.msra.mxu0 %v335
    %689 = vmatprep.subr.mxu0 %v338
    %690 = vmatpush1.msra.mxu0 %v337
    %691 = vmatprep.subr.mxu0 %v340
    %692 = vmatpush1.msra.mxu0 %v339
    %693 = vmatprep.subr.mxu0 %v342
    %694 = vmatpush1.msra.mxu0 %v341
    %695 = vmatprep.subr.mxu0 0.0
    %696 = vmatpush1.msra.mxu0 0.0
    %697 = vmatprep.subr.mxu0 0.0
    %698 = vmatpush1.msra.mxu0 0.0
    %699 = vmatprep.subr.mxu0 0.0
    %700 = vmatpush1.msra.mxu0 0.0
    %701 = vmatprep.subr.mxu0 0.0
    %702 = vmatpush1.msra.mxu0 0.0
    %703 = vmatprep.subr.mxu0 0.0
    %704 = vmatpush1.msra.mxu0 0.0
    %705 = vmatprep.subr.mxu0 0.0
    %706 = vmatpush1.msra.mxu0 0.0
    %707 = vmatprep.subr.mxu0 0.0
    %708 = vmatpush1.msra.mxu0 0.0
    %709 = vmatprep.subr.mxu0 0.0
    %710 = vmatpush1.msra.mxu0 0.0
    %711 = vmatprep.subr.mxu0 0.0
    %712 = vmatpush1.msra.mxu0 0.0
    %713 = vmatprep.subr.mxu0 0.0
    %714 = vmatpush1.msra.mxu0 0.0
    %715 = vmatprep.subr.mxu0 0.0
    %716 = vmatpush1.msra.mxu0 0.0
    %717 = vmatprep.subr.mxu0 0.0
    %718 = vmatpush1.msra.mxu0 0.0
    %719 = vmatprep.subr.mxu0 0.0
    %720 = vmatpush1.msra.mxu0 0.0
    %721 = vmatprep.subr.mxu0 0.0
    %722 = vmatpush1.msra.mxu0 0.0
    %723 = vmatprep.subr.mxu0 0.0
    %724 = vmatpush1.msra.mxu0 0.0
    %725 = vmatprep.subr.mxu0 0.0
    %726 = vmatpush1.msra.mxu0 0.0
    %727 = vmatprep.subr.mxu0 0.0
    %728 = vmatpush1.msra.mxu0 0.0
    %729 = vmatprep.subr.mxu0 0.0
    %730 = vmatpush1.msra.mxu0 0.0
    %731 = vmatprep.subr.mxu0 0.0
    %732 = vmatpush1.msra.mxu0 0.0
    %733 = vmatprep.subr.mxu0 0.0
    %734 = vmatpush1.msra.mxu0 0.0
    %735 = vmatprep.subr.mxu0 0.0
    %736 = vmatpush1.msra.mxu0 0.0
    %737 = vmatprep.subr.mxu0 0.0
    %738 = vmatpush1.msra.mxu0 0.0
    %739 = vmatprep.subr.mxu0 0.0
    %740 = vmatpush1.msra.mxu0 0.0
    %741 = vmatprep.subr.mxu0 0.0
    %742 = vmatpush1.msra.mxu0 0.0
    %743 = vmatprep.mubr.f32.mxu0 0.0
    %744 = vmatmul.mubr.f32.gmra.mrb[0].mxu0 %v677
    %v745 = vpop.f32.mrb[0].mxu0
    %v746 = vadd.f32 0.0, %v745
    %v747 = vpop.f32.mrb[0].mxu0
    %v748 = vadd.f32 0.0, %v747
    %749 = vdwg.mxu0
    %v750 = vadd.f32 %v305, %v746
    %v751 = vadd.f32 %v307, %v748
    %v752 = vmul.f32 %v750, 0.5
    %v753 = vmul.f32 %v751, 0.5
    %v754 = vtanh.pop %v752
    %v755 = vtanh.pop %v753
    %v756 = vmul.f32 %v754, 0.5
    %v757 = vmul.f32 %v755, 0.5
    %v758 = vadd.f32 %v756, 0.5
    %v759 = vadd.f32 %v757, 0.5
    %v760 = vtanh.pop %v751
    %v761 = vmul.f32 %v758, %v669
    %763 = vrot.lane.b32.xlu0 %v760, 64
    %v764 = vpop.permute.xlu0 %763
    %v766 = vmul.f32 %v758, %v764
    %768 = vrot.lane.b32.xlu0 %v766, 64
    %v769 = vpop.permute.xlu0 %768
    %v771 = vadd.f32 %v761, %v769
    %v772 = vtanh.pop %v771
    %774 = vrot.lane.b32.xlu0 %v772, 64
    %v775 = vpop.permute.xlu0 %774
    %v777 = vmul.f32 %v759, %v775
    %v779 = vsel %vm369, %v777, 0
    %781 = vmatprep.subr.mxu0 %v328
    %782 = vmatpush1.msra.mxu0 %v327
    %783 = vmatprep.subr.mxu0 %v330
    %784 = vmatpush1.msra.mxu0 %v329
    %785 = vmatprep.subr.mxu0 %v332
    %786 = vmatpush1.msra.mxu0 %v331
    %787 = vmatprep.subr.mxu0 %v334
    %788 = vmatpush1.msra.mxu0 %v333
    %789 = vmatprep.subr.mxu0 %v336
    %790 = vmatpush1.msra.mxu0 %v335
    %791 = vmatprep.subr.mxu0 %v338
    %792 = vmatpush1.msra.mxu0 %v337
    %793 = vmatprep.subr.mxu0 %v340
    %794 = vmatpush1.msra.mxu0 %v339
    %795 = vmatprep.subr.mxu0 %v342
    %796 = vmatpush1.msra.mxu0 %v341
    %797 = vmatprep.subr.mxu0 0.0
    %798 = vmatpush1.msra.mxu0 0.0
    %799 = vmatprep.subr.mxu0 0.0
    %800 = vmatpush1.msra.mxu0 0.0
    %801 = vmatprep.subr.mxu0 0.0
    %802 = vmatpush1.msra.mxu0 0.0
    %803 = vmatprep.subr.mxu0 0.0
    %804 = vmatpush1.msra.mxu0 0.0
    %805 = vmatprep.subr.mxu0 0.0
    %806 = vmatpush1.msra.mxu0 0.0
    %807 = vmatprep.subr.mxu0 0.0
    %808 = vmatpush1.msra.mxu0 0.0
    %809 = vmatprep.subr.mxu0 0.0
    %810 = vmatpush1.msra.mxu0 0.0
    %811 = vmatprep.subr.mxu0 0.0
    %812 = vmatpush1.msra.mxu0 0.0
    %813 = vmatprep.subr.mxu0 0.0
    %814 = vmatpush1.msra.mxu0 0.0
    %815 = vmatprep.subr.mxu0 0.0
    %816 = vmatpush1.msra.mxu0 0.0
    %817 = vmatprep.subr.mxu0 0.0
    %818 = vmatpush1.msra.mxu0 0.0
    %819 = vmatprep.subr.mxu0 0.0
    %820 = vmatpush1.msra.mxu0 0.0
    %821 = vmatprep.subr.mxu0 0.0
    %822 = vmatpush1.msra.mxu0 0.0
    %823 = vmatprep.subr.mxu0 0.0
    %824 = vmatpush1.msra.mxu0 0.0
    %825 = vmatprep.subr.mxu0 0.0
    %826 = vmatpush1.msra.mxu0 0.0
    %827 = vmatprep.subr.mxu0 0.0
    %828 = vmatpush1.msra.mxu0 0.0
    %829 = vmatprep.subr.mxu0 0.0
    %830 = vmatpush1.msra.mxu0 0.0
    %831 = vmatprep.subr.mxu0 0.0
    %832 = vmatpush1.msra.mxu0 0.0
    %833 = vmatprep.subr.mxu0 0.0
    %834 = vmatpush1.msra.mxu0 0.0
    %835 = vmatprep.subr.mxu0 0.0
    %836 = vmatpush1.msra.mxu0 0.0
    %837 = vmatprep.subr.mxu0 0.0
    %838 = vmatpush1.msra.mxu0 0.0
    %839 = vmatprep.subr.mxu0 0.0
    %840 = vmatpush1.msra.mxu0 0.0
    %841 = vmatprep.subr.mxu0 0.0
    %842 = vmatpush1.msra.mxu0 0.0
    %843 = vmatprep.subr.mxu0 0.0
    %844 = vmatpush1.msra.mxu0 0.0
    %845 = vmatprep.mubr.f32.mxu0 0.0
    %846 = vmatmul.mubr.f32.gmra.mrb[0].mxu0 %v779
    %v847 = vpop.f32.mrb[0].mxu0
    %v848 = vadd.f32 0.0, %v847
    %v849 = vpop.f32.mrb[0].mxu0
    %v850 = vadd.f32 0.0, %v849
    %851 = vdwg.mxu0
    %v852 = vadd.f32 %v311, %v848
    %v853 = vadd.f32 %v313, %v850
    %v854 = vmul.f32 %v852, 0.5
    %v855 = vmul.f32 %v853, 0.5
    %v856 = vtanh.pop %v854
    %v857 = vtanh.pop %v855
    %v858 = vmul.f32 %v856, 0.5
    %v859 = vmul.f32 %v857, 0.5
    %v860 = vadd.f32 %v858, 0.5
    %v861 = vadd.f32 %v859, 0.5
    %v862 = vtanh.pop %v853
    %v863 = vmul.f32 %v860, %v771
    %865 = vrot.lane.b32.xlu0 %v862, 64
    %v866 = vpop.permute.xlu0 %865
    %v868 = vmul.f32 %v860, %v866
    %870 = vrot.lane.b32.xlu0 %v868, 64
    %v871 = vpop.permute.xlu0 %870
    %v873 = vadd.f32 %v863, %v871
    %v874 = vtanh.pop %v873
    %876 = vrot.lane.b32.xlu0 %v874, 64
    %v877 = vpop.permute.xlu0 %876
    %v879 = vmul.f32 %v861, %v877
    %v881 = vsel %vm369, %v879, 0
    %883 = vmatprep.subr.mxu0 %v328
    %884 = vmatpush1.msra.mxu0 %v327
    %885 = vmatprep.subr.mxu0 %v330
    %886 = vmatpush1.msra.mxu0 %v329
    %887 = vmatprep.subr.mxu0 %v332
    %888 = vmatpush1.msra.mxu0 %v331
    %889 = vmatprep.subr.mxu0 %v334
    %890 = vmatpush1.msra.mxu0 %v333
    %891 = vmatprep.subr.mxu0 %v336
    %892 = vmatpush1.msra.mxu0 %v335
    %893 = vmatprep.subr.mxu0 %v338
    %894 = vmatpush1.msra.mxu0 %v337
    %895 = vmatprep.subr.mxu0 %v340
    %896 = vmatpush1.msra.mxu0 %v339
    %897 = vmatprep.subr.mxu0 %v342
    %898 = vmatpush1.msra.mxu0 %v341
    %899 = vmatprep.subr.mxu0 0.0
    %900 = vmatpush1.msra.mxu0 0.0
    %901 = vmatprep.subr.mxu0 0.0
    %902 = vmatpush1.msra.mxu0 0.0
    %903 = vmatprep.subr.mxu0 0.0
    %904 = vmatpush1.msra.mxu0 0.0
    %905 = vmatprep.subr.mxu0 0.0
    %906 = vmatpush1.msra.mxu0 0.0
    %907 = vmatprep.subr.mxu0 0.0
    %908 = vmatpush1.msra.mxu0 0.0
    %909 = vmatprep.subr.mxu0 0.0
    %910 = vmatpush1.msra.mxu0 0.0
    %911 = vmatprep.subr.mxu0 0.0
    %912 = vmatpush1.msra.mxu0 0.0
    %913 = vmatprep.subr.mxu0 0.0
    %914 = vmatpush1.msra.mxu0 0.0
    %915 = vmatprep.subr.mxu0 0.0
    %916 = vmatpush1.msra.mxu0 0.0
    %917 = vmatprep.subr.mxu0 0.0
    %918 = vmatpush1.msra.mxu0 0.0
    %919 = vmatprep.subr.mxu0 0.0
    %920 = vmatpush1.msra.mxu0 0.0
    %921 = vmatprep.subr.mxu0 0.0
    %922 = vmatpush1.msra.mxu0 0.0
    %923 = vmatprep.subr.mxu0 0.0
    %924 = vmatpush1.msra.mxu0 0.0
    %925 = vmatprep.subr.mxu0 0.0
    %926 = vmatpush1.msra.mxu0 0.0
    %927 = vmatprep.subr.mxu0 0.0
    %928 = vmatpush1.msra.mxu0 0.0
    %929 = vmatprep.subr.mxu0 0.0
    %930 = vmatpush1.msra.mxu0 0.0
    %931 = vmatprep.subr.mxu0 0.0
    %932 = vmatpush1.msra.mxu0 0.0
    %933 = vmatprep.subr.mxu0 0.0
    %934 = vmatpush1.msra.mxu0 0.0
    %935 = vmatprep.subr.mxu0 0.0
    %936 = vmatpush1.msra.mxu0 0.0
    %937 = vmatprep.subr.mxu0 0.0
    %938 = vmatpush1.msra.mxu0 0.0
    %939 = vmatprep.subr.mxu0 0.0
    %940 = vmatpush1.msra.mxu0 0.0
    %941 = vmatprep.subr.mxu0 0.0
    %942 = vmatpush1.msra.mxu0 0.0
    %943 = vmatprep.subr.mxu0 0.0
    %944 = vmatpush1.msra.mxu0 0.0
    %945 = vmatprep.subr.mxu0 0.0
    %946 = vmatpush1.msra.mxu0 0.0
    %947 = vmatprep.mubr.f32.mxu0 0.0
    %948 = vmatmul.mubr.f32.gmra.mrb[0].mxu0 %v881
    %v949 = vpop.f32.mrb[0].mxu0
    %v950 = vadd.f32 0.0, %v949
    %v951 = vpop.f32.mrb[0].mxu0
    %v952 = vadd.f32 0.0, %v951
    %953 = vdwg.mxu0
    %v954 = vadd.f32 %v317, %v950
    %v955 = vadd.f32 %v319, %v952
    %v956 = vmul.f32 %v954, 0.5
    %v957 = vmul.f32 %v955, 0.5
    %v958 = vtanh.pop %v956
    %v959 = vtanh.pop %v957
    %v960 = vmul.f32 %v958, 0.5
    %v961 = vmul.f32 %v959, 0.5
    %v962 = vadd.f32 %v960, 0.5
    %v963 = vadd.f32 %v961, 0.5
    %v964 = vtanh.pop %v955
    %v965 = vmul.f32 %v962, %v873
    %967 = vrot.lane.b32.xlu0 %v964, 64
    %v968 = vpop.permute.xlu0 %967
    %v970 = vmul.f32 %v962, %v968
    %972 = vrot.lane.b32.xlu0 %v970, 64
    %v973 = vpop.permute.xlu0 %972
    %v975 = vadd.f32 %v965, %v973
    %v976 = vtanh.pop %v975
    %978 = vrot.lane.b32.xlu0 %v976, 64
    %v979 = vpop.permute.xlu0 %978
    %v981 = vmul.f32 %v963, %v979
    %v983 = vsel %vm369, %v981, 0
    %985 = vmatprep.subr.mxu0 %v328
    %986 = vmatpush1.msra.mxu0 %v327
    %987 = vmatprep.subr.mxu0 %v330
    %988 = vmatpush1.msra.mxu0 %v329
    %989 = vmatprep.subr.mxu0 %v332
    %990 = vmatpush1.msra.mxu0 %v331
    %991 = vmatprep.subr.mxu0 %v334
    %992 = vmatpush1.msra.mxu0 %v333
    %993 = vmatprep.subr.mxu0 %v336
    %994 = vmatpush1.msra.mxu0 %v335
    %995 = vmatprep.subr.mxu0 %v338
    %996 = vmatpush1.msra.mxu0 %v337
    %997 = vmatprep.subr.mxu0 %v340
    %998 = vmatpush1.msra.mxu0 %v339
    %999 = vmatprep.subr.mxu0 %v342
    %1000 = vmatpush1.msra.mxu0 %v341
    %1001 = vmatprep.subr.mxu0 0.0
    %1002 = vmatpush1.msra.mxu0 0.0
    %1003 = vmatprep.subr.mxu0 0.0
    %1004 = vmatpush1.msra.mxu0 0.0
    %1005 = vmatprep.subr.mxu0 0.0
    %1006 = vmatpush1.msra.mxu0 0.0
    %1007 = vmatprep.subr.mxu0 0.0
    %1008 = vmatpush1.msra.mxu0 0.0
    %1009 = vmatprep.subr.mxu0 0.0
    %1010 = vmatpush1.msra.mxu0 0.0
    %1011 = vmatprep.subr.mxu0 0.0
    %1012 = vmatpush1.msra.mxu0 0.0
    %1013 = vmatprep.subr.mxu0 0.0
    %1014 = vmatpush1.msra.mxu0 0.0
    %1015 = vmatprep.subr.mxu0 0.0
    %1016 = vmatpush1.msra.mxu0 0.0
    %1017 = vmatprep.subr.mxu0 0.0
    %1018 = vmatpush1.msra.mxu0 0.0
    %1019 = vmatprep.subr.mxu0 0.0
    %1020 = vmatpush1.msra.mxu0 0.0
    %1021 = vmatprep.subr.mxu0 0.0
    %1022 = vmatpush1.msra.mxu0 0.0
    %1023 = vmatprep.subr.mxu0 0.0
    %1024 = vmatpush1.msra.mxu0 0.0
    %1025 = vmatprep.subr.mxu0 0.0
    %1026 = vmatpush1.msra.mxu0 0.0
    %1027 = vmatprep.subr.mxu0 0.0
    %1028 = vmatpush1.msra.mxu0 0.0
    %1029 = vmatprep.subr.mxu0 0.0
    %1030 = vmatpush1.msra.mxu0 0.0
    %1031 = vmatprep.subr.mxu0 0.0
    %1032 = vmatpush1.msra.mxu0 0.0
    %1033 = vmatprep.subr.mxu0 0.0
    %1034 = vmatpush1.msra.mxu0 0.0
    %1035 = vmatprep.subr.mxu0 0.0
    %1036 = vmatpush1.msra.mxu0 0.0
    %1037 = vmatprep.subr.mxu0 0.0
    %1038 = vmatpush1.msra.mxu0 0.0
    %1039 = vmatprep.subr.mxu0 0.0
    %1040 = vmatpush1.msra.mxu0 0.0
    %1041 = vmatprep.subr.mxu0 0.0
    %1042 = vmatpush1.msra.mxu0 0.0
    %1043 = vmatprep.subr.mxu0 0.0
    %1044 = vmatpush1.msra.mxu0 0.0
    %1045 = vmatprep.subr.mxu0 0.0
    %1046 = vmatpush1.msra.mxu0 0.0
    %1047 = vmatprep.subr.mxu0 0.0
    %1048 = vmatpush1.msra.mxu0 0.0
    %1049 = vmatprep.mubr.f32.mxu0 0.0
    %1050 = vmatmul.mubr.f32.gmra.mrb[0].mxu0 %v983
    %v1051 = vpop.f32.mrb[0].mxu0
    %v1052 = vadd.f32 0.0, %v1051
    %v1053 = vpop.f32.mrb[0].mxu0
    %v1054 = vadd.f32 0.0, %v1053
    %1055 = vdwg.mxu0
    %v1056 = vadd.f32 %v323, %v1052
    %v1057 = vadd.f32 %v325, %v1054
    %v1058 = vmul.f32 %v1056, 0.5
    %v1059 = vmul.f32 %v1057, 0.5
    %v1060 = vtanh.pop %v1058
    %v1061 = vtanh.pop %v1059
    %v1062 = vmul.f32 %v1060, 0.5
    %v1063 = vmul.f32 %v1061, 0.5
    %v1064 = vadd.f32 %v1062, 0.5
    %v1065 = vadd.f32 %v1063, 0.5
    %v1066 = vtanh.pop %v1057
    %v1067 = vmul.f32 %v1064, %v975
    %1069 = vrot.lane.b32.xlu0 %v1066, 64
    %v1070 = vpop.permute.xlu0 %1069
    %v1072 = vmul.f32 %v1064, %v1070
    %1074 = vrot.lane.b32.xlu0 %v1072, 64
    %v1075 = vpop.permute.xlu0 %1074
    %v1077 = vadd.f32 %v1067, %v1075
    %v1078 = vtanh.pop %v1077
    %1080 = vrot.lane.b32.xlu0 %v1078, 64
    %v1081 = vpop.permute.xlu0 %1080
    %v1083 = vmul.f32 %v1065, %v1081
    %vm1084 = vcmask 261120
    %v1085 = vsel %vm1084, %v368, %v1083
    %v1086 = vsel %vm1084, %v471, %v981
    %v1087 = vsel %vm1084, %v573, %v879
    %v1088 = vsel %vm1084, %v675, %v777
    %v1089 = vsel %vm1084, %v777, %v675
    %v1090 = vsel %vm1084, %v879, %v573
    %v1091 = vsel %vm1084, %v981, %v471
    %v1092 = vsel %vm1084, %v1083, %v368
    %1101 = vrot.lane.b32.xlu0 %v1092, 64
    %v1102 = vpop.permute.xlu0 %1101
    %1103 = vrot.lane.b32.xlu0 %v1091, 64
    %v1104 = vpop.permute.xlu0 %1103
    %1105 = vrot.lane.b32.xlu0 %v1090, 64
    %v1106 = vpop.permute.xlu0 %1105
    %1107 = vrot.lane.b32.xlu0 %v1089, 64
    %v1108 = vpop.permute.xlu0 %1107
    %1109 = vrot.lane.b32.xlu0 %v1088, 64
    %v1110 = vpop.permute.xlu0 %1109
    %1111 = vrot.lane.b32.xlu0 %v1087, 64
    %v1112 = vpop.permute.xlu0 %1111
    %1113 = vrot.lane.b32.xlu0 %v1086, 64
    %v1114 = vpop.permute.xlu0 %1113
    %1115 = vrot.lane.b32.xlu0 %v1085, 64
    %v1116 = vpop.permute.xlu0 %1115
    %v1125 = vsel %vm369, %v1085, %v1102
    %v1126 = vsel %vm369, %v1086, %v1104
    %v1127 = vsel %vm369, %v1087, %v1106
    %v1128 = vsel %vm369, %v1088, %v1108
    %v1129 = vsel %vm369, %v1089, %v1110
    %v1130 = vsel %vm369, %v1090, %v1112
    %v1131 = vsel %vm369, %v1091, %v1114
    %v1132 = vsel %vm369, %v1092, %v1116
    %v1133 = vld [vmem:[%s4] sm:$0xff]
    %v1134 = vld [vmem:[%s4 + $0x8] sm:$0xff]
    %v1135 = vld [vmem:[%s4 + $0x10] sm:$0xff]
    %v1136 = vld [vmem:[%s4 + $0x18] sm:$0xff]
    %v1137 = vld [vmem:[%s4 + $0x20] sm:$0xff]
    %v1138 = vld [vmem:[%s4 + $0x28] sm:$0xff]
    %v1139 = vld [vmem:[%s4 + $0x30] sm:$0xff]
    %v1140 = vld [vmem:[%s4 + $0x38] sm:$0xff]
    %v1141 = vld [vmem:[%s4 + $0x40] sm:$0xff]
    %v1142 = vld [vmem:[%s4 + $0x48] sm:$0xff]
    %v1143 = vld [vmem:[%s4 + $0x50] sm:$0xff]
    %v1144 = vld [vmem:[%s4 + $0x58] sm:$0xff]
    %v1145 = vld [vmem:[%s4 + $0x60] sm:$0xff]
    %v1146 = vld [vmem:[%s4 + $0x68] sm:$0xff]
    %v1147 = vld [vmem:[%s4 + $0x70] sm:$0xff]
    %v1148 = vld [vmem:[%s4 + $0x78] sm:$0xff]
    %v1149 = vld [vmem:[%s4 + $0x80] sm:$0xff]
    %v1150 = vld [vmem:[%s4 + $0x88] sm:$0xff]
    %v1151 = vld [vmem:[%s4 + $0x90] sm:$0xff]
    %v1152 = vld [vmem:[%s4 + $0x98] sm:$0xff]
    %v1153 = vld [vmem:[%s4 + $0xa0] sm:$0xff]
    %v1154 = vld [vmem:[%s4 + $0xa8] sm:$0xff]
    %v1155 = vld [vmem:[%s4 + $0xb0] sm:$0xff]
    %v1156 = vld [vmem:[%s4 + $0xb8] sm:$0xff]
    %v1157 = vld [vmem:[%s4 + $0xc0] sm:$0xff]
    %v1158 = vld [vmem:[%s4 + $0xc8] sm:$0xff]
    %v1159 = vld [vmem:[%s4 + $0xd0] sm:$0xff]
    %v1160 = vld [vmem:[%s4 + $0xd8] sm:$0xff]
    %v1161 = vld [vmem:[%s4 + $0xe0] sm:$0xff]
    %v1162 = vld [vmem:[%s4 + $0xe8] sm:$0xff]
    %v1163 = vld [vmem:[%s4 + $0xf0] sm:$0xff]
    %v1164 = vld [vmem:[%s4 + $0xf8] sm:$0xff]
    %v1165 = vld [vmem:[#allocation7] sm:$0x3]
    %v1167 = vlaneseq
    %v1168 = vshrl.u32 %v1167, 7
    %v1169 = vsub.s32 0, %v1168
    %v1170 = vrot.slane %v1165, %v1169
    %v1171 = vlaneseq
    %v1172 = vshrl.u32 %v1171, 7
    %v1173 = vsub.s32 1, %v1172
    %v1174 = vrot.slane %v1165, %v1173
    %1177 = vmatprep.subr.mxu0 %v1134
    %1178 = vmatpush1.msra.mxu0 %v1133
    %1179 = vmatprep.subr.mxu0 %v1136
    %1180 = vmatpush1.msra.mxu0 %v1135
    %1181 = vmatprep.subr.mxu0 %v1138
    %1182 = vmatpush1.msra.mxu0 %v1137
    %1183 = vmatprep.subr.mxu0 %v1140
    %1184 = vmatpush1.msra.mxu0 %v1139
    %1185 = vmatprep.subr.mxu0 %v1142
    %1186 = vmatpush1.msra.mxu0 %v1141
    %1187 = vmatprep.subr.mxu0 %v1144
    %1188 = vmatpush1.msra.mxu0 %v1143
    %1189 = vmatprep.subr.mxu0 %v1146
    %1190 = vmatpush1.msra.mxu0 %v1145
    %1191 = vmatprep.subr.mxu0 %v1148
    %1192 = vmatpush1.msra.mxu0 %v1147
    %1193 = vmatprep.subr.mxu0 %v1150
    %1194 = vmatpush1.msra.mxu0 %v1149
    %1195 = vmatprep.subr.mxu0 %v1152
    %1196 = vmatpush1.msra.mxu0 %v1151
    %1197 = vmatprep.subr.mxu0 %v1154
    %1198 = vmatpush1.msra.mxu0 %v1153
    %1199 = vmatprep.subr.mxu0 %v1156
    %1200 = vmatpush1.msra.mxu0 %v1155
    %1201 = vmatprep.subr.mxu0 %v1158
    %1202 = vmatpush1.msra.mxu0 %v1157
    %1203 = vmatprep.subr.mxu0 %v1160
    %1204 = vmatpush1.msra.mxu0 %v1159
    %1205 = vmatprep.subr.mxu0 %v1162
    %1206 = vmatpush1.msra.mxu0 %v1161
    %1207 = vmatprep.subr.mxu0 %v1164
    %1208 = vmatpush1.msra.mxu0 %v1163
    %1209 = vmatprep.subr.mxu0 0.0
    %1210 = vmatpush1.msra.mxu0 0.0
    %1211 = vmatprep.subr.mxu0 0.0
    %1212 = vmatpush1.msra.mxu0 0.0
    %1213 = vmatprep.subr.mxu0 0.0
    %1214 = vmatpush1.msra.mxu0 0.0
    %1215 = vmatprep.subr.mxu0 0.0
    %1216 = vmatpush1.msra.mxu0 0.0
    %1217 = vmatprep.subr.mxu0 0.0
    %1218 = vmatpush1.msra.mxu0 0.0
    %1219 = vmatprep.subr.mxu0 0.0
    %1220 = vmatpush1.msra.mxu0 0.0
    %1221 = vmatprep.subr.mxu0 0.0
    %1222 = vmatpush1.msra.mxu0 0.0
    %1223 = vmatprep.subr.mxu0 0.0
    %1224 = vmatpush1.msra.mxu0 0.0
    %1225 = vmatprep.subr.mxu0 0.0
    %1226 = vmatpush1.msra.mxu0 0.0
    %1227 = vmatprep.subr.mxu0 0.0
    %1228 = vmatpush1.msra.mxu0 0.0
    %1229 = vmatprep.subr.mxu0 0.0
    %1230 = vmatpush1.msra.mxu0 0.0
    %1231 = vmatprep.subr.mxu0 0.0
    %1232 = vmatpush1.msra.mxu0 0.0
    %1233 = vmatprep.subr.mxu0 0.0
    %1234 = vmatpush1.msra.mxu0 0.0
    %1235 = vmatprep.subr.mxu0 0.0
    %1236 = vmatpush1.msra.mxu0 0.0
    %1237 = vmatprep.subr.mxu0 0.0
    %1238 = vmatpush1.msra.mxu0 0.0
    %1239 = vmatprep.subr.mxu0 0.0
    %1240 = vmatpush1.msra.mxu0 0.0
    %1241 = vmatprep.mubr.f32.mxu0 0.0
    %1242 = vmatmul.mubr.f32.gmra.mrb[0].mxu0 %v1125
    %v1243 = vpop.f32.mrb[0].mxu0
    %v1244 = vadd.f32 %v1170, %v1243
    %v1245 = vpop.f32.mrb[0].mxu0
    %v1246 = vadd.f32 %v1174, %v1245
    %1247 = vmatprep.mubr.f32.mxu0 0.0
    %1248 = vmatmul.mubr.f32.gmra.mrb[0].mxu0 %v1126
    %v1249 = vpop.f32.mrb[0].mxu0
    %v1250 = vadd.f32 %v1170, %v1249
    %v1251 = vpop.f32.mrb[0].mxu0
    %v1252 = vadd.f32 %v1174, %v1251
    %1253 = vmatprep.mubr.f32.mxu0 0.0
    %1254 = vmatmul.mubr.f32.gmra.mrb[0].mxu0 %v1127
    %v1255 = vpop.f32.mrb[0].mxu0
    %v1256 = vadd.f32 %v1170, %v1255
    %v1257 = vpop.f32.mrb[0].mxu0
    %v1258 = vadd.f32 %v1174, %v1257
    %1259 = vmatprep.mubr.f32.mxu0 0.0
    %1260 = vmatmul.mubr.f32.gmra.mrb[0].mxu0 %v1128
    %v1261 = vpop.f32.mrb[0].mxu0
    %v1262 = vadd.f32 %v1170, %v1261
    %v1263 = vpop.f32.mrb[0].mxu0
    %v1264 = vadd.f32 %v1174, %v1263
    %1265 = vmatprep.mubr.f32.mxu0 0.0
    %1266 = vmatmul.mubr.f32.gmra.mrb[0].mxu0 %v1129
    %v1267 = vpop.f32.mrb[0].mxu0
    %v1268 = vadd.f32 %v1170, %v1267
    %v1269 = vpop.f32.mrb[0].mxu0
    %v1270 = vadd.f32 %v1174, %v1269
    %1271 = vmatprep.mubr.f32.mxu0 0.0
    %1272 = vmatmul.mubr.f32.gmra.mrb[0].mxu0 %v1130
    %v1273 = vpop.f32.mrb[0].mxu0
    %v1274 = vadd.f32 %v1170, %v1273
    %v1275 = vpop.f32.mrb[0].mxu0
    %v1276 = vadd.f32 %v1174, %v1275
    %1277 = vmatprep.mubr.f32.mxu0 0.0
    %1278 = vmatmul.mubr.f32.gmra.mrb[0].mxu0 %v1131
    %v1279 = vpop.f32.mrb[0].mxu0
    %v1280 = vadd.f32 %v1170, %v1279
    %v1281 = vpop.f32.mrb[0].mxu0
    %v1282 = vadd.f32 %v1174, %v1281
    %1283 = vmatprep.mubr.f32.mxu0 0.0
    %1284 = vmatmul.mubr.f32.gmra.mrb[0].mxu0 %v1132
    %v1285 = vpop.f32.mrb[0].mxu0
    %v1286 = vadd.f32 %v1170, %v1285
    %v1287 = vpop.f32.mrb[0].mxu0
    %v1288 = vadd.f32 %v1174, %v1287
    %1289 = vdwg.mxu0
    %v1290 = vld [vmem:[#allocation5] sm:$0xff]
    %v1291 = vld [vmem:[#allocation5 + $0x8] sm:$0xff]
    %v1292 = vld [vmem:[#allocation5 + $0x10] sm:$0xff]
    %v1293 = vld [vmem:[#allocation5 + $0x18] sm:$0xff]
    %v1294 = vld [vmem:[#allocation5 + $0x20] sm:$0xff]
    %v1295 = vld [vmem:[#allocation5 + $0x28] sm:$0xff]
    %v1296 = vld [vmem:[#allocation5 + $0x30] sm:$0xff]
    %v1297 = vld [vmem:[#allocation5 + $0x38] sm:$0xff]
    %v1298 = vld [vmem:[#allocation5 + $0x40] sm:$0xff]
    %v1299 = vld [vmem:[#allocation5 + $0x48] sm:$0xff]
    %v1300 = vld [vmem:[#allocation5 + $0x50] sm:$0xff]
    %v1301 = vld [vmem:[#allocation5 + $0x58] sm:$0xff]
    %v1302 = vld [vmem:[#allocation5 + $0x60] sm:$0xff]
    %v1303 = vld [vmem:[#allocation5 + $0x68] sm:$0xff]
    %v1304 = vld [vmem:[#allocation5 + $0x70] sm:$0xff]
    %v1305 = vld [vmem:[#allocation5 + $0x78] sm:$0xff]
    %v1306 = vmul.f32 %v1244, 0.5
    %v1307 = vmul.f32 %v1246, 0.5
    %v1308 = vtanh.pop %v1306
    %v1309 = vtanh.pop %v1307
    %v1310 = vmul.f32 %v1308, 0.5
    %v1311 = vmul.f32 %v1309, 0.5
    %v1312 = vadd.f32 %v1310, 0.5
    %v1313 = vadd.f32 %v1311, 0.5
    %v1314 = vtanh.pop %v1246
    %v1315 = vmul.f32 %v1312, 0.0
    %1317 = vrot.lane.b32.xlu0 %v1314, 64
    %v1318 = vpop.permute.xlu0 %1317
    %v1320 = vmul.f32 %v1312, %v1318
    %1322 = vrot.lane.b32.xlu0 %v1320, 64
    %v1323 = vpop.permute.xlu0 %1322
    %v1325 = vadd.f32 %v1315, %v1323
    %v1326 = vtanh.pop %v1325
    %1328 = vrot.lane.b32.xlu0 %v1326, 64
    %v1329 = vpop.permute.xlu0 %1328
    %v1331 = vmul.f32 %v1313, %v1329
    %v1333 = vsel %vm369, %v1331, 0
    %1335 = vmatprep.subr.mxu0 %v1291
    %1336 = vmatpush1.msra.mxu0 %v1290
    %1337 = vmatprep.subr.mxu0 %v1293
    %1338 = vmatpush1.msra.mxu0 %v1292
    %1339 = vmatprep.subr.mxu0 %v1295
    %1340 = vmatpush1.msra.mxu0 %v1294
    %1341 = vmatprep.subr.mxu0 %v1297
    %1342 = vmatpush1.msra.mxu0 %v1296
    %1343 = vmatprep.subr.mxu0 %v1299
    %1344 = vmatpush1.msra.mxu0 %v1298
    %1345 = vmatprep.subr.mxu0 %v1301
    %1346 = vmatpush1.msra.mxu0 %v1300
    %1347 = vmatprep.subr.mxu0 %v1303
    %1348 = vmatpush1.msra.mxu0 %v1302
    %1349 = vmatprep.subr.mxu0 %v1305
    %1350 = vmatpush1.msra.mxu0 %v1304
    %1351 = vmatprep.subr.mxu0 0.0
    %1352 = vmatpush1.msra.mxu0 0.0
    %1353 = vmatprep.subr.mxu0 0.0
    %1354 = vmatpush1.msra.mxu0 0.0
    %1355 = vmatprep.subr.mxu0 0.0
    %1356 = vmatpush1.msra.mxu0 0.0
    %1357 = vmatprep.subr.mxu0 0.0
    %1358 = vmatpush1.msra.mxu0 0.0
    %1359 = vmatprep.subr.mxu0 0.0
    %1360 = vmatpush1.msra.mxu0 0.0
    %1361 = vmatprep.subr.mxu0 0.0
    %1362 = vmatpush1.msra.mxu0 0.0
    %1363 = vmatprep.subr.mxu0 0.0
    %1364 = vmatpush1.msra.mxu0 0.0
    %1365 = vmatprep.subr.mxu0 0.0
    %1366 = vmatpush1.msra.mxu0 0.0
    %1367 = vmatprep.subr.mxu0 0.0
    %1368 = vmatpush1.msra.mxu0 0.0
    %1369 = vmatprep.subr.mxu0 0.0
    %1370 = vmatpush1.msra.mxu0 0.0
    %1371 = vmatprep.subr.mxu0 0.0
    %1372 = vmatpush1.msra.mxu0 0.0
    %1373 = vmatprep.subr.mxu0 0.0
    %1374 = vmatpush1.msra.mxu0 0.0
    %1375 = vmatprep.subr.mxu0 0.0
    %1376 = vmatpush1.msra.mxu0 0.0
    %1377 = vmatprep.subr.mxu0 0.0
    %1378 = vmatpush1.msra.mxu0 0.0
    %1379 = vmatprep.subr.mxu0 0.0
    %1380 = vmatpush1.msra.mxu0 0.0
    %1381 = vmatprep.subr.mxu0 0.0
    %1382 = vmatpush1.msra.mxu0 0.0
    %1383 = vmatprep.subr.mxu0 0.0
    %1384 = vmatpush1.msra.mxu0 0.0
    %1385 = vmatprep.subr.mxu0 0.0
    %1386 = vmatpush1.msra.mxu0 0.0
    %1387 = vmatprep.subr.mxu0 0.0
    %1388 = vmatpush1.msra.mxu0 0.0
    %1389 = vmatprep.subr.mxu0 0.0
    %1390 = vmatpush1.msra.mxu0 0.0
    %1391 = vmatprep.subr.mxu0 0.0
    %1392 = vmatpush1.msra.mxu0 0.0
    %1393 = vmatprep.subr.mxu0 0.0
    %1394 = vmatpush1.msra.mxu0 0.0
    %1395 = vmatprep.subr.mxu0 0.0
    %1396 = vmatpush1.msra.mxu0 0.0
    %1397 = vmatprep.subr.mxu0 0.0
    %1398 = vmatpush1.msra.mxu0 0.0
    %1399 = vmatprep.mubr.f32.mxu0 0.0
    %1400 = vmatmul.mubr.f32.gmra.mrb[0].mxu0 %v1333
    %v1401 = vpop.f32.mrb[0].mxu0
    %v1402 = vadd.f32 0.0, %v1401
    %v1403 = vpop.f32.mrb[0].mxu0
    %v1404 = vadd.f32 0.0, %v1403
    %1405 = vdwg.mxu0
    %v1406 = vadd.f32 %v1250, %v1402
    %v1407 = vadd.f32 %v1252, %v1404
    %v1408 = vmul.f32 %v1406, 0.5
    %v1409 = vmul.f32 %v1407, 0.5
    %v1410 = vtanh.pop %v1408
    %v1411 = vtanh.pop %v1409
    %v1412 = vmul.f32 %v1410, 0.5
    %v1413 = vmul.f32 %v1411, 0.5
    %v1414 = vadd.f32 %v1412, 0.5
    %v1415 = vadd.f32 %v1413, 0.5
    %v1416 = vtanh.pop %v1407
    %v1417 = vmul.f32 %v1414, %v1325
    %1419 = vrot.lane.b32.xlu0 %v1416, 64
    %v1420 = vpop.permute.xlu0 %1419
    %v1422 = vmul.f32 %v1414, %v1420
    %1424 = vrot.lane.b32.xlu0 %v1422, 64
    %v1425 = vpop.permute.xlu0 %1424
    %v1427 = vadd.f32 %v1417, %v1425
    %v1428 = vtanh.pop %v1427
    %1430 = vrot.lane.b32.xlu0 %v1428, 64
    %v1431 = vpop.permute.xlu0 %1430
    %v1433 = vmul.f32 %v1415, %v1431
    %v1435 = vsel %vm369, %v1433, 0
    %1437 = vmatprep.subr.mxu0 %v1291
    %1438 = vmatpush1.msra.mxu0 %v1290
    %1439 = vmatprep.subr.mxu0 %v1293
    %1440 = vmatpush1.msra.mxu0 %v1292
    %1441 = vmatprep.subr.mxu0 %v1295
    %1442 = vmatpush1.msra.mxu0 %v1294
    %1443 = vmatprep.subr.mxu0 %v1297
    %1444 = vmatpush1.msra.mxu0 %v1296
    %1445 = vmatprep.subr.mxu0 %v1299
    %1446 = vmatpush1.msra.mxu0 %v1298
    %1447 = vmatprep.subr.mxu0 %v1301
    %1448 = vmatpush1.msra.mxu0 %v1300
    %1449 = vmatprep.subr.mxu0 %v1303
    %1450 = vmatpush1.msra.mxu0 %v1302
    %1451 = vmatprep.subr.mxu0 %v1305
    %1452 = vmatpush1.msra.mxu0 %v1304
    %1453 = vmatprep.subr.mxu0 0.0
    %1454 = vmatpush1.msra.mxu0 0.0
    %1455 = vmatprep.subr.mxu0 0.0
    %1456 = vmatpush1.msra.mxu0 0.0
    %1457 = vmatprep.subr.mxu0 0.0
    %1458 = vmatpush1.msra.mxu0 0.0
    %1459 = vmatprep.subr.mxu0 0.0
    %1460 = vmatpush1.msra.mxu0 0.0
    %1461 = vmatprep.subr.mxu0 0.0
    %1462 = vmatpush1.msra.mxu0 0.0
    %1463 = vmatprep.subr.mxu0 0.0
    %1464 = vmatpush1.msra.mxu0 0.0
    %1465 = vmatprep.subr.mxu0 0.0
    %1466 = vmatpush1.msra.mxu0 0.0
    %1467 = vmatprep.subr.mxu0 0.0
    %1468 = vmatpush1.msra.mxu0 0.0
    %1469 = vmatprep.subr.mxu0 0.0
    %1470 = vmatpush1.msra.mxu0 0.0
    %1471 = vmatprep.subr.mxu0 0.0
    %1472 = vmatpush1.msra.mxu0 0.0
    %1473 = vmatprep.subr.mxu0 0.0
    %1474 = vmatpush1.msra.mxu0 0.0
    %1475 = vmatprep.subr.mxu0 0.0
    %1476 = vmatpush1.msra.mxu0 0.0
    %1477 = vmatprep.subr.mxu0 0.0
    %1478 = vmatpush1.msra.mxu0 0.0
    %1479 = vmatprep.subr.mxu0 0.0
    %1480 = vmatpush1.msra.mxu0 0.0
    %1481 = vmatprep.subr.mxu0 0.0
    %1482 = vmatpush1.msra.mxu0 0.0
    %1483 = vmatprep.subr.mxu0 0.0
    %1484 = vmatpush1.msra.mxu0 0.0
    %1485 = vmatprep.subr.mxu0 0.0
    %1486 = vmatpush1.msra.mxu0 0.0
    %1487 = vmatprep.subr.mxu0 0.0
    %1488 = vmatpush1.msra.mxu0 0.0
    %1489 = vmatprep.subr.mxu0 0.0
    %1490 = vmatpush1.msra.mxu0 0.0
    %1491 = vmatprep.subr.mxu0 0.0
    %1492 = vmatpush1.msra.mxu0 0.0
    %1493 = vmatprep.subr.mxu0 0.0
    %1494 = vmatpush1.msra.mxu0 0.0
    %1495 = vmatprep.subr.mxu0 0.0
    %1496 = vmatpush1.msra.mxu0 0.0
    %1497 = vmatprep.subr.mxu0 0.0
    %1498 = vmatpush1.msra.mxu0 0.0
    %1499 = vmatprep.subr.mxu0 0.0
    %1500 = vmatpush1.msra.mxu0 0.0
    %1501 = vmatprep.mubr.f32.mxu0 0.0
    %1502 = vmatmul.mubr.f32.gmra.mrb[0].mxu0 %v1435
    %v1503 = vpop.f32.mrb[0].mxu0
    %v1504 = vadd.f32 0.0, %v1503
    %v1505 = vpop.f32.mrb[0].mxu0
    %v1506 = vadd.f32 0.0, %v1505
    %1507 = vdwg.mxu0
    %v1508 = vadd.f32 %v1256, %v1504
    %v1509 = vadd.f32 %v1258, %v1506
    %v1510 = vmul.f32 %v1508, 0.5
    %v1511 = vmul.f32 %v1509, 0.5
    %v1512 = vtanh.pop %v1510
    %v1513 = vtanh.pop %v1511
    %v1514 = vmul.f32 %v1512, 0.5
    %v1515 = vmul.f32 %v1513, 0.5
    %v1516 = vadd.f32 %v1514, 0.5
    %v1517 = vadd.f32 %v1515, 0.5
    %v1518 = vtanh.pop %v1509
    %v1519 = vmul.f32 %v1516, %v1427
    %1521 = vrot.lane.b32.xlu0 %v1518, 64
    %v1522 = vpop.permute.xlu0 %1521
    %v1524 = vmul.f32 %v1516, %v1522
    %1526 = vrot.lane.b32.xlu0 %v1524, 64
    %v1527 = vpop.permute.xlu0 %1526
    %v1529 = vadd.f32 %v1519, %v1527
    %v1530 = vtanh.pop %v1529
    %1532 = vrot.lane.b32.xlu0 %v1530, 64
    %v1533 = vpop.permute.xlu0 %1532
    %v1535 = vmul.f32 %v1517, %v1533
    %v1537 = vsel %vm369, %v1535, 0
    %1539 = vmatprep.subr.mxu0 %v1291
    %1540 = vmatpush1.msra.mxu0 %v1290
    %1541 = vmatprep.subr.mxu0 %v1293
    %1542 = vmatpush1.msra.mxu0 %v1292
    %1543 = vmatprep.subr.mxu0 %v1295
    %1544 = vmatpush1.msra.mxu0 %v1294
    %1545 = vmatprep.subr.mxu0 %v1297
    %1546 = vmatpush1.msra.mxu0 %v1296
    %1547 = vmatprep.subr.mxu0 %v1299
    %1548 = vmatpush1.msra.mxu0 %v1298
    %1549 = vmatprep.subr.mxu0 %v1301
    %1550 = vmatpush1.msra.mxu0 %v1300
    %1551 = vmatprep.subr.mxu0 %v1303
    %1552 = vmatpush1.msra.mxu0 %v1302
    %1553 = vmatprep.subr.mxu0 %v1305
    %1554 = vmatpush1.msra.mxu0 %v1304
    %1555 = vmatprep.subr.mxu0 0.0
    %1556 = vmatpush1.msra.mxu0 0.0
    %1557 = vmatprep.subr.mxu0 0.0
    %1558 = vmatpush1.msra.mxu0 0.0
    %1559 = vmatprep.subr.mxu0 0.0
    %1560 = vmatpush1.msra.mxu0 0.0
    %1561 = vmatprep.subr.mxu0 0.0
    %1562 = vmatpush1.msra.mxu0 0.0
    %1563 = vmatprep.subr.mxu0 0.0
    %1564 = vmatpush1.msra.mxu0 0.0
    %1565 = vmatprep.subr.mxu0 0.0
    %1566 = vmatpush1.msra.mxu0 0.0
    %1567 = vmatprep.subr.mxu0 0.0
    %1568 = vmatpush1.msra.mxu0 0.0
    %1569 = vmatprep.subr.mxu0 0.0
    %1570 = vmatpush1.msra.mxu0 0.0
    %1571 = vmatprep.subr.mxu0 0.0
    %1572 = vmatpush1.msra.mxu0 0.0
    %1573 = vmatprep.subr.mxu0 0.0
    %1574 = vmatpush1.msra.mxu0 0.0
    %1575 = vmatprep.subr.mxu0 0.0
    %1576 = vmatpush1.msra.mxu0 0.0
    %1577 = vmatprep.subr.mxu0 0.0
    %1578 = vmatpush1.msra.mxu0 0.0
    %1579 = vmatprep.subr.mxu0 0.0
    %1580 = vmatpush1.msra.mxu0 0.0
    %1581 = vmatprep.subr.mxu0 0.0
    %1582 = vmatpush1.msra.mxu0 0.0
    %1583 = vmatprep.subr.mxu0 0.0
    %1584 = vmatpush1.msra.mxu0 0.0
    %1585 = vmatprep.subr.mxu0 0.0
    %1586 = vmatpush1.msra.mxu0 0.0
    %1587 = vmatprep.subr.mxu0 0.0
    %1588 = vmatpush1.msra.mxu0 0.0
    %1589 = vmatprep.subr.mxu0 0.0
    %1590 = vmatpush1.msra.mxu0 0.0
    %1591 = vmatprep.subr.mxu0 0.0
    %1592 = vmatpush1.msra.mxu0 0.0
    %1593 = vmatprep.subr.mxu0 0.0
    %1594 = vmatpush1.msra.mxu0 0.0
    %1595 = vmatprep.subr.mxu0 0.0
    %1596 = vmatpush1.msra.mxu0 0.0
    %1597 = vmatprep.subr.mxu0 0.0
    %1598 = vmatpush1.msra.mxu0 0.0
    %1599 = vmatprep.subr.mxu0 0.0
    %1600 = vmatpush1.msra.mxu0 0.0
    %1601 = vmatprep.subr.mxu0 0.0
    %1602 = vmatpush1.msra.mxu0 0.0
    %1603 = vmatprep.mubr.f32.mxu0 0.0
    %1604 = vmatmul.mubr.f32.gmra.mrb[0].mxu0 %v1537
    %v1605 = vpop.f32.mrb[0].mxu0
    %v1606 = vadd.f32 0.0, %v1605
    %v1607 = vpop.f32.mrb[0].mxu0
    %v1608 = vadd.f32 0.0, %v1607
    %1609 = vdwg.mxu0
    %v1610 = vadd.f32 %v1262, %v1606
    %v1611 = vadd.f32 %v1264, %v1608
    %v1612 = vmul.f32 %v1610, 0.5
    %v1613 = vmul.f32 %v1611, 0.5
    %v1614 = vtanh.pop %v1612
    %v1615 = vtanh.pop %v1613
    %v1616 = vmul.f32 %v1614, 0.5
    %v1617 = vmul.f32 %v1615, 0.5
    %v1618 = vadd.f32 %v1616, 0.5
    %v1619 = vadd.f32 %v1617, 0.5
    %v1620 = vtanh.pop %v1611
    %v1621 = vmul.f32 %v1618, %v1529
    %1623 = vrot.lane.b32.xlu0 %v1620, 64
    %v1624 = vpop.permute.xlu0 %1623
    %v1626 = vmul.f32 %v1618, %v1624
    %1628 = vrot.lane.b32.xlu0 %v1626, 64
    %v1629 = vpop.permute.xlu0 %1628
    %v1631 = vadd.f32 %v1621, %v1629
    %v1632 = vtanh.pop %v1631
    %1634 = vrot.lane.b32.xlu0 %v1632, 64
    %v1635 = vpop.permute.xlu0 %1634
    %v1637 = vmul.f32 %v1619, %v1635
    %v1639 = vsel %vm369, %v1637, 0
    %1641 = vmatprep.subr.mxu0 %v1291
    %1642 = vmatpush1.msra.mxu0 %v1290
    %1643 = vmatprep.subr.mxu0 %v1293
    %1644 = vmatpush1.msra.mxu0 %v1292
    %1645 = vmatprep.subr.mxu0 %v1295
    %1646 = vmatpush1.msra.mxu0 %v1294
    %1647 = vmatprep.subr.mxu0 %v1297
    %1648 = vmatpush1.msra.mxu0 %v1296
    %1649 = vmatprep.subr.mxu0 %v1299
    %1650 = vmatpush1.msra.mxu0 %v1298
    %1651 = vmatprep.subr.mxu0 %v1301
    %1652 = vmatpush1.msra.mxu0 %v1300
    %1653 = vmatprep.subr.mxu0 %v1303
    %1654 = vmatpush1.msra.mxu0 %v1302
    %1655 = vmatprep.subr.mxu0 %v1305
    %1656 = vmatpush1.msra.mxu0 %v1304
    %1657 = vmatprep.subr.mxu0 0.0
    %1658 = vmatpush1.msra.mxu0 0.0
    %1659 = vmatprep.subr.mxu0 0.0
    %1660 = vmatpush1.msra.mxu0 0.0
    %1661 = vmatprep.subr.mxu0 0.0
    %1662 = vmatpush1.msra.mxu0 0.0
    %1663 = vmatprep.subr.mxu0 0.0
    %1664 = vmatpush1.msra.mxu0 0.0
    %1665 = vmatprep.subr.mxu0 0.0
    %1666 = vmatpush1.msra.mxu0 0.0
    %1667 = vmatprep.subr.mxu0 0.0
    %1668 = vmatpush1.msra.mxu0 0.0
    %1669 = vmatprep.subr.mxu0 0.0
    %1670 = vmatpush1.msra.mxu0 0.0
    %1671 = vmatprep.subr.mxu0 0.0
    %1672 = vmatpush1.msra.mxu0 0.0
    %1673 = vmatprep.subr.mxu0 0.0
    %1674 = vmatpush1.msra.mxu0 0.0
    %1675 = vmatprep.subr.mxu0 0.0
    %1676 = vmatpush1.msra.mxu0 0.0
    %1677 = vmatprep.subr.mxu0 0.0
    %1678 = vmatpush1.msra.mxu0 0.0
    %1679 = vmatprep.subr.mxu0 0.0
    %1680 = vmatpush1.msra.mxu0 0.0
    %1681 = vmatprep.subr.mxu0 0.0
    %1682 = vmatpush1.msra.mxu0 0.0
    %1683 = vmatprep.subr.mxu0 0.0
    %1684 = vmatpush1.msra.mxu0 0.0
    %1685 = vmatprep.subr.mxu0 0.0
    %1686 = vmatpush1.msra.mxu0 0.0
    %1687 = vmatprep.subr.mxu0 0.0
    %1688 = vmatpush1.msra.mxu0 0.0
    %1689 = vmatprep.subr.mxu0 0.0
    %1690 = vmatpush1.msra.mxu0 0.0
    %1691 = vmatprep.subr.mxu0 0.0
    %1692 = vmatpush1.msra.mxu0 0.0
    %1693 = vmatprep.subr.mxu0 0.0
    %1694 = vmatpush1.msra.mxu0 0.0
    %1695 = vmatprep.subr.mxu0 0.0
    %1696 = vmatpush1.msra.mxu0 0.0
    %1697 = vmatprep.subr.mxu0 0.0
    %1698 = vmatpush1.msra.mxu0 0.0
    %1699 = vmatprep.subr.mxu0 0.0
    %1700 = vmatpush1.msra.mxu0 0.0
    %1701 = vmatprep.subr.mxu0 0.0
    %1702 = vmatpush1.msra.mxu0 0.0
    %1703 = vmatprep.subr.mxu0 0.0
    %1704 = vmatpush1.msra.mxu0 0.0
    %1705 = vmatprep.mubr.f32.mxu0 0.0
    %1706 = vmatmul.mubr.f32.gmra.mrb[0].mxu0 %v1639
    %v1707 = vpop.f32.mrb[0].mxu0
    %v1708 = vadd.f32 0.0, %v1707
    %v1709 = vpop.f32.mrb[0].mxu0
    %v1710 = vadd.f32 0.0, %v1709
    %1711 = vdwg.mxu0
    %v1712 = vadd.f32 %v1268, %v1708
    %v1713 = vadd.f32 %v1270, %v1710
    %v1714 = vmul.f32 %v1712, 0.5
    %v1715 = vmul.f32 %v1713, 0.5
    %v1716 = vtanh.pop %v1714
    %v1717 = vtanh.pop %v1715
    %v1718 = vmul.f32 %v1716, 0.5
    %v1719 = vmul.f32 %v1717, 0.5
    %v1720 = vadd.f32 %v1718, 0.5
    %v1721 = vadd.f32 %v1719, 0.5
    %v1722 = vtanh.pop %v1713
    %v1723 = vmul.f32 %v1720, %v1631
    %1725 = vrot.lane.b32.xlu0 %v1722, 64
    %v1726 = vpop.permute.xlu0 %1725
    %v1728 = vmul.f32 %v1720, %v1726
    %1730 = vrot.lane.b32.xlu0 %v1728, 64
    %v1731 = vpop.permute.xlu0 %1730
    %v1733 = vadd.f32 %v1723, %v1731
    %v1734 = vtanh.pop %v1733
    %1736 = vrot.lane.b32.xlu0 %v1734, 64
    %v1737 = vpop.permute.xlu0 %1736
    %v1739 = vmul.f32 %v1721, %v1737
    %v1741 = vsel %vm369, %v1739, 0
    %1743 = vmatprep.subr.mxu0 %v1291
    %1744 = vmatpush1.msra.mxu0 %v1290
    %1745 = vmatprep.subr.mxu0 %v1293
    %1746 = vmatpush1.msra.mxu0 %v1292
    %1747 = vmatprep.subr.mxu0 %v1295
    %1748 = vmatpush1.msra.mxu0 %v1294
    %1749 = vmatprep.subr.mxu0 %v1297
    %1750 = vmatpush1.msra.mxu0 %v1296
    %1751 = vmatprep.subr.mxu0 %v1299
    %1752 = vmatpush1.msra.mxu0 %v1298
    %1753 = vmatprep.subr.mxu0 %v1301
    %1754 = vmatpush1.msra.mxu0 %v1300
    %1755 = vmatprep.subr.mxu0 %v1303
    %1756 = vmatpush1.msra.mxu0 %v1302
    %1757 = vmatprep.subr.mxu0 %v1305
    %1758 = vmatpush1.msra.mxu0 %v1304
    %1759 = vmatprep.subr.mxu0 0.0
    %1760 = vmatpush1.msra.mxu0 0.0
    %1761 = vmatprep.subr.mxu0 0.0
    %1762 = vmatpush1.msra.mxu0 0.0
    %1763 = vmatprep.subr.mxu0 0.0
    %1764 = vmatpush1.msra.mxu0 0.0
    %1765 = vmatprep.subr.mxu0 0.0
    %1766 = vmatpush1.msra.mxu0 0.0
    %1767 = vmatprep.subr.mxu0 0.0
    %1768 = vmatpush1.msra.mxu0 0.0
    %1769 = vmatprep.subr.mxu0 0.0
    %1770 = vmatpush1.msra.mxu0 0.0
    %1771 = vmatprep.subr.mxu0 0.0
    %1772 = vmatpush1.msra.mxu0 0.0
    %1773 = vmatprep.subr.mxu0 0.0
    %1774 = vmatpush1.msra.mxu0 0.0
    %1775 = vmatprep.subr.mxu0 0.0
    %1776 = vmatpush1.msra.mxu0 0.0
    %1777 = vmatprep.subr.mxu0 0.0
    %1778 = vmatpush1.msra.mxu0 0.0
    %1779 = vmatprep.subr.mxu0 0.0
    %1780 = vmatpush1.msra.mxu0 0.0
    %1781 = vmatprep.subr.mxu0 0.0
    %1782 = vmatpush1.msra.mxu0 0.0
    %1783 = vmatprep.subr.mxu0 0.0
    %1784 = vmatpush1.msra.mxu0 0.0
    %1785 = vmatprep.subr.mxu0 0.0
    %1786 = vmatpush1.msra.mxu0 0.0
    %1787 = vmatprep.subr.mxu0 0.0
    %1788 = vmatpush1.msra.mxu0 0.0
    %1789 = vmatprep.subr.mxu0 0.0
    %1790 = vmatpush1.msra.mxu0 0.0
    %1791 = vmatprep.subr.mxu0 0.0
    %1792 = vmatpush1.msra.mxu0 0.0
    %1793 = vmatprep.subr.mxu0 0.0
    %1794 = vmatpush1.msra.mxu0 0.0
    %1795 = vmatprep.subr.mxu0 0.0
    %1796 = vmatpush1.msra.mxu0 0.0
    %1797 = vmatprep.subr.mxu0 0.0
    %1798 = vmatpush1.msra.mxu0 0.0
    %1799 = vmatprep.subr.mxu0 0.0
    %1800 = vmatpush1.msra.mxu0 0.0
    %1801 = vmatprep.subr.mxu0 0.0
    %1802 = vmatpush1.msra.mxu0 0.0
    %1803 = vmatprep.subr.mxu0 0.0
    %1804 = vmatpush1.msra.mxu0 0.0
    %1805 = vmatprep.subr.mxu0 0.0
    %1806 = vmatpush1.msra.mxu0 0.0
    %1807 = vmatprep.mubr.f32.mxu0 0.0
    %1808 = vmatmul.mubr.f32.gmra.mrb[0].mxu0 %v1741
    %v1809 = vpop.f32.mrb[0].mxu0
    %v1810 = vadd.f32 0.0, %v1809
    %v1811 = vpop.f32.mrb[0].mxu0
    %v1812 = vadd.f32 0.0, %v1811
    %1813 = vdwg.mxu0
    %v1814 = vadd.f32 %v1274, %v1810
    %v1815 = vadd.f32 %v1276, %v1812
    %v1816 = vmul.f32 %v1814, 0.5
    %v1817 = vmul.f32 %v1815, 0.5
    %v1818 = vtanh.pop %v1816
    %v1819 = vtanh.pop %v1817
    %v1820 = vmul.f32 %v1818, 0.5
    %v1821 = vmul.f32 %v1819, 0.5
    %v1822 = vadd.f32 %v1820, 0.5
    %v1823 = vadd.f32 %v1821, 0.5
    %v1824 = vtanh.pop %v1815
    %v1825 = vmul.f32 %v1822, %v1733
    %1827 = vrot.lane.b32.xlu0 %v1824, 64
    %v1828 = vpop.permute.xlu0 %1827
    %v1830 = vmul.f32 %v1822, %v1828
    %1832 = vrot.lane.b32.xlu0 %v1830, 64
    %v1833 = vpop.permute.xlu0 %1832
    %v1835 = vadd.f32 %v1825, %v1833
    %v1836 = vtanh.pop %v1835
    %1838 = vrot.lane.b32.xlu0 %v1836, 64
    %v1839 = vpop.permute.xlu0 %1838
    %v1841 = vmul.f32 %v1823, %v1839
    %v1843 = vsel %vm369, %v1841, 0
    %1845 = vmatprep.subr.mxu0 %v1291
    %1846 = vmatpush1.msra.mxu0 %v1290
    %1847 = vmatprep.subr.mxu0 %v1293
    %1848 = vmatpush1.msra.mxu0 %v1292
    %1849 = vmatprep.subr.mxu0 %v1295
    %1850 = vmatpush1.msra.mxu0 %v1294
    %1851 = vmatprep.subr.mxu0 %v1297
    %1852 = vmatpush1.msra.mxu0 %v1296
    %1853 = vmatprep.subr.mxu0 %v1299
    %1854 = vmatpush1.msra.mxu0 %v1298
    %1855 = vmatprep.subr.mxu0 %v1301
    %1856 = vmatpush1.msra.mxu0 %v1300
    %1857 = vmatprep.subr.mxu0 %v1303
    %1858 = vmatpush1.msra.mxu0 %v1302
    %1859 = vmatprep.subr.mxu0 %v1305
    %1860 = vmatpush1.msra.mxu0 %v1304
    %1861 = vmatprep.subr.mxu0 0.0
    %1862 = vmatpush1.msra.mxu0 0.0
    %1863 = vmatprep.subr.mxu0 0.0
    %1864 = vmatpush1.msra.mxu0 0.0
    %1865 = vmatprep.subr.mxu0 0.0
    %1866 = vmatpush1.msra.mxu0 0.0
    %1867 = vmatprep.subr.mxu0 0.0
    %1868 = vmatpush1.msra.mxu0 0.0
    %1869 = vmatprep.subr.mxu0 0.0
    %1870 = vmatpush1.msra.mxu0 0.0
    %1871 = vmatprep.subr.mxu0 0.0
    %1872 = vmatpush1.msra.mxu0 0.0
    %1873 = vmatprep.subr.mxu0 0.0
    %1874 = vmatpush1.msra.mxu0 0.0
    %1875 = vmatprep.subr.mxu0 0.0
    %1876 = vmatpush1.msra.mxu0 0.0
    %1877 = vmatprep.subr.mxu0 0.0
    %1878 = vmatpush1.msra.mxu0 0.0
    %1879 = vmatprep.subr.mxu0 0.0
    %1880 = vmatpush1.msra.mxu0 0.0
    %1881 = vmatprep.subr.mxu0 0.0
    %1882 = vmatpush1.msra.mxu0 0.0
    %1883 = vmatprep.subr.mxu0 0.0
    %1884 = vmatpush1.msra.mxu0 0.0
    %1885 = vmatprep.subr.mxu0 0.0
    %1886 = vmatpush1.msra.mxu0 0.0
    %1887 = vmatprep.subr.mxu0 0.0
    %1888 = vmatpush1.msra.mxu0 0.0
    %1889 = vmatprep.subr.mxu0 0.0
    %1890 = vmatpush1.msra.mxu0 0.0
    %1891 = vmatprep.subr.mxu0 0.0
    %1892 = vmatpush1.msra.mxu0 0.0
    %1893 = vmatprep.subr.mxu0 0.0
    %1894 = vmatpush1.msra.mxu0 0.0
    %1895 = vmatprep.subr.mxu0 0.0
    %1896 = vmatpush1.msra.mxu0 0.0
    %1897 = vmatprep.subr.mxu0 0.0
    %1898 = vmatpush1.msra.mxu0 0.0
    %1899 = vmatprep.subr.mxu0 0.0
    %1900 = vmatpush1.msra.mxu0 0.0
    %1901 = vmatprep.subr.mxu0 0.0
    %1902 = vmatpush1.msra.mxu0 0.0
    %1903 = vmatprep.subr.mxu0 0.0
    %1904 = vmatpush1.msra.mxu0 0.0
    %1905 = vmatprep.subr.mxu0 0.0
    %1906 = vmatpush1.msra.mxu0 0.0
    %1907 = vmatprep.subr.mxu0 0.0
    %1908 = vmatpush1.msra.mxu0 0.0
    %1909 = vmatprep.mubr.f32.mxu0 0.0
    %1910 = vmatmul.mubr.f32.gmra.mrb[0].mxu0 %v1843
    %v1911 = vpop.f32.mrb[0].mxu0
    %v1912 = vadd.f32 0.0, %v1911
    %v1913 = vpop.f32.mrb[0].mxu0
    %v1914 = vadd.f32 0.0, %v1913
    %1915 = vdwg.mxu0
    %v1916 = vadd.f32 %v1280, %v1912
    %v1917 = vadd.f32 %v1282, %v1914
    %v1918 = vmul.f32 %v1916, 0.5
    %v1919 = vmul.f32 %v1917, 0.5
    %v1920 = vtanh.pop %v1918
    %v1921 = vtanh.pop %v1919
    %v1922 = vmul.f32 %v1920, 0.5
    %v1923 = vmul.f32 %v1921, 0.5
    %v1924 = vadd.f32 %v1922, 0.5
    %v1925 = vadd.f32 %v1923, 0.5
    %v1926 = vtanh.pop %v1917
    %v1927 = vmul.f32 %v1924, %v1835
    %1929 = vrot.lane.b32.xlu0 %v1926, 64
    %v1930 = vpop.permute.xlu0 %1929
    %v1932 = vmul.f32 %v1924, %v1930
    %1934 = vrot.lane.b32.xlu0 %v1932, 64
    %v1935 = vpop.permute.xlu0 %1934
    %v1937 = vadd.f32 %v1927, %v1935
    %v1938 = vtanh.pop %v1937
    %1940 = vrot.lane.b32.xlu0 %v1938, 64
    %v1941 = vpop.permute.xlu0 %1940
    %v1943 = vmul.f32 %v1925, %v1941
    %v1945 = vsel %vm369, %v1943, 0
    %1947 = vmatprep.subr.mxu0 %v1291
    %1948 = vmatpush1.msra.mxu0 %v1290
    %1949 = vmatprep.subr.mxu0 %v1293
    %1950 = vmatpush1.msra.mxu0 %v1292
    %1951 = vmatprep.subr.mxu0 %v1295
    %1952 = vmatpush1.msra.mxu0 %v1294
    %1953 = vmatprep.subr.mxu0 %v1297
    %1954 = vmatpush1.msra.mxu0 %v1296
    %1955 = vmatprep.subr.mxu0 %v1299
    %1956 = vmatpush1.msra.mxu0 %v1298
    %1957 = vmatprep.subr.mxu0 %v1301
    %1958 = vmatpush1.msra.mxu0 %v1300
    %1959 = vmatprep.subr.mxu0 %v1303
    %1960 = vmatpush1.msra.mxu0 %v1302
    %1961 = vmatprep.subr.mxu0 %v1305
    %1962 = vmatpush1.msra.mxu0 %v1304
    %1963 = vmatprep.subr.mxu0 0.0
    %1964 = vmatpush1.msra.mxu0 0.0
    %1965 = vmatprep.subr.mxu0 0.0
    %1966 = vmatpush1.msra.mxu0 0.0
    %1967 = vmatprep.subr.mxu0 0.0
    %1968 = vmatpush1.msra.mxu0 0.0
    %1969 = vmatprep.subr.mxu0 0.0
    %1970 = vmatpush1.msra.mxu0 0.0
    %1971 = vmatprep.subr.mxu0 0.0
    %1972 = vmatpush1.msra.mxu0 0.0
    %1973 = vmatprep.subr.mxu0 0.0
    %1974 = vmatpush1.msra.mxu0 0.0
    %1975 = vmatprep.subr.mxu0 0.0
    %1976 = vmatpush1.msra.mxu0 0.0
    %1977 = vmatprep.subr.mxu0 0.0
    %1978 = vmatpush1.msra.mxu0 0.0
    %1979 = vmatprep.subr.mxu0 0.0
    %1980 = vmatpush1.msra.mxu0 0.0
    %1981 = vmatprep.subr.mxu0 0.0
    %1982 = vmatpush1.msra.mxu0 0.0
    %1983 = vmatprep.subr.mxu0 0.0
    %1984 = vmatpush1.msra.mxu0 0.0
    %1985 = vmatprep.subr.mxu0 0.0
    %1986 = vmatpush1.msra.mxu0 0.0
    %1987 = vmatprep.subr.mxu0 0.0
    %1988 = vmatpush1.msra.mxu0 0.0
    %1989 = vmatprep.subr.mxu0 0.0
    %1990 = vmatpush1.msra.mxu0 0.0
    %1991 = vmatprep.subr.mxu0 0.0
    %1992 = vmatpush1.msra.mxu0 0.0
    %1993 = vmatprep.subr.mxu0 0.0
    %1994 = vmatpush1.msra.mxu0 0.0
    %1995 = vmatprep.subr.mxu0 0.0
    %1996 = vmatpush1.msra.mxu0 0.0
    %1997 = vmatprep.subr.mxu0 0.0
    %1998 = vmatpush1.msra.mxu0 0.0
    %1999 = vmatprep.subr.mxu0 0.0
    %2000 = vmatpush1.msra.mxu0 0.0
    %2001 = vmatprep.subr.mxu0 0.0
    %2002 = vmatpush1.msra.mxu0 0.0
    %2003 = vmatprep.subr.mxu0 0.0
    %2004 = vmatpush1.msra.mxu0 0.0
    %2005 = vmatprep.subr.mxu0 0.0
    %2006 = vmatpush1.msra.mxu0 0.0
    %2007 = vmatprep.subr.mxu0 0.0
    %2008 = vmatpush1.msra.mxu0 0.0
    %2009 = vmatprep.subr.mxu0 0.0
    %2010 = vmatpush1.msra.mxu0 0.0
    %2011 = vmatprep.mubr.f32.mxu0 0.0
    %2012 = vmatmul.mubr.f32.gmra.mrb[0].mxu0 %v1945
    %v2013 = vpop.f32.mrb[0].mxu0
    %v2014 = vadd.f32 0.0, %v2013
    %v2015 = vpop.f32.mrb[0].mxu0
    %v2016 = vadd.f32 0.0, %v2015
    %2017 = vdwg.mxu0
    %v2018 = vadd.f32 %v1286, %v2014
    %v2019 = vadd.f32 %v1288, %v2016
    %v2020 = vmul.f32 %v2018, 0.5
    %v2021 = vmul.f32 %v2019, 0.5
    %v2022 = vtanh.pop %v2020
    %v2023 = vtanh.pop %v2021
    %v2024 = vmul.f32 %v2022, 0.5
    %v2025 = vmul.f32 %v2023, 0.5
    %v2026 = vadd.f32 %v2024, 0.5
    %v2027 = vadd.f32 %v2025, 0.5
    %v2028 = vtanh.pop %v2019
    %v2029 = vmul.f32 %v2026, %v1937
    %2031 = vrot.lane.b32.xlu0 %v2028, 64
    %v2032 = vpop.permute.xlu0 %2031
    %v2034 = vmul.f32 %v2026, %v2032
    %2036 = vrot.lane.b32.xlu0 %v2034, 64
    %v2037 = vpop.permute.xlu0 %2036
    %v2039 = vadd.f32 %v2029, %v2037
    %v2040 = vtanh.pop %v2039
    %2042 = vrot.lane.b32.xlu0 %v2040, 64
    %v2043 = vpop.permute.xlu0 %2042
    %v2045 = vmul.f32 %v2027, %v2043
    %v2046 = vsel %vm1084, %v1331, %v2045
    %v2047 = vsel %vm1084, %v1433, %v1943
    %v2048 = vsel %vm1084, %v1535, %v1841
    %v2049 = vsel %vm1084, %v1637, %v1739
    %v2050 = vsel %vm1084, %v1739, %v1637
    %v2051 = vsel %vm1084, %v1841, %v1535
    %v2052 = vsel %vm1084, %v1943, %v1433
    %v2053 = vsel %vm1084, %v2045, %v1331
    %v2054 = vld [vmem:[#allocation8] sm:$0xff]
    %v2055 = vld [vmem:[#allocation8 + $0x8] sm:$0xff]
    %v2056 = vld [vmem:[#allocation8 + $0x10] sm:$0xff]
    %v2057 = vld [vmem:[#allocation8 + $0x18] sm:$0xff]
    %v2058 = vld [vmem:[#allocation8 + $0x20] sm:$0xff]
    %v2059 = vld [vmem:[#allocation8 + $0x28] sm:$0xff]
    %v2060 = vld [vmem:[#allocation8 + $0x30] sm:$0xff]
    %v2061 = vld [vmem:[#allocation8 + $0x38] sm:$0xff]
    %v2062 = vld [vmem:[%s9] sm:$0x1]
    %v2064 = vlaneseq
    %v2065 = vshrl.u32 %v2064, 7
    %v2066 = vsub.s32 0, %v2065
    %v2067 = vrot.slane %v2062, %v2066
    %v2070 = vsel %vm369, %v2046, 0
    %v2073 = vsel %vm369, %v2047, 0
    %v2076 = vsel %vm369, %v2048, 0
    %v2079 = vsel %vm369, %v2049, 0
    %v2082 = vsel %vm369, %v2050, 0
    %v2085 = vsel %vm369, %v2051, 0
    %v2088 = vsel %vm369, %v2052, 0
    %v2091 = vsel %vm369, %v2053, 0
    %2093 = vmatprep.subr.mxu0 0.0
    %2094 = vmatpush1.msra.mxu0 %v2054
    %2095 = vmatprep.subr.mxu0 0.0
    %2096 = vmatpush1.msra.mxu0 %v2055
    %2097 = vmatprep.subr.mxu0 0.0
    %2098 = vmatpush1.msra.mxu0 %v2056
    %2099 = vmatprep.subr.mxu0 0.0
    %2100 = vmatpush1.msra.mxu0 %v2057
    %2101 = vmatprep.subr.mxu0 0.0
    %2102 = vmatpush1.msra.mxu0 %v2058
    %2103 = vmatprep.subr.mxu0 0.0
    %2104 = vmatpush1.msra.mxu0 %v2059
    %2105 = vmatprep.subr.mxu0 0.0
    %2106 = vmatpush1.msra.mxu0 %v2060
    %2107 = vmatprep.subr.mxu0 0.0
    %2108 = vmatpush1.msra.mxu0 %v2061
    %2109 = vmatprep.subr.mxu0 0.0
    %2110 = vmatpush1.msra.mxu0 0.0
    %2111 = vmatprep.subr.mxu0 0.0
    %2112 = vmatpush1.msra.mxu0 0.0
    %2113 = vmatprep.subr.mxu0 0.0
    %2114 = vmatpush1.msra.mxu0 0.0
    %2115 = vmatprep.subr.mxu0 0.0
    %2116 = vmatpush1.msra.mxu0 0.0
    %2117 = vmatprep.subr.mxu0 0.0
    %2118 = vmatpush1.msra.mxu0 0.0
    %2119 = vmatprep.subr.mxu0 0.0
    %2120 = vmatpush1.msra.mxu0 0.0
    %2121 = vmatprep.subr.mxu0 0.0
    %2122 = vmatpush1.msra.mxu0 0.0
    %2123 = vmatprep.subr.mxu0 0.0
    %2124 = vmatpush1.msra.mxu0 0.0
    %2125 = vmatprep.subr.mxu0 0.0
    %2126 = vmatpush1.msra.mxu0 0.0
    %2127 = vmatprep.subr.mxu0 0.0
    %2128 = vmatpush1.msra.mxu0 0.0
    %2129 = vmatprep.subr.mxu0 0.0
    %2130 = vmatpush1.msra.mxu0 0.0
    %2131 = vmatprep.subr.mxu0 0.0
    %2132 = vmatpush1.msra.mxu0 0.0
    %2133 = vmatprep.subr.mxu0 0.0
    %2134 = vmatpush1.msra.mxu0 0.0
    %2135 = vmatprep.subr.mxu0 0.0
    %2136 = vmatpush1.msra.mxu0 0.0
    %2137 = vmatprep.subr.mxu0 0.0
    %2138 = vmatpush1.msra.mxu0 0.0
    %2139 = vmatprep.subr.mxu0 0.0
    %2140 = vmatpush1.msra.mxu0 0.0
    %2141 = vmatprep.subr.mxu0 0.0
    %2142 = vmatpush1.msra.mxu0 0.0
    %2143 = vmatprep.subr.mxu0 0.0
    %2144 = vmatpush1.msra.mxu0 0.0
    %2145 = vmatprep.subr.mxu0 0.0
    %2146 = vmatpush1.msra.mxu0 0.0
    %2147 = vmatprep.subr.mxu0 0.0
    %2148 = vmatpush1.msra.mxu0 0.0
    %2149 = vmatprep.subr.mxu0 0.0
    %2150 = vmatpush1.msra.mxu0 0.0
    %2151 = vmatprep.subr.mxu0 0.0
    %2152 = vmatpush1.msra.mxu0 0.0
    %2153 = vmatprep.subr.mxu0 0.0
    %2154 = vmatpush1.msra.mxu0 0.0
    %2155 = vmatprep.subr.mxu0 0.0
    %2156 = vmatpush1.msra.mxu0 0.0
    %2157 = vmatprep.mubr.f32.mxu0 0.0
    %2158 = vmatmul.mubr.f32.gmra.mrb[0].mxu0 %v2070
    %v2159 = vpop.f32.mrb[0].mxu0
    %v2160 = vadd.f32 %v2067, %v2159
    %v2161 = vpop.f32.mrb[0].mxu0
    %2162 = vmatprep.mubr.f32.mxu0 0.0
    %2163 = vmatmul.mubr.f32.gmra.mrb[0].mxu0 %v2073
    %v2164 = vpop.f32.mrb[0].mxu0
    %v2165 = vadd.f32 %v2067, %v2164
    %v2166 = vpop.f32.mrb[0].mxu0
    %2167 = vmatprep.mubr.f32.mxu0 0.0
    %2168 = vmatmul.mubr.f32.gmra.mrb[0].mxu0 %v2076
    %v2169 = vpop.f32.mrb[0].mxu0
    %v2170 = vadd.f32 %v2067, %v2169
    %v2171 = vpop.f32.mrb[0].mxu0
    %2172 = vmatprep.mubr.f32.mxu0 0.0
    %2173 = vmatmul.mubr.f32.gmra.mrb[0].mxu0 %v2079
    %v2174 = vpop.f32.mrb[0].mxu0
    %v2175 = vadd.f32 %v2067, %v2174
    %v2176 = vpop.f32.mrb[0].mxu0
    %2177 = vmatprep.mubr.f32.mxu0 0.0
    %2178 = vmatmul.mubr.f32.gmra.mrb[0].mxu0 %v2082
    %v2179 = vpop.f32.mrb[0].mxu0
    %v2180 = vadd.f32 %v2067, %v2179
    %v2181 = vpop.f32.mrb[0].mxu0
    %2182 = vmatprep.mubr.f32.mxu0 0.0
    %2183 = vmatmul.mubr.f32.gmra.mrb[0].mxu0 %v2085
    %v2184 = vpop.f32.mrb[0].mxu0
    %v2185 = vadd.f32 %v2067, %v2184
    %v2186 = vpop.f32.mrb[0].mxu0
    %2187 = vmatprep.mubr.f32.mxu0 0.0
    %2188 = vmatmul.mubr.f32.gmra.mrb[0].mxu0 %v2088
    %v2189 = vpop.f32.mrb[0].mxu0
    %v2190 = vadd.f32 %v2067, %v2189
    %v2191 = vpop.f32.mrb[0].mxu0
    %2192 = vmatprep.mubr.f32.mxu0 0.0
    %2193 = vmatmul.mubr.f32.gmra.mrb[0].mxu0 %v2091
    %v2194 = vpop.f32.mrb[0].mxu0
    %v2195 = vadd.f32 %v2067, %v2194
    %v2196 = vpop.f32.mrb[0].mxu0
    %2197 = vdwg.mxu0
    %v2198 = vld [vmem:[%s8] sm:$0xff]
    %v2199 = vld [vmem:[%s8 + $0x8] sm:$0xff]
    %v2200 = vld [vmem:[%s8 + $0x10] sm:$0xff]
    %v2201 = vld [vmem:[%s8 + $0x18] sm:$0xff]
    %v2202 = vmul.f32 %v2160, 0.5
    %v2203 = vtanh.pop %v2202
    %v2204 = vmul.f32 %v2203, 0.5
    %v2205 = vadd.f32 %v2204, 0.5
    %v2206 = vtanh.pop %v2160
    %v2207 = vmul.f32 %v2205, 0.0
    %2209 = vrot.lane.b32.xlu0 %v2206, 32
    %v2210 = vpop.permute.xlu0 %2209
    %v2212 = vmul.f32 %v2205, %v2210
    %2214 = vrot.lane.b32.xlu0 %v2212, 32
    %v2215 = vpop.permute.xlu0 %2214
    %v2217 = vadd.f32 %v2207, %v2215
    %v2218 = vtanh.pop %v2217
    %2220 = vrot.lane.b32.xlu0 %v2218, 32
    %v2221 = vpop.permute.xlu0 %2220
    %v2223 = vmul.f32 %v2205, %v2221
    %2225 = vrot.lane.b32.xlu0 %v2223, 64
    %v2226 = vpop.permute.xlu0 %2225
    %v2227 = vsel %vm1084, %v2226, 0
    %2229 = vmatprep.subr.mxu0 0.0
    %2230 = vmatpush1.msra.mxu0 %v2198
    %2231 = vmatprep.subr.mxu0 0.0
    %2232 = vmatpush1.msra.mxu0 %v2199
    %2233 = vmatprep.subr.mxu0 0.0
    %2234 = vmatpush1.msra.mxu0 %v2200
    %2235 = vmatprep.subr.mxu0 0.0
    %2236 = vmatpush1.msra.mxu0 %v2201
    %2237 = vmatprep.subr.mxu0 0.0
    %2238 = vmatpush1.msra.mxu0 0.0
    %2239 = vmatprep.subr.mxu0 0.0
    %2240 = vmatpush1.msra.mxu0 0.0
    %2241 = vmatprep.subr.mxu0 0.0
    %2242 = vmatpush1.msra.mxu0 0.0
    %2243 = vmatprep.subr.mxu0 0.0
    %2244 = vmatpush1.msra.mxu0 0.0
    %2245 = vmatprep.subr.mxu0 0.0
    %2246 = vmatpush1.msra.mxu0 0.0
    %2247 = vmatprep.subr.mxu0 0.0
    %2248 = vmatpush1.msra.mxu0 0.0
    %2249 = vmatprep.subr.mxu0 0.0
    %2250 = vmatpush1.msra.mxu0 0.0
    %2251 = vmatprep.subr.mxu0 0.0
    %2252 = vmatpush1.msra.mxu0 0.0
    %2253 = vmatprep.subr.mxu0 0.0
    %2254 = vmatpush1.msra.mxu0 0.0
    %2255 = vmatprep.subr.mxu0 0.0
    %2256 = vmatpush1.msra.mxu0 0.0
    %2257 = vmatprep.subr.mxu0 0.0
    %2258 = vmatpush1.msra.mxu0 0.0
    %2259 = vmatprep.subr.mxu0 0.0
    %2260 = vmatpush1.msra.mxu0 0.0
    %2261 = vmatprep.subr.mxu0 0.0
    %2262 = vmatpush1.msra.mxu0 0.0
    %2263 = vmatprep.subr.mxu0 0.0
    %2264 = vmatpush1.msra.mxu0 0.0
    %2265 = vmatprep.subr.mxu0 0.0
    %2266 = vmatpush1.msra.mxu0 0.0
    %2267 = vmatprep.subr.mxu0 0.0
    %2268 = vmatpush1.msra.mxu0 0.0
    %2269 = vmatprep.subr.mxu0 0.0
    %2270 = vmatpush1.msra.mxu0 0.0
    %2271 = vmatprep.subr.mxu0 0.0
    %2272 = vmatpush1.msra.mxu0 0.0
    %2273 = vmatprep.subr.mxu0 0.0
    %2274 = vmatpush1.msra.mxu0 0.0
    %2275 = vmatprep.subr.mxu0 0.0
    %2276 = vmatpush1.msra.mxu0 0.0
    %2277 = vmatprep.subr.mxu0 0.0
    %2278 = vmatpush1.msra.mxu0 0.0
    %2279 = vmatprep.subr.mxu0 0.0
    %2280 = vmatpush1.msra.mxu0 0.0
    %2281 = vmatprep.subr.mxu0 0.0
    %2282 = vmatpush1.msra.mxu0 0.0
    %2283 = vmatprep.subr.mxu0 0.0
    %2284 = vmatpush1.msra.mxu0 0.0
    %2285 = vmatprep.subr.mxu0 0.0
    %2286 = vmatpush1.msra.mxu0 0.0
    %2287 = vmatprep.subr.mxu0 0.0
    %2288 = vmatpush1.msra.mxu0 0.0
    %2289 = vmatprep.subr.mxu0 0.0
    %2290 = vmatpush1.msra.mxu0 0.0
    %2291 = vmatprep.subr.mxu0 0.0
    %2292 = vmatpush1.msra.mxu0 0.0
    %2293 = vmatprep.mubr.f32.mxu0 0.0
    %2294 = vmatmul.mubr.f32.gmra.mrb[0].mxu0 %v2227
    %v2295 = vpop.f32.mrb[0].mxu0
    %v2296 = vadd.f32 0.0, %v2295
    %v2297 = vpop.f32.mrb[0].mxu0
    %2298 = vdwg.mxu0
    %v2299 = vadd.f32 %v2165, %v2296
    %v2300 = vmul.f32 %v2299, 0.5
    %v2301 = vtanh.pop %v2300
    %v2302 = vmul.f32 %v2301, 0.5
    %v2303 = vadd.f32 %v2302, 0.5
    %v2304 = vtanh.pop %v2299
    %v2305 = vmul.f32 %v2303, %v2217
    %2307 = vrot.lane.b32.xlu0 %v2304, 32
    %v2308 = vpop.permute.xlu0 %2307
    %v2310 = vmul.f32 %v2303, %v2308
    %2312 = vrot.lane.b32.xlu0 %v2310, 32
    %v2313 = vpop.permute.xlu0 %2312
    %v2315 = vadd.f32 %v2305, %v2313
    %v2316 = vtanh.pop %v2315
    %2318 = vrot.lane.b32.xlu0 %v2316, 32
    %v2319 = vpop.permute.xlu0 %2318
    %v2321 = vmul.f32 %v2303, %v2319
    %2323 = vrot.lane.b32.xlu0 %v2321, 64
    %v2324 = vpop.permute.xlu0 %2323
    %v2325 = vsel %vm1084, %v2324, 0
    %2327 = vmatprep.subr.mxu0 0.0
    %2328 = vmatpush1.msra.mxu0 %v2198
    %2329 = vmatprep.subr.mxu0 0.0
    %2330 = vmatpush1.msra.mxu0 %v2199
    %2331 = vmatprep.subr.mxu0 0.0
    %2332 = vmatpush1.msra.mxu0 %v2200
    %2333 = vmatprep.subr.mxu0 0.0
    %2334 = vmatpush1.msra.mxu0 %v2201
    %2335 = vmatprep.subr.mxu0 0.0
    %2336 = vmatpush1.msra.mxu0 0.0
    %2337 = vmatprep.subr.mxu0 0.0
    %2338 = vmatpush1.msra.mxu0 0.0
    %2339 = vmatprep.subr.mxu0 0.0
    %2340 = vmatpush1.msra.mxu0 0.0
    %2341 = vmatprep.subr.mxu0 0.0
    %2342 = vmatpush1.msra.mxu0 0.0
    %2343 = vmatprep.subr.mxu0 0.0
    %2344 = vmatpush1.msra.mxu0 0.0
    %2345 = vmatprep.subr.mxu0 0.0
    %2346 = vmatpush1.msra.mxu0 0.0
    %2347 = vmatprep.subr.mxu0 0.0
    %2348 = vmatpush1.msra.mxu0 0.0
    %2349 = vmatprep.subr.mxu0 0.0
    %2350 = vmatpush1.msra.mxu0 0.0
    %2351 = vmatprep.subr.mxu0 0.0
    %2352 = vmatpush1.msra.mxu0 0.0
    %2353 = vmatprep.subr.mxu0 0.0
    %2354 = vmatpush1.msra.mxu0 0.0
    %2355 = vmatprep.subr.mxu0 0.0
    %2356 = vmatpush1.msra.mxu0 0.0
    %2357 = vmatprep.subr.mxu0 0.0
    %2358 = vmatpush1.msra.mxu0 0.0
    %2359 = vmatprep.subr.mxu0 0.0
    %2360 = vmatpush1.msra.mxu0 0.0
    %2361 = vmatprep.subr.mxu0 0.0
    %2362 = vmatpush1.msra.mxu0 0.0
    %2363 = vmatprep.subr.mxu0 0.0
    %2364 = vmatpush1.msra.mxu0 0.0
    %2365 = vmatprep.subr.mxu0 0.0
    %2366 = vmatpush1.msra.mxu0 0.0
    %2367 = vmatprep.subr.mxu0 0.0
    %2368 = vmatpush1.msra.mxu0 0.0
    %2369 = vmatprep.subr.mxu0 0.0
    %2370 = vmatpush1.msra.mxu0 0.0
    %2371 = vmatprep.subr.mxu0 0.0
    %2372 = vmatpush1.msra.mxu0 0.0
    %2373 = vmatprep.subr.mxu0 0.0
    %2374 = vmatpush1.msra.mxu0 0.0
    %2375 = vmatprep.subr.mxu0 0.0
    %2376 = vmatpush1.msra.mxu0 0.0
    %2377 = vmatprep.subr.mxu0 0.0
    %2378 = vmatpush1.msra.mxu0 0.0
    %2379 = vmatprep.subr.mxu0 0.0
    %2380 = vmatpush1.msra.mxu0 0.0
    %2381 = vmatprep.subr.mxu0 0.0
    %2382 = vmatpush1.msra.mxu0 0.0
    %2383 = vmatprep.subr.mxu0 0.0
    %2384 = vmatpush1.msra.mxu0 0.0
    %2385 = vmatprep.subr.mxu0 0.0
    %2386 = vmatpush1.msra.mxu0 0.0
    %2387 = vmatprep.subr.mxu0 0.0
    %2388 = vmatpush1.msra.mxu0 0.0
    %2389 = vmatprep.subr.mxu0 0.0
    %2390 = vmatpush1.msra.mxu0 0.0
    %2391 = vmatprep.mubr.f32.mxu0 0.0
    %2392 = vmatmul.mubr.f32.gmra.mrb[0].mxu0 %v2325
    %v2393 = vpop.f32.mrb[0].mxu0
    %v2394 = vadd.f32 0.0, %v2393
    %v2395 = vpop.f32.mrb[0].mxu0
    %2396 = vdwg.mxu0
    %v2397 = vadd.f32 %v2170, %v2394
    %v2398 = vmul.f32 %v2397, 0.5
    %v2399 = vtanh.pop %v2398
    %v2400 = vmul.f32 %v2399, 0.5
    %v2401 = vadd.f32 %v2400, 0.5
    %v2402 = vtanh.pop %v2397
    %v2403 = vmul.f32 %v2401, %v2315
    %2405 = vrot.lane.b32.xlu0 %v2402, 32
    %v2406 = vpop.permute.xlu0 %2405
    %v2408 = vmul.f32 %v2401, %v2406
    %2410 = vrot.lane.b32.xlu0 %v2408, 32
    %v2411 = vpop.permute.xlu0 %2410
    %v2413 = vadd.f32 %v2403, %v2411
    %v2414 = vtanh.pop %v2413
    %2416 = vrot.lane.b32.xlu0 %v2414, 32
    %v2417 = vpop.permute.xlu0 %2416
    %v2419 = vmul.f32 %v2401, %v2417
    %2421 = vrot.lane.b32.xlu0 %v2419, 64
    %v2422 = vpop.permute.xlu0 %2421
    %v2423 = vsel %vm1084, %v2422, 0
    %2425 = vmatprep.subr.mxu0 0.0
    %2426 = vmatpush1.msra.mxu0 %v2198
    %2427 = vmatprep.subr.mxu0 0.0
    %2428 = vmatpush1.msra.mxu0 %v2199
    %2429 = vmatprep.subr.mxu0 0.0
    %2430 = vmatpush1.msra.mxu0 %v2200
    %2431 = vmatprep.subr.mxu0 0.0
    %2432 = vmatpush1.msra.mxu0 %v2201
    %2433 = vmatprep.subr.mxu0 0.0
    %2434 = vmatpush1.msra.mxu0 0.0
    %2435 = vmatprep.subr.mxu0 0.0
    %2436 = vmatpush1.msra.mxu0 0.0
    %2437 = vmatprep.subr.mxu0 0.0
    %2438 = vmatpush1.msra.mxu0 0.0
    %2439 = vmatprep.subr.mxu0 0.0
    %2440 = vmatpush1.msra.mxu0 0.0
    %2441 = vmatprep.subr.mxu0 0.0
    %2442 = vmatpush1.msra.mxu0 0.0
    %2443 = vmatprep.subr.mxu0 0.0
    %2444 = vmatpush1.msra.mxu0 0.0
    %2445 = vmatprep.subr.mxu0 0.0
    %2446 = vmatpush1.msra.mxu0 0.0
    %2447 = vmatprep.subr.mxu0 0.0
    %2448 = vmatpush1.msra.mxu0 0.0
    %2449 = vmatprep.subr.mxu0 0.0
    %2450 = vmatpush1.msra.mxu0 0.0
    %2451 = vmatprep.subr.mxu0 0.0
    %2452 = vmatpush1.msra.mxu0 0.0
    %2453 = vmatprep.subr.mxu0 0.0
    %2454 = vmatpush1.msra.mxu0 0.0
    %2455 = vmatprep.subr.mxu0 0.0
    %2456 = vmatpush1.msra.mxu0 0.0
    %2457 = vmatprep.subr.mxu0 0.0
    %2458 = vmatpush1.msra.mxu0 0.0
    %2459 = vmatprep.subr.mxu0 0.0
    %2460 = vmatpush1.msra.mxu0 0.0
    %2461 = vmatprep.subr.mxu0 0.0
    %2462 = vmatpush1.msra.mxu0 0.0
    %2463 = vmatprep.subr.mxu0 0.0
    %2464 = vmatpush1.msra.mxu0 0.0
    %2465 = vmatprep.subr.mxu0 0.0
    %2466 = vmatpush1.msra.mxu0 0.0
    %2467 = vmatprep.subr.mxu0 0.0
    %2468 = vmatpush1.msra.mxu0 0.0
    %2469 = vmatprep.subr.mxu0 0.0
    %2470 = vmatpush1.msra.mxu0 0.0
    %2471 = vmatprep.subr.mxu0 0.0
    %2472 = vmatpush1.msra.mxu0 0.0
    %2473 = vmatprep.subr.mxu0 0.0
    %2474 = vmatpush1.msra.mxu0 0.0
    %2475 = vmatprep.subr.mxu0 0.0
    %2476 = vmatpush1.msra.mxu0 0.0
    %2477 = vmatprep.subr.mxu0 0.0
    %2478 = vmatpush1.msra.mxu0 0.0
    %2479 = vmatprep.subr.mxu0 0.0
    %2480 = vmatpush1.msra.mxu0 0.0
    %2481 = vmatprep.subr.mxu0 0.0
    %2482 = vmatpush1.msra.mxu0 0.0
    %2483 = vmatprep.subr.mxu0 0.0
    %2484 = vmatpush1.msra.mxu0 0.0
    %2485 = vmatprep.subr.mxu0 0.0
    %2486 = vmatpush1.msra.mxu0 0.0
    %2487 = vmatprep.subr.mxu0 0.0
    %2488 = vmatpush1.msra.mxu0 0.0
    %2489 = vmatprep.mubr.f32.mxu0 0.0
    %2490 = vmatmul.mubr.f32.gmra.mrb[0].mxu0 %v2423
    %v2491 = vpop.f32.mrb[0].mxu0
    %v2492 = vadd.f32 0.0, %v2491
    %v2493 = vpop.f32.mrb[0].mxu0
    %2494 = vdwg.mxu0
    %v2495 = vadd.f32 %v2175, %v2492
    %v2496 = vmul.f32 %v2495, 0.5
    %v2497 = vtanh.pop %v2496
    %v2498 = vmul.f32 %v2497, 0.5
    %v2499 = vadd.f32 %v2498, 0.5
    %v2500 = vtanh.pop %v2495
    %v2501 = vmul.f32 %v2499, %v2413
    %2503 = vrot.lane.b32.xlu0 %v2500, 32
    %v2504 = vpop.permute.xlu0 %2503
    %v2506 = vmul.f32 %v2499, %v2504
    %2508 = vrot.lane.b32.xlu0 %v2506, 32
    %v2509 = vpop.permute.xlu0 %2508
    %v2511 = vadd.f32 %v2501, %v2509
    %v2512 = vtanh.pop %v2511
    %2514 = vrot.lane.b32.xlu0 %v2512, 32
    %v2515 = vpop.permute.xlu0 %2514
    %v2517 = vmul.f32 %v2499, %v2515
    %2519 = vrot.lane.b32.xlu0 %v2517, 64
    %v2520 = vpop.permute.xlu0 %2519
    %v2521 = vsel %vm1084, %v2520, 0
    %2523 = vmatprep.subr.mxu0 0.0
    %2524 = vmatpush1.msra.mxu0 %v2198
    %2525 = vmatprep.subr.mxu0 0.0
    %2526 = vmatpush1.msra.mxu0 %v2199
    %2527 = vmatprep.subr.mxu0 0.0
    %2528 = vmatpush1.msra.mxu0 %v2200
    %2529 = vmatprep.subr.mxu0 0.0
    %2530 = vmatpush1.msra.mxu0 %v2201
    %2531 = vmatprep.subr.mxu0 0.0
    %2532 = vmatpush1.msra.mxu0 0.0
    %2533 = vmatprep.subr.mxu0 0.0
    %2534 = vmatpush1.msra.mxu0 0.0
    %2535 = vmatprep.subr.mxu0 0.0
    %2536 = vmatpush1.msra.mxu0 0.0
    %2537 = vmatprep.subr.mxu0 0.0
    %2538 = vmatpush1.msra.mxu0 0.0
    %2539 = vmatprep.subr.mxu0 0.0
    %2540 = vmatpush1.msra.mxu0 0.0
    %2541 = vmatprep.subr.mxu0 0.0
    %2542 = vmatpush1.msra.mxu0 0.0
    %2543 = vmatprep.subr.mxu0 0.0
    %2544 = vmatpush1.msra.mxu0 0.0
    %2545 = vmatprep.subr.mxu0 0.0
    %2546 = vmatpush1.msra.mxu0 0.0
    %2547 = vmatprep.subr.mxu0 0.0
    %2548 = vmatpush1.msra.mxu0 0.0
    %2549 = vmatprep.subr.mxu0 0.0
    %2550 = vmatpush1.msra.mxu0 0.0
    %2551 = vmatprep.subr.mxu0 0.0
    %2552 = vmatpush1.msra.mxu0 0.0
    %2553 = vmatprep.subr.mxu0 0.0
    %2554 = vmatpush1.msra.mxu0 0.0
    %2555 = vmatprep.subr.mxu0 0.0
    %2556 = vmatpush1.msra.mxu0 0.0
    %2557 = vmatprep.subr.mxu0 0.0
    %2558 = vmatpush1.msra.mxu0 0.0
    %2559 = vmatprep.subr.mxu0 0.0
    %2560 = vmatpush1.msra.mxu0 0.0
    %2561 = vmatprep.subr.mxu0 0.0
    %2562 = vmatpush1.msra.mxu0 0.0
    %2563 = vmatprep.subr.mxu0 0.0
    %2564 = vmatpush1.msra.mxu0 0.0
    %2565 = vmatprep.subr.mxu0 0.0
    %2566 = vmatpush1.msra.mxu0 0.0
    %2567 = vmatprep.subr.mxu0 0.0
    %2568 = vmatpush1.msra.mxu0 0.0
    %2569 = vmatprep.subr.mxu0 0.0
    %2570 = vmatpush1.msra.mxu0 0.0
    %2571 = vmatprep.subr.mxu0 0.0
    %2572 = vmatpush1.msra.mxu0 0.0
    %2573 = vmatprep.subr.mxu0 0.0
    %2574 = vmatpush1.msra.mxu0 0.0
    %2575 = vmatprep.subr.mxu0 0.0
    %2576 = vmatpush1.msra.mxu0 0.0
    %2577 = vmatprep.subr.mxu0 0.0
    %2578 = vmatpush1.msra.mxu0 0.0
    %2579 = vmatprep.subr.mxu0 0.0
    %2580 = vmatpush1.msra.mxu0 0.0
    %2581 = vmatprep.subr.mxu0 0.0
    %2582 = vmatpush1.msra.mxu0 0.0
    %2583 = vmatprep.subr.mxu0 0.0
    %2584 = vmatpush1.msra.mxu0 0.0
    %2585 = vmatprep.subr.mxu0 0.0
    %2586 = vmatpush1.msra.mxu0 0.0
    %2587 = vmatprep.mubr.f32.mxu0 0.0
    %2588 = vmatmul.mubr.f32.gmra.mrb[0].mxu0 %v2521
    %v2589 = vpop.f32.mrb[0].mxu0
    %v2590 = vadd.f32 0.0, %v2589
    %v2591 = vpop.f32.mrb[0].mxu0
    %2592 = vdwg.mxu0
    %v2593 = vadd.f32 %v2180, %v2590
    %v2594 = vmul.f32 %v2593, 0.5
    %v2595 = vtanh.pop %v2594
    %v2596 = vmul.f32 %v2595, 0.5
    %v2597 = vadd.f32 %v2596, 0.5
    %v2598 = vtanh.pop %v2593
    %v2599 = vmul.f32 %v2597, %v2511
    %2601 = vrot.lane.b32.xlu0 %v2598, 32
    %v2602 = vpop.permute.xlu0 %2601
    %v2604 = vmul.f32 %v2597, %v2602
    %2606 = vrot.lane.b32.xlu0 %v2604, 32
    %v2607 = vpop.permute.xlu0 %2606
    %v2609 = vadd.f32 %v2599, %v2607
    %v2610 = vtanh.pop %v2609
    %2612 = vrot.lane.b32.xlu0 %v2610, 32
    %v2613 = vpop.permute.xlu0 %2612
    %v2615 = vmul.f32 %v2597, %v2613
    %2617 = vrot.lane.b32.xlu0 %v2615, 64
    %v2618 = vpop.permute.xlu0 %2617
    %v2619 = vsel %vm1084, %v2618, 0
    %2621 = vmatprep.subr.mxu0 0.0
    %2622 = vmatpush1.msra.mxu0 %v2198
    %2623 = vmatprep.subr.mxu0 0.0
    %2624 = vmatpush1.msra.mxu0 %v2199
    %2625 = vmatprep.subr.mxu0 0.0
    %2626 = vmatpush1.msra.mxu0 %v2200
    %2627 = vmatprep.subr.mxu0 0.0
    %2628 = vmatpush1.msra.mxu0 %v2201
    %2629 = vmatprep.subr.mxu0 0.0
    %2630 = vmatpush1.msra.mxu0 0.0
    %2631 = vmatprep.subr.mxu0 0.0
    %2632 = vmatpush1.msra.mxu0 0.0
    %2633 = vmatprep.subr.mxu0 0.0
    %2634 = vmatpush1.msra.mxu0 0.0
    %2635 = vmatprep.subr.mxu0 0.0
    %2636 = vmatpush1.msra.mxu0 0.0
    %2637 = vmatprep.subr.mxu0 0.0
    %2638 = vmatpush1.msra.mxu0 0.0
    %2639 = vmatprep.subr.mxu0 0.0
    %2640 = vmatpush1.msra.mxu0 0.0
    %2641 = vmatprep.subr.mxu0 0.0
    %2642 = vmatpush1.msra.mxu0 0.0
    %2643 = vmatprep.subr.mxu0 0.0
    %2644 = vmatpush1.msra.mxu0 0.0
    %2645 = vmatprep.subr.mxu0 0.0
    %2646 = vmatpush1.msra.mxu0 0.0
    %2647 = vmatprep.subr.mxu0 0.0
    %2648 = vmatpush1.msra.mxu0 0.0
    %2649 = vmatprep.subr.mxu0 0.0
    %2650 = vmatpush1.msra.mxu0 0.0
    %2651 = vmatprep.subr.mxu0 0.0
    %2652 = vmatpush1.msra.mxu0 0.0
    %2653 = vmatprep.subr.mxu0 0.0
    %2654 = vmatpush1.msra.mxu0 0.0
    %2655 = vmatprep.subr.mxu0 0.0
    %2656 = vmatpush1.msra.mxu0 0.0
    %2657 = vmatprep.subr.mxu0 0.0
    %2658 = vmatpush1.msra.mxu0 0.0
    %2659 = vmatprep.subr.mxu0 0.0
    %2660 = vmatpush1.msra.mxu0 0.0
    %2661 = vmatprep.subr.mxu0 0.0
    %2662 = vmatpush1.msra.mxu0 0.0
    %2663 = vmatprep.subr.mxu0 0.0
    %2664 = vmatpush1.msra.mxu0 0.0
    %2665 = vmatprep.subr.mxu0 0.0
    %2666 = vmatpush1.msra.mxu0 0.0
    %2667 = vmatprep.subr.mxu0 0.0
    %2668 = vmatpush1.msra.mxu0 0.0
    %2669 = vmatprep.subr.mxu0 0.0
    %2670 = vmatpush1.msra.mxu0 0.0
    %2671 = vmatprep.subr.mxu0 0.0
    %2672 = vmatpush1.msra.mxu0 0.0
    %2673 = vmatprep.subr.mxu0 0.0
    %2674 = vmatpush1.msra.mxu0 0.0
    %2675 = vmatprep.subr.mxu0 0.0
    %2676 = vmatpush1.msra.mxu0 0.0
    %2677 = vmatprep.subr.mxu0 0.0
    %2678 = vmatpush1.msra.mxu0 0.0
    %2679 = vmatprep.subr.mxu0 0.0
    %2680 = vmatpush1.msra.mxu0 0.0
    %2681 = vmatprep.subr.mxu0 0.0
    %2682 = vmatpush1.msra.mxu0 0.0
    %2683 = vmatprep.subr.mxu0 0.0
    %2684 = vmatpush1.msra.mxu0 0.0
    %2685 = vmatprep.mubr.f32.mxu0 0.0
    %2686 = vmatmul.mubr.f32.gmra.mrb[0].mxu0 %v2619
    %v2687 = vpop.f32.mrb[0].mxu0
    %v2688 = vadd.f32 0.0, %v2687
    %v2689 = vpop.f32.mrb[0].mxu0
    %2690 = vdwg.mxu0
    %v2691 = vadd.f32 %v2185, %v2688
    %v2692 = vmul.f32 %v2691, 0.5
    %v2693 = vtanh.pop %v2692
    %v2694 = vmul.f32 %v2693, 0.5
    %v2695 = vadd.f32 %v2694, 0.5
    %v2696 = vtanh.pop %v2691
    %v2697 = vmul.f32 %v2695, %v2609
    %2699 = vrot.lane.b32.xlu0 %v2696, 32
    %v2700 = vpop.permute.xlu0 %2699
    %v2702 = vmul.f32 %v2695, %v2700
    %2704 = vrot.lane.b32.xlu0 %v2702, 32
    %v2705 = vpop.permute.xlu0 %2704
    %v2707 = vadd.f32 %v2697, %v2705
    %v2708 = vtanh.pop %v2707
    %2710 = vrot.lane.b32.xlu0 %v2708, 32
    %v2711 = vpop.permute.xlu0 %2710
    %v2713 = vmul.f32 %v2695, %v2711
    %2715 = vrot.lane.b32.xlu0 %v2713, 64
    %v2716 = vpop.permute.xlu0 %2715
    %v2717 = vsel %vm1084, %v2716, 0
    %2719 = vmatprep.subr.mxu0 0.0
    %2720 = vmatpush1.msra.mxu0 %v2198
    %2721 = vmatprep.subr.mxu0 0.0
    %2722 = vmatpush1.msra.mxu0 %v2199
    %2723 = vmatprep.subr.mxu0 0.0
    %2724 = vmatpush1.msra.mxu0 %v2200
    %2725 = vmatprep.subr.mxu0 0.0
    %2726 = vmatpush1.msra.mxu0 %v2201
    %2727 = vmatprep.subr.mxu0 0.0
    %2728 = vmatpush1.msra.mxu0 0.0
    %2729 = vmatprep.subr.mxu0 0.0
    %2730 = vmatpush1.msra.mxu0 0.0
    %2731 = vmatprep.subr.mxu0 0.0
    %2732 = vmatpush1.msra.mxu0 0.0
    %2733 = vmatprep.subr.mxu0 0.0
    %2734 = vmatpush1.msra.mxu0 0.0
    %2735 = vmatprep.subr.mxu0 0.0
    %2736 = vmatpush1.msra.mxu0 0.0
    %2737 = vmatprep.subr.mxu0 0.0
    %2738 = vmatpush1.msra.mxu0 0.0
    %2739 = vmatprep.subr.mxu0 0.0
    %2740 = vmatpush1.msra.mxu0 0.0
    %2741 = vmatprep.subr.mxu0 0.0
    %2742 = vmatpush1.msra.mxu0 0.0
    %2743 = vmatprep.subr.mxu0 0.0
    %2744 = vmatpush1.msra.mxu0 0.0
    %2745 = vmatprep.subr.mxu0 0.0
    %2746 = vmatpush1.msra.mxu0 0.0
    %2747 = vmatprep.subr.mxu0 0.0
    %2748 = vmatpush1.msra.mxu0 0.0
    %2749 = vmatprep.subr.mxu0 0.0
    %2750 = vmatpush1.msra.mxu0 0.0
    %2751 = vmatprep.subr.mxu0 0.0
    %2752 = vmatpush1.msra.mxu0 0.0
    %2753 = vmatprep.subr.mxu0 0.0
    %2754 = vmatpush1.msra.mxu0 0.0
    %2755 = vmatprep.subr.mxu0 0.0
    %2756 = vmatpush1.msra.mxu0 0.0
    %2757 = vmatprep.subr.mxu0 0.0
    %2758 = vmatpush1.msra.mxu0 0.0
    %2759 = vmatprep.subr.mxu0 0.0
    %2760 = vmatpush1.msra.mxu0 0.0
    %2761 = vmatprep.subr.mxu0 0.0
    %2762 = vmatpush1.msra.mxu0 0.0
    %2763 = vmatprep.subr.mxu0 0.0
    %2764 = vmatpush1.msra.mxu0 0.0
    %2765 = vmatprep.subr.mxu0 0.0
    %2766 = vmatpush1.msra.mxu0 0.0
    %2767 = vmatprep.subr.mxu0 0.0
    %2768 = vmatpush1.msra.mxu0 0.0
    %2769 = vmatprep.subr.mxu0 0.0
    %2770 = vmatpush1.msra.mxu0 0.0
    %2771 = vmatprep.subr.mxu0 0.0
    %2772 = vmatpush1.msra.mxu0 0.0
    %2773 = vmatprep.subr.mxu0 0.0
    %2774 = vmatpush1.msra.mxu0 0.0
    %2775 = vmatprep.subr.mxu0 0.0
    %2776 = vmatpush1.msra.mxu0 0.0
    %2777 = vmatprep.subr.mxu0 0.0
    %2778 = vmatpush1.msra.mxu0 0.0
    %2779 = vmatprep.subr.mxu0 0.0
    %2780 = vmatpush1.msra.mxu0 0.0
    %2781 = vmatprep.subr.mxu0 0.0
    %2782 = vmatpush1.msra.mxu0 0.0
    %2783 = vmatprep.mubr.f32.mxu0 0.0
    %2784 = vmatmul.mubr.f32.gmra.mrb[0].mxu0 %v2717
    %v2785 = vpop.f32.mrb[0].mxu0
    %v2786 = vadd.f32 0.0, %v2785
    %v2787 = vpop.f32.mrb[0].mxu0
    %2788 = vdwg.mxu0
    %v2789 = vadd.f32 %v2190, %v2786
    %v2790 = vmul.f32 %v2789, 0.5
    %v2791 = vtanh.pop %v2790
    %v2792 = vmul.f32 %v2791, 0.5
    %v2793 = vadd.f32 %v2792, 0.5
    %v2794 = vtanh.pop %v2789
    %v2795 = vmul.f32 %v2793, %v2707
    %2797 = vrot.lane.b32.xlu0 %v2794, 32
    %v2798 = vpop.permute.xlu0 %2797
    %v2800 = vmul.f32 %v2793, %v2798
    %2802 = vrot.lane.b32.xlu0 %v2800, 32
    %v2803 = vpop.permute.xlu0 %2802
    %v2805 = vadd.f32 %v2795, %v2803
    %v2806 = vtanh.pop %v2805
    %2808 = vrot.lane.b32.xlu0 %v2806, 32
    %v2809 = vpop.permute.xlu0 %2808
    %v2811 = vmul.f32 %v2793, %v2809
    %2813 = vrot.lane.b32.xlu0 %v2811, 64
    %v2814 = vpop.permute.xlu0 %2813
    %v2815 = vsel %vm1084, %v2814, 0
    %2817 = vmatprep.subr.mxu0 0.0
    %2818 = vmatpush1.msra.mxu0 %v2198
    %2819 = vmatprep.subr.mxu0 0.0
    %2820 = vmatpush1.msra.mxu0 %v2199
    %2821 = vmatprep.subr.mxu0 0.0
    %2822 = vmatpush1.msra.mxu0 %v2200
    %2823 = vmatprep.subr.mxu0 0.0
    %2824 = vmatpush1.msra.mxu0 %v2201
    %2825 = vmatprep.subr.mxu0 0.0
    %2826 = vmatpush1.msra.mxu0 0.0
    %2827 = vmatprep.subr.mxu0 0.0
    %2828 = vmatpush1.msra.mxu0 0.0
    %2829 = vmatprep.subr.mxu0 0.0
    %2830 = vmatpush1.msra.mxu0 0.0
    %2831 = vmatprep.subr.mxu0 0.0
    %2832 = vmatpush1.msra.mxu0 0.0
    %2833 = vmatprep.subr.mxu0 0.0
    %2834 = vmatpush1.msra.mxu0 0.0
    %2835 = vmatprep.subr.mxu0 0.0
    %2836 = vmatpush1.msra.mxu0 0.0
    %2837 = vmatprep.subr.mxu0 0.0
    %2838 = vmatpush1.msra.mxu0 0.0
    %2839 = vmatprep.subr.mxu0 0.0
    %2840 = vmatpush1.msra.mxu0 0.0
    %2841 = vmatprep.subr.mxu0 0.0
    %2842 = vmatpush1.msra.mxu0 0.0
    %2843 = vmatprep.subr.mxu0 0.0
    %2844 = vmatpush1.msra.mxu0 0.0
    %2845 = vmatprep.subr.mxu0 0.0
    %2846 = vmatpush1.msra.mxu0 0.0
    %2847 = vmatprep.subr.mxu0 0.0
    %2848 = vmatpush1.msra.mxu0 0.0
    %2849 = vmatprep.subr.mxu0 0.0
    %2850 = vmatpush1.msra.mxu0 0.0
    %2851 = vmatprep.subr.mxu0 0.0
    %2852 = vmatpush1.msra.mxu0 0.0
    %2853 = vmatprep.subr.mxu0 0.0
    %2854 = vmatpush1.msra.mxu0 0.0
    %2855 = vmatprep.subr.mxu0 0.0
    %2856 = vmatpush1.msra.mxu0 0.0
    %2857 = vmatprep.subr.mxu0 0.0
    %2858 = vmatpush1.msra.mxu0 0.0
    %2859 = vmatprep.subr.mxu0 0.0
    %2860 = vmatpush1.msra.mxu0 0.0
    %2861 = vmatprep.subr.mxu0 0.0
    %2862 = vmatpush1.msra.mxu0 0.0
    %2863 = vmatprep.subr.mxu0 0.0
    %2864 = vmatpush1.msra.mxu0 0.0
    %2865 = vmatprep.subr.mxu0 0.0
    %2866 = vmatpush1.msra.mxu0 0.0
    %2867 = vmatprep.subr.mxu0 0.0
    %2868 = vmatpush1.msra.mxu0 0.0
    %2869 = vmatprep.subr.mxu0 0.0
    %2870 = vmatpush1.msra.mxu0 0.0
    %2871 = vmatprep.subr.mxu0 0.0
    %2872 = vmatpush1.msra.mxu0 0.0
    %2873 = vmatprep.subr.mxu0 0.0
    %2874 = vmatpush1.msra.mxu0 0.0
    %2875 = vmatprep.subr.mxu0 0.0
    %2876 = vmatpush1.msra.mxu0 0.0
    %2877 = vmatprep.subr.mxu0 0.0
    %2878 = vmatpush1.msra.mxu0 0.0
    %2879 = vmatprep.subr.mxu0 0.0
    %2880 = vmatpush1.msra.mxu0 0.0
    %2881 = vmatprep.mubr.f32.mxu0 0.0
    %2882 = vmatmul.mubr.f32.gmra.mrb[0].mxu0 %v2815
    %v2883 = vpop.f32.mrb[0].mxu0
    %v2884 = vadd.f32 0.0, %v2883
    %v2885 = vpop.f32.mrb[0].mxu0
    %2886 = vdwg.mxu0
    %v2887 = vadd.f32 %v2195, %v2884
    %v2888 = vmul.f32 %v2887, 0.5
    %v2889 = vtanh.pop %v2888
    %v2890 = vmul.f32 %v2889, 0.5
    %v2891 = vadd.f32 %v2890, 0.5
    %v2892 = vtanh.pop %v2887
    %v2893 = vmul.f32 %v2891, %v2805
    %2895 = vrot.lane.b32.xlu0 %v2892, 32
    %v2896 = vpop.permute.xlu0 %2895
    %v2898 = vmul.f32 %v2891, %v2896
    %2900 = vrot.lane.b32.xlu0 %v2898, 32
    %v2901 = vpop.permute.xlu0 %2900
    %v2903 = vadd.f32 %v2893, %v2901
    %v2904 = vtanh.pop %v2903
    %2906 = vrot.lane.b32.xlu0 %v2904, 32
    %v2907 = vpop.permute.xlu0 %2906
    %v2909 = vmul.f32 %v2891, %v2907
    %v2910 = vld [vmem:[#allocation10] sm:$0xff]
    %v2911 = vld [vmem:[#allocation10 + $0x8] sm:$0xff]
    %v2912 = vld [vmem:[#allocation10 + $0x10] sm:$0xff]
    %v2913 = vld [vmem:[#allocation10 + $0x18] sm:$0xff]
    %v2914 = vld [vmem:[#allocation10 + $0x20] sm:$0xff]
    %v2915 = vld [vmem:[#allocation10 + $0x28] sm:$0xff]
    %v2916 = vld [vmem:[#allocation10 + $0x30] sm:$0xff]
    %v2917 = vld [vmem:[#allocation10 + $0x38] sm:$0xff]
    %v2918 = vld [vmem:[#allocation11] sm:$0x1]
    %v2920 = vlaneseq
    %v2921 = vshrl.u32 %v2920, 7
    %v2922 = vsub.s32 0, %v2921
    %v2923 = vrot.slane %v2918, %v2922
    %2925 = vmatprep.subr.mxu0 0.0
    %2926 = vmatpush1.msra.mxu0 %v2910
    %2927 = vmatprep.subr.mxu0 0.0
    %2928 = vmatpush1.msra.mxu0 %v2911
    %2929 = vmatprep.subr.mxu0 0.0
    %2930 = vmatpush1.msra.mxu0 %v2912
    %2931 = vmatprep.subr.mxu0 0.0
    %2932 = vmatpush1.msra.mxu0 %v2913
    %2933 = vmatprep.subr.mxu0 0.0
    %2934 = vmatpush1.msra.mxu0 %v2914
    %2935 = vmatprep.subr.mxu0 0.0
    %2936 = vmatpush1.msra.mxu0 %v2915
    %2937 = vmatprep.subr.mxu0 0.0
    %2938 = vmatpush1.msra.mxu0 %v2916
    %2939 = vmatprep.subr.mxu0 0.0
    %2940 = vmatpush1.msra.mxu0 %v2917
    %2941 = vmatprep.subr.mxu0 0.0
    %2942 = vmatpush1.msra.mxu0 0.0
    %2943 = vmatprep.subr.mxu0 0.0
    %2944 = vmatpush1.msra.mxu0 0.0
    %2945 = vmatprep.subr.mxu0 0.0
    %2946 = vmatpush1.msra.mxu0 0.0
    %2947 = vmatprep.subr.mxu0 0.0
    %2948 = vmatpush1.msra.mxu0 0.0
    %2949 = vmatprep.subr.mxu0 0.0
    %2950 = vmatpush1.msra.mxu0 0.0
    %2951 = vmatprep.subr.mxu0 0.0
    %2952 = vmatpush1.msra.mxu0 0.0
    %2953 = vmatprep.subr.mxu0 0.0
    %2954 = vmatpush1.msra.mxu0 0.0
    %2955 = vmatprep.subr.mxu0 0.0
    %2956 = vmatpush1.msra.mxu0 0.0
    %2957 = vmatprep.subr.mxu0 0.0
    %2958 = vmatpush1.msra.mxu0 0.0
    %2959 = vmatprep.subr.mxu0 0.0
    %2960 = vmatpush1.msra.mxu0 0.0
    %2961 = vmatprep.subr.mxu0 0.0
    %2962 = vmatpush1.msra.mxu0 0.0
    %2963 = vmatprep.subr.mxu0 0.0
    %2964 = vmatpush1.msra.mxu0 0.0
    %2965 = vmatprep.subr.mxu0 0.0
    %2966 = vmatpush1.msra.mxu0 0.0
    %2967 = vmatprep.subr.mxu0 0.0
    %2968 = vmatpush1.msra.mxu0 0.0
    %2969 = vmatprep.subr.mxu0 0.0
    %2970 = vmatpush1.msra.mxu0 0.0
    %2971 = vmatprep.subr.mxu0 0.0
    %2972 = vmatpush1.msra.mxu0 0.0
    %2973 = vmatprep.subr.mxu0 0.0
    %2974 = vmatpush1.msra.mxu0 0.0
    %2975 = vmatprep.subr.mxu0 0.0
    %2976 = vmatpush1.msra.mxu0 0.0
    %2977 = vmatprep.subr.mxu0 0.0
    %2978 = vmatpush1.msra.mxu0 0.0
    %2979 = vmatprep.subr.mxu0 0.0
    %2980 = vmatpush1.msra.mxu0 0.0
    %2981 = vmatprep.subr.mxu0 0.0
    %2982 = vmatpush1.msra.mxu0 0.0
    %2983 = vmatprep.subr.mxu0 0.0
    %2984 = vmatpush1.msra.mxu0 0.0
    %2985 = vmatprep.subr.mxu0 0.0
    %2986 = vmatpush1.msra.mxu0 0.0
    %2987 = vmatprep.subr.mxu0 0.0
    %2988 = vmatpush1.msra.mxu0 0.0
    %2989 = vmatprep.mubr.f32.mxu0 0.0
    %2990 = vmatmul.mubr.f32.gmra.mrb[0].mxu0 %v2091
    %v2991 = vpop.f32.mrb[0].mxu0
    %v2992 = vadd.f32 %v2923, %v2991
    %v2993 = vpop.f32.mrb[0].mxu0
    %2994 = vdwg.mxu0
    %v2995 = vmul.f32 %v2992, 0.5
    %v2996 = vtanh.pop %v2995
    %v2997 = vmul.f32 %v2996, 0.5
    %v2998 = vadd.f32 %v2997, 0.5
    %v2999 = vtanh.pop %v2992
    %3001 = vrot.lane.b32.xlu0 %v2999, 32
    %v3002 = vpop.permute.xlu0 %3001
    %v3004 = vmul.f32 %v2998, %v3002
    %v3005 = vtanh.pop %v3004
    %3007 = vrot.lane.b32.xlu0 %v3005, 64
    %v3008 = vpop.permute.xlu0 %3007
    %v3010 = vmul.f32 %v2998, %v3008
    %3012 = vrot.lane.b32.xlu0 %v2909, 64
    %v3013 = vpop.permute.xlu0 %3012
    %3016 = vrot.lane.b32.xlu0 %v3010, 96
    %v3017 = vpop.permute.xlu0 %3016
    %v3019 = vsel %vm1084, %v3013, %v3017
    %v3020 = vld [vmem:[#allocation13] sm:$0xff]
    %v3021 = vld [vmem:[#allocation13 + $0x8] sm:$0xff]
    %v3022 = vld [vmem:[#allocation13 + $0x10] sm:$0xff]
    %v3023 = vld [vmem:[#allocation13 + $0x18] sm:$0xff]
    %v3024 = vld [vmem:[#allocation13 + $0x20] sm:$0xff]
    %v3025 = vld [vmem:[#allocation13 + $0x28] sm:$0xff]
    %v3026 = vld [vmem:[#allocation13 + $0x30] sm:$0xff]
    %v3027 = vld [vmem:[#allocation13 + $0x38] sm:$0xff]
    %v3028 = vld [vmem:[#allocation13 + $0x40] sm:$0xff]
    %v3029 = vld [vmem:[#allocation13 + $0x48] sm:$0xff]
    %v3030 = vld [vmem:[#allocation13 + $0x50] sm:$0xff]
    %v3031 = vld [vmem:[#allocation13 + $0x58] sm:$0xff]
    %v3032 = vld [vmem:[#allocation13 + $0x60] sm:$0xff]
    %v3033 = vld [vmem:[#allocation13 + $0x68] sm:$0xff]
    %v3034 = vld [vmem:[#allocation13 + $0x70] sm:$0xff]
    %v3035 = vld [vmem:[#allocation13 + $0x78] sm:$0xff]
    %v3036 = vld [vmem:[#allocation13 + $0x80] sm:$0xff]
    %v3037 = vld [vmem:[#allocation13 + $0x88] sm:$0xff]
    %v3038 = vld [vmem:[#allocation13 + $0x90] sm:$0xff]
    %v3039 = vld [vmem:[#allocation13 + $0x98] sm:$0xff]
    %v3040 = vld [vmem:[#allocation13 + $0xa0] sm:$0xff]
    %v3041 = vld [vmem:[#allocation13 + $0xa8] sm:$0xff]
    %v3042 = vld [vmem:[#allocation13 + $0xb0] sm:$0xff]
    %v3043 = vld [vmem:[#allocation13 + $0xb8] sm:$0xff]
    %v3044 = vld [vmem:[#allocation13 + $0xc0] sm:$0xff]
    %v3045 = vld [vmem:[#allocation13 + $0xc8] sm:$0xff]
    %v3046 = vld [vmem:[#allocation13 + $0xd0] sm:$0xff]
    %v3047 = vld [vmem:[#allocation13 + $0xd8] sm:$0xff]
    %v3048 = vld [vmem:[#allocation13 + $0xe0] sm:$0xff]
    %v3049 = vld [vmem:[#allocation13 + $0xe8] sm:$0xff]
    %v3050 = vld [vmem:[#allocation13 + $0xf0] sm:$0xff]
    %v3051 = vld [vmem:[#allocation13 + $0xf8] sm:$0xff]
    %v3052 = vld [vmem:[#allocation13 + $0x100] sm:$0xff]
    %v3053 = vld [vmem:[#allocation13 + $0x108] sm:$0xff]
    %v3054 = vld [vmem:[#allocation13 + $0x110] sm:$0xff]
    %v3055 = vld [vmem:[#allocation13 + $0x118] sm:$0xff]
    %v3056 = vld [vmem:[#allocation13 + $0x120] sm:$0xff]
    %v3057 = vld [vmem:[#allocation13 + $0x128] sm:$0xff]
    %v3058 = vld [vmem:[#allocation13 + $0x130] sm:$0xff]
    %v3059 = vld [vmem:[#allocation13 + $0x138] sm:$0xff]
    %v3060 = vld [vmem:[#allocation13 + $0x140] sm:$0xff]
    %v3061 = vld [vmem:[#allocation13 + $0x148] sm:$0xff]
    %v3062 = vld [vmem:[#allocation13 + $0x150] sm:$0xff]
    %v3063 = vld [vmem:[#allocation13 + $0x158] sm:$0xff]
    %v3064 = vld [vmem:[#allocation13 + $0x160] sm:$0xff]
    %v3065 = vld [vmem:[#allocation13 + $0x168] sm:$0xff]
    %v3066 = vld [vmem:[#allocation13 + $0x170] sm:$0xff]
    %v3067 = vld [vmem:[#allocation13 + $0x178] sm:$0xff]
    %v3068 = vld [vmem:[#allocation13 + $0x180] sm:$0xff]
    %v3069 = vld [vmem:[#allocation13 + $0x188] sm:$0xff]
    %v3070 = vld [vmem:[#allocation13 + $0x190] sm:$0xff]
    %v3071 = vld [vmem:[#allocation13 + $0x198] sm:$0xff]
    %v3072 = vld [vmem:[#allocation13 + $0x1a0] sm:$0xff]
    %v3073 = vld [vmem:[#allocation13 + $0x1a8] sm:$0xff]
    %v3074 = vld [vmem:[#allocation13 + $0x1b0] sm:$0xff]
    %v3075 = vld [vmem:[#allocation13 + $0x1b8] sm:$0xff]
    %v3076 = vld [vmem:[#allocation13 + $0x1c0] sm:$0xff]
    %v3077 = vld [vmem:[#allocation13 + $0x1c8] sm:$0xff]
    %v3078 = vld [vmem:[#allocation13 + $0x1d0] sm:$0xff]
    %v3079 = vld [vmem:[#allocation13 + $0x1d8] sm:$0xff]
    %v3080 = vld [vmem:[#allocation13 + $0x1e0] sm:$0xff]
    %v3081 = vld [vmem:[#allocation13 + $0x1e8] sm:$0xff]
    %v3082 = vld [vmem:[#allocation13 + $0x1f0] sm:$0xff]
    %v3083 = vld [vmem:[#allocation13 + $0x1f8] sm:$0xff]
    %v3084 = vld [vmem:[#allocation13 + $0x200] sm:$0xff]
    %v3085 = vld [vmem:[#allocation13 + $0x208] sm:$0xff]
    %v3086 = vld [vmem:[#allocation13 + $0x210] sm:$0xff]
    %v3087 = vld [vmem:[#allocation13 + $0x218] sm:$0xff]
    %v3088 = vld [vmem:[#allocation13 + $0x220] sm:$0xff]
    %v3089 = vld [vmem:[#allocation13 + $0x228] sm:$0xff]
    %v3090 = vld [vmem:[#allocation13 + $0x230] sm:$0xff]
    %v3091 = vld [vmem:[#allocation13 + $0x238] sm:$0xff]
    %v3092 = vld [vmem:[#allocation13 + $0x240] sm:$0xff]
    %v3093 = vld [vmem:[#allocation13 + $0x248] sm:$0xff]
    %v3094 = vld [vmem:[#allocation13 + $0x250] sm:$0xff]
    %v3095 = vld [vmem:[#allocation13 + $0x258] sm:$0xff]
    %v3096 = vld [vmem:[#allocation13 + $0x260] sm:$0xff]
    %v3097 = vld [vmem:[#allocation13 + $0x268] sm:$0xff]
    %v3098 = vld [vmem:[#allocation13 + $0x270] sm:$0xff]
    %v3099 = vld [vmem:[#allocation13 + $0x278] sm:$0xff]
    %v3100 = vld [vmem:[#allocation13 + $0x280] sm:$0xff]
    %v3101 = vld [vmem:[#allocation13 + $0x288] sm:$0xff]
    %v3102 = vld [vmem:[#allocation13 + $0x290] sm:$0xff]
    %v3103 = vld [vmem:[#allocation13 + $0x298] sm:$0xff]
    %v3104 = vld [vmem:[#allocation13 + $0x2a0] sm:$0xff]
    %v3105 = vld [vmem:[#allocation13 + $0x2a8] sm:$0xff]
    %v3106 = vld [vmem:[#allocation13 + $0x2b0] sm:$0xff]
    %v3107 = vld [vmem:[#allocation13 + $0x2b8] sm:$0xff]
    %v3108 = vld [vmem:[#allocation13 + $0x2c0] sm:$0xff]
    %v3109 = vld [vmem:[#allocation13 + $0x2c8] sm:$0xff]
    %v3110 = vld [vmem:[#allocation13 + $0x2d0] sm:$0xff]
    %v3111 = vld [vmem:[#allocation13 + $0x2d8] sm:$0xff]
    %v3112 = vld [vmem:[#allocation13 + $0x2e0] sm:$0xff]
    %v3113 = vld [vmem:[#allocation13 + $0x2e8] sm:$0xff]
    %v3114 = vld [vmem:[#allocation13 + $0x2f0] sm:$0xff]
    %v3115 = vld [vmem:[#allocation13 + $0x2f8] sm:$0xff]
    %v3116 = vld [vmem:[#allocation13 + $0x300] sm:$0xff]
    %v3117 = vld [vmem:[#allocation13 + $0x308] sm:$0xff]
    %v3118 = vld [vmem:[#allocation13 + $0x310] sm:$0xff]
    %v3119 = vld [vmem:[#allocation13 + $0x318] sm:$0xff]
    %v3120 = vld [vmem:[#allocation13 + $0x320] sm:$0xff]
    %v3121 = vld [vmem:[#allocation13 + $0x328] sm:$0xff]
    %v3122 = vld [vmem:[#allocation13 + $0x330] sm:$0xff]
    %v3123 = vld [vmem:[#allocation13 + $0x338] sm:$0xff]
    %v3124 = vld [vmem:[#allocation14] sm:$0xff]
    %v3125 = vld [vmem:[#allocation14 + $0x8] sm:$0x1f]
    %v3128 = vlaneseq
    %v3129 = vshrl.u32 %v3128, 7
    %v3130 = vsub.s32 0, %v3129
    %v3131 = vrot.slane %v3124, %v3130
    %v3132 = vlaneseq
    %v3133 = vshrl.u32 %v3132, 7
    %v3134 = vsub.s32 1, %v3133
    %v3135 = vrot.slane %v3124, %v3134
    %v3136 = vlaneseq
    %v3137 = vshrl.u32 %v3136, 7
    %v3138 = vsub.s32 2, %v3137
    %v3139 = vrot.slane %v3124, %v3138
    %v3140 = vlaneseq
    %v3141 = vshrl.u32 %v3140, 7
    %v3142 = vsub.s32 3, %v3141
    %v3143 = vrot.slane %v3124, %v3142
    %v3144 = vlaneseq
    %v3145 = vshrl.u32 %v3144, 7
    %v3146 = vsub.s32 4, %v3145
    %v3147 = vrot.slane %v3124, %v3146
    %v3148 = vlaneseq
    %v3149 = vshrl.u32 %v3148, 7
    %v3150 = vsub.s32 5, %v3149
    %v3151 = vrot.slane %v3124, %v3150
    %v3152 = vlaneseq
    %v3153 = vshrl.u32 %v3152, 7
    %v3154 = vsub.s32 6, %v3153
    %v3155 = vrot.slane %v3124, %v3154
    %v3156 = vlaneseq
    %v3157 = vshrl.u32 %v3156, 7
    %v3158 = vsub.s32 7, %v3157
    %v3159 = vrot.slane %v3124, %v3158
    %v3160 = vlaneseq
    %v3161 = vshrl.u32 %v3160, 7
    %v3162 = vsub.s32 0, %v3161
    %v3163 = vrot.slane %v3125, %v3162
    %v3164 = vlaneseq
    %v3165 = vshrl.u32 %v3164, 7
    %v3166 = vsub.s32 1, %v3165
    %v3167 = vrot.slane %v3125, %v3166
    %v3168 = vlaneseq
    %v3169 = vshrl.u32 %v3168, 7
    %v3170 = vsub.s32 2, %v3169
    %v3171 = vrot.slane %v3125, %v3170
    %v3172 = vlaneseq
    %v3173 = vshrl.u32 %v3172, 7
    %v3174 = vsub.s32 3, %v3173
    %v3175 = vrot.slane %v3125, %v3174
    %v3176 = vlaneseq
    %v3177 = vshrl.u32 %v3176, 7
    %v3178 = vsub.s32 4, %v3177
    %v3179 = vrot.slane %v3125, %v3178
    %v3194 = vsel %vm369, %v3019, 0
    %3196 = vmatprep.subr.mxu0 %v3021
    %3197 = vmatpush1.msra.mxu0 %v3020
    %3198 = vmatprep.subr.mxu0 %v3034
    %3199 = vmatpush1.msra.mxu0 %v3033
    %3200 = vmatprep.subr.mxu0 %v3047
    %3201 = vmatpush1.msra.mxu0 %v3046
    %3202 = vmatprep.subr.mxu0 %v3060
    %3203 = vmatpush1.msra.mxu0 %v3059
    %3204 = vmatprep.subr.mxu0 %v3073
    %3205 = vmatpush1.msra.mxu0 %v3072
    %3206 = vmatprep.subr.mxu0 %v3086
    %3207 = vmatpush1.msra.mxu0 %v3085
    %3208 = vmatprep.subr.mxu0 %v3099
    %3209 = vmatpush1.msra.mxu0 %v3098
    %3210 = vmatprep.subr.mxu0 %v3112
    %3211 = vmatpush1.msra.mxu0 %v3111
    %3212 = vmatprep.subr.mxu0 0.0
    %3213 = vmatpush1.msra.mxu0 0.0
    %3214 = vmatprep.subr.mxu0 0.0
    %3215 = vmatpush1.msra.mxu0 0.0
    %3216 = vmatprep.subr.mxu0 0.0
    %3217 = vmatpush1.msra.mxu0 0.0
    %3218 = vmatprep.subr.mxu0 0.0
    %3219 = vmatpush1.msra.mxu0 0.0
    %3220 = vmatprep.subr.mxu0 0.0
    %3221 = vmatpush1.msra.mxu0 0.0
    %3222 = vmatprep.subr.mxu0 0.0
    %3223 = vmatpush1.msra.mxu0 0.0
    %3224 = vmatprep.subr.mxu0 0.0
    %3225 = vmatpush1.msra.mxu0 0.0
    %3226 = vmatprep.subr.mxu0 0.0
    %3227 = vmatpush1.msra.mxu0 0.0
    %3228 = vmatprep.subr.mxu0 0.0
    %3229 = vmatpush1.msra.mxu0 0.0
    %3230 = vmatprep.subr.mxu0 0.0
    %3231 = vmatpush1.msra.mxu0 0.0
    %3232 = vmatprep.subr.mxu0 0.0
    %3233 = vmatpush1.msra.mxu0 0.0
    %3234 = vmatprep.subr.mxu0 0.0
    %3235 = vmatpush1.msra.mxu0 0.0
    %3236 = vmatprep.subr.mxu0 0.0
    %3237 = vmatpush1.msra.mxu0 0.0
    %3238 = vmatprep.subr.mxu0 0.0
    %3239 = vmatpush1.msra.mxu0 0.0
    %3240 = vmatprep.subr.mxu0 0.0
    %3241 = vmatpush1.msra.mxu0 0.0
    %3242 = vmatprep.subr.mxu0 0.0
    %3243 = vmatpush1.msra.mxu0 0.0
    %3244 = vmatprep.subr.mxu0 0.0
    %3245 = vmatpush1.msra.mxu0 0.0
    %3246 = vmatprep.subr.mxu0 0.0
    %3247 = vmatpush1.msra.mxu0 0.0
    %3248 = vmatprep.subr.mxu0 0.0
    %3249 = vmatpush1.msra.mxu0 0.0
    %3250 = vmatprep.subr.mxu0 0.0
    %3251 = vmatpush1.msra.mxu0 0.0
    %3252 = vmatprep.subr.mxu0 0.0
    %3253 = vmatpush1.msra.mxu0 0.0
    %3254 = vmatprep.subr.mxu0 0.0
    %3255 = vmatpush1.msra.mxu0 0.0
    %3256 = vmatprep.subr.mxu0 0.0
    %3257 = vmatpush1.msra.mxu0 0.0
    %3258 = vmatprep.subr.mxu0 0.0
    %3259 = vmatpush1.msra.mxu0 0.0
    %3260 = vmatprep.mubr.f32.mxu0 0.0
    %3261 = vmatmul.mubr.f32.gmra.mrb[0].mxu0 %v3194
    %v3262 = vpop.f32.mrb[0].mxu0
    %v3263 = vadd.f32 %v3131, %v3262
    %v3264 = vpop.f32.mrb[0].mxu0
    %v3265 = vadd.f32 %v3135, %v3264
    %3266 = vdwg.mxu0
    %3267 = vmatprep.subr.mxu0 %v3023
    %3268 = vmatpush1.msra.mxu0 %v3022
    %3269 = vmatprep.subr.mxu0 %v3036
    %3270 = vmatpush1.msra.mxu0 %v3035
    %3271 = vmatprep.subr.mxu0 %v3049
    %3272 = vmatpush1.msra.mxu0 %v3048
    %3273 = vmatprep.subr.mxu0 %v3062
    %3274 = vmatpush1.msra.mxu0 %v3061
    %3275 = vmatprep.subr.mxu0 %v3075
    %3276 = vmatpush1.msra.mxu0 %v3074
    %3277 = vmatprep.subr.mxu0 %v3088
    %3278 = vmatpush1.msra.mxu0 %v3087
    %3279 = vmatprep.subr.mxu0 %v3101
    %3280 = vmatpush1.msra.mxu0 %v3100
    %3281 = vmatprep.subr.mxu0 %v3114
    %3282 = vmatpush1.msra.mxu0 %v3113
    %3283 = vmatprep.subr.mxu0 0.0
    %3284 = vmatpush1.msra.mxu0 0.0
    %3285 = vmatprep.subr.mxu0 0.0
    %3286 = vmatpush1.msra.mxu0 0.0
    %3287 = vmatprep.subr.mxu0 0.0
    %3288 = vmatpush1.msra.mxu0 0.0
    %3289 = vmatprep.subr.mxu0 0.0
    %3290 = vmatpush1.msra.mxu0 0.0
    %3291 = vmatprep.subr.mxu0 0.0
    %3292 = vmatpush1.msra.mxu0 0.0
    %3293 = vmatprep.subr.mxu0 0.0
    %3294 = vmatpush1.msra.mxu0 0.0
    %3295 = vmatprep.subr.mxu0 0.0
    %3296 = vmatpush1.msra.mxu0 0.0
    %3297 = vmatprep.subr.mxu0 0.0
    %3298 = vmatpush1.msra.mxu0 0.0
    %3299 = vmatprep.subr.mxu0 0.0
    %3300 = vmatpush1.msra.mxu0 0.0
    %3301 = vmatprep.subr.mxu0 0.0
    %3302 = vmatpush1.msra.mxu0 0.0
    %3303 = vmatprep.subr.mxu0 0.0
    %3304 = vmatpush1.msra.mxu0 0.0
    %3305 = vmatprep.subr.mxu0 0.0
    %3306 = vmatpush1.msra.mxu0 0.0
    %3307 = vmatprep.subr.mxu0 0.0
    %3308 = vmatpush1.msra.mxu0 0.0
    %3309 = vmatprep.subr.mxu0 0.0
    %3310 = vmatpush1.msra.mxu0 0.0
    %3311 = vmatprep.subr.mxu0 0.0
    %3312 = vmatpush1.msra.mxu0 0.0
    %3313 = vmatprep.subr.mxu0 0.0
    %3314 = vmatpush1.msra.mxu0 0.0
    %3315 = vmatprep.subr.mxu0 0.0
    %3316 = vmatpush1.msra.mxu0 0.0
    %3317 = vmatprep.subr.mxu0 0.0
    %3318 = vmatpush1.msra.mxu0 0.0
    %3319 = vmatprep.subr.mxu0 0.0
    %3320 = vmatpush1.msra.mxu0 0.0
    %3321 = vmatprep.subr.mxu0 0.0
    %3322 = vmatpush1.msra.mxu0 0.0
    %3323 = vmatprep.subr.mxu0 0.0
    %3324 = vmatpush1.msra.mxu0 0.0
    %3325 = vmatprep.subr.mxu0 0.0
    %3326 = vmatpush1.msra.mxu0 0.0
    %3327 = vmatprep.subr.mxu0 0.0
    %3328 = vmatpush1.msra.mxu0 0.0
    %3329 = vmatprep.subr.mxu0 0.0
    %3330 = vmatpush1.msra.mxu0 0.0
    %3331 = vmatprep.mubr.f32.mxu0 0.0
    %3332 = vmatmul.mubr.f32.gmra.mrb[0].mxu0 %v3194
    %v3333 = vpop.f32.mrb[0].mxu0
    %v3334 = vadd.f32 %v3139, %v3333
    %v3335 = vpop.f32.mrb[0].mxu0
    %v3336 = vadd.f32 %v3143, %v3335
    %3337 = vdwg.mxu0
    %3338 = vmatprep.subr.mxu0 %v3025
    %3339 = vmatpush1.msra.mxu0 %v3024
    %3340 = vmatprep.subr.mxu0 %v3038
    %3341 = vmatpush1.msra.mxu0 %v3037
    %3342 = vmatprep.subr.mxu0 %v3051
    %3343 = vmatpush1.msra.mxu0 %v3050
    %3344 = vmatprep.subr.mxu0 %v3064
    %3345 = vmatpush1.msra.mxu0 %v3063
    %3346 = vmatprep.subr.mxu0 %v3077
    %3347 = vmatpush1.msra.mxu0 %v3076
    %3348 = vmatprep.subr.mxu0 %v3090
    %3349 = vmatpush1.msra.mxu0 %v3089
    %3350 = vmatprep.subr.mxu0 %v3103
    %3351 = vmatpush1.msra.mxu0 %v3102
    %3352 = vmatprep.subr.mxu0 %v3116
    %3353 = vmatpush1.msra.mxu0 %v3115
    %3354 = vmatprep.subr.mxu0 0.0
    %3355 = vmatpush1.msra.mxu0 0.0
    %3356 = vmatprep.subr.mxu0 0.0
    %3357 = vmatpush1.msra.mxu0 0.0
    %3358 = vmatprep.subr.mxu0 0.0
    %3359 = vmatpush1.msra.mxu0 0.0
    %3360 = vmatprep.subr.mxu0 0.0
    %3361 = vmatpush1.msra.mxu0 0.0
    %3362 = vmatprep.subr.mxu0 0.0
    %3363 = vmatpush1.msra.mxu0 0.0
    %3364 = vmatprep.subr.mxu0 0.0
    %3365 = vmatpush1.msra.mxu0 0.0
    %3366 = vmatprep.subr.mxu0 0.0
    %3367 = vmatpush1.msra.mxu0 0.0
    %3368 = vmatprep.subr.mxu0 0.0
    %3369 = vmatpush1.msra.mxu0 0.0
    %3370 = vmatprep.subr.mxu0 0.0
    %3371 = vmatpush1.msra.mxu0 0.0
    %3372 = vmatprep.subr.mxu0 0.0
    %3373 = vmatpush1.msra.mxu0 0.0
    %3374 = vmatprep.subr.mxu0 0.0
    %3375 = vmatpush1.msra.mxu0 0.0
    %3376 = vmatprep.subr.mxu0 0.0
    %3377 = vmatpush1.msra.mxu0 0.0
    %3378 = vmatprep.subr.mxu0 0.0
    %3379 = vmatpush1.msra.mxu0 0.0
    %3380 = vmatprep.subr.mxu0 0.0
    %3381 = vmatpush1.msra.mxu0 0.0
    %3382 = vmatprep.subr.mxu0 0.0
    %3383 = vmatpush1.msra.mxu0 0.0
    %3384 = vmatprep.subr.mxu0 0.0
    %3385 = vmatpush1.msra.mxu0 0.0
    %3386 = vmatprep.subr.mxu0 0.0
    %3387 = vmatpush1.msra.mxu0 0.0
    %3388 = vmatprep.subr.mxu0 0.0
    %3389 = vmatpush1.msra.mxu0 0.0
    %3390 = vmatprep.subr.mxu0 0.0
    %3391 = vmatpush1.msra.mxu0 0.0
    %3392 = vmatprep.subr.mxu0 0.0
    %3393 = vmatpush1.msra.mxu0 0.0
    %3394 = vmatprep.subr.mxu0 0.0
    %3395 = vmatpush1.msra.mxu0 0.0
    %3396 = vmatprep.subr.mxu0 0.0
    %3397 = vmatpush1.msra.mxu0 0.0
    %3398 = vmatprep.subr.mxu0 0.0
    %3399 = vmatpush1.msra.mxu0 0.0
    %3400 = vmatprep.subr.mxu0 0.0
    %3401 = vmatpush1.msra.mxu0 0.0
    %3402 = vmatprep.mubr.f32.mxu0 0.0
    %3403 = vmatmul.mubr.f32.gmra.mrb[0].mxu0 %v3194
    %v3404 = vpop.f32.mrb[0].mxu0
    %v3405 = vadd.f32 %v3147, %v3404
    %v3406 = vpop.f32.mrb[0].mxu0
    %v3407 = vadd.f32 %v3151, %v3406
    %3408 = vdwg.mxu0
    %3409 = vmatprep.subr.mxu0 %v3027
    %3410 = vmatpush1.msra.mxu0 %v3026
    %3411 = vmatprep.subr.mxu0 %v3040
    %3412 = vmatpush1.msra.mxu0 %v3039
    %3413 = vmatprep.subr.mxu0 %v3053
    %3414 = vmatpush1.msra.mxu0 %v3052
    %3415 = vmatprep.subr.mxu0 %v3066
    %3416 = vmatpush1.msra.mxu0 %v3065
    %3417 = vmatprep.subr.mxu0 %v3079
    %3418 = vmatpush1.msra.mxu0 %v3078
    %3419 = vmatprep.subr.mxu0 %v3092
    %3420 = vmatpush1.msra.mxu0 %v3091
    %3421 = vmatprep.subr.mxu0 %v3105
    %3422 = vmatpush1.msra.mxu0 %v3104
    %3423 = vmatprep.subr.mxu0 %v3118
    %3424 = vmatpush1.msra.mxu0 %v3117
    %3425 = vmatprep.subr.mxu0 0.0
    %3426 = vmatpush1.msra.mxu0 0.0
    %3427 = vmatprep.subr.mxu0 0.0
    %3428 = vmatpush1.msra.mxu0 0.0
    %3429 = vmatprep.subr.mxu0 0.0
    %3430 = vmatpush1.msra.mxu0 0.0
    %3431 = vmatprep.subr.mxu0 0.0
    %3432 = vmatpush1.msra.mxu0 0.0
    %3433 = vmatprep.subr.mxu0 0.0
    %3434 = vmatpush1.msra.mxu0 0.0
    %3435 = vmatprep.subr.mxu0 0.0
    %3436 = vmatpush1.msra.mxu0 0.0
    %3437 = vmatprep.subr.mxu0 0.0
    %3438 = vmatpush1.msra.mxu0 0.0
    %3439 = vmatprep.subr.mxu0 0.0
    %3440 = vmatpush1.msra.mxu0 0.0
    %3441 = vmatprep.subr.mxu0 0.0
    %3442 = vmatpush1.msra.mxu0 0.0
    %3443 = vmatprep.subr.mxu0 0.0
    %3444 = vmatpush1.msra.mxu0 0.0
    %3445 = vmatprep.subr.mxu0 0.0
    %3446 = vmatpush1.msra.mxu0 0.0
    %3447 = vmatprep.subr.mxu0 0.0
    %3448 = vmatpush1.msra.mxu0 0.0
    %3449 = vmatprep.subr.mxu0 0.0
    %3450 = vmatpush1.msra.mxu0 0.0
    %3451 = vmatprep.subr.mxu0 0.0
    %3452 = vmatpush1.msra.mxu0 0.0
    %3453 = vmatprep.subr.mxu0 0.0
    %3454 = vmatpush1.msra.mxu0 0.0
    %3455 = vmatprep.subr.mxu0 0.0
    %3456 = vmatpush1.msra.mxu0 0.0
    %3457 = vmatprep.subr.mxu0 0.0
    %3458 = vmatpush1.msra.mxu0 0.0
    %3459 = vmatprep.subr.mxu0 0.0
    %3460 = vmatpush1.msra.mxu0 0.0
    %3461 = vmatprep.subr.mxu0 0.0
    %3462 = vmatpush1.msra.mxu0 0.0
    %3463 = vmatprep.subr.mxu0 0.0
    %3464 = vmatpush1.msra.mxu0 0.0
    %3465 = vmatprep.subr.mxu0 0.0
    %3466 = vmatpush1.msra.mxu0 0.0
    %3467 = vmatprep.subr.mxu0 0.0
    %3468 = vmatpush1.msra.mxu0 0.0
    %3469 = vmatprep.subr.mxu0 0.0
    %3470 = vmatpush1.msra.mxu0 0.0
    %3471 = vmatprep.subr.mxu0 0.0
    %3472 = vmatpush1.msra.mxu0 0.0
    %3473 = vmatprep.mubr.f32.mxu0 0.0
    %3474 = vmatmul.mubr.f32.gmra.mrb[0].mxu0 %v3194
    %v3475 = vpop.f32.mrb[0].mxu0
    %v3476 = vadd.f32 %v3155, %v3475
    %v3477 = vpop.f32.mrb[0].mxu0
    %v3478 = vadd.f32 %v3159, %v3477
    %3479 = vdwg.mxu0
    %3480 = vmatprep.subr.mxu0 %v3029
    %3481 = vmatpush1.msra.mxu0 %v3028
    %3482 = vmatprep.subr.mxu0 %v3042
    %3483 = vmatpush1.msra.mxu0 %v3041
    %3484 = vmatprep.subr.mxu0 %v3055
    %3485 = vmatpush1.msra.mxu0 %v3054
    %3486 = vmatprep.subr.mxu0 %v3068
    %3487 = vmatpush1.msra.mxu0 %v3067
    %3488 = vmatprep.subr.mxu0 %v3081
    %3489 = vmatpush1.msra.mxu0 %v3080
    %3490 = vmatprep.subr.mxu0 %v3094
    %3491 = vmatpush1.msra.mxu0 %v3093
    %3492 = vmatprep.subr.mxu0 %v3107
    %3493 = vmatpush1.msra.mxu0 %v3106
    %3494 = vmatprep.subr.mxu0 %v3120
    %3495 = vmatpush1.msra.mxu0 %v3119
    %3496 = vmatprep.subr.mxu0 0.0
    %3497 = vmatpush1.msra.mxu0 0.0
    %3498 = vmatprep.subr.mxu0 0.0
    %3499 = vmatpush1.msra.mxu0 0.0
    %3500 = vmatprep.subr.mxu0 0.0
    %3501 = vmatpush1.msra.mxu0 0.0
    %3502 = vmatprep.subr.mxu0 0.0
    %3503 = vmatpush1.msra.mxu0 0.0
    %3504 = vmatprep.subr.mxu0 0.0
    %3505 = vmatpush1.msra.mxu0 0.0
    %3506 = vmatprep.subr.mxu0 0.0
    %3507 = vmatpush1.msra.mxu0 0.0
    %3508 = vmatprep.subr.mxu0 0.0
    %3509 = vmatpush1.msra.mxu0 0.0
    %3510 = vmatprep.subr.mxu0 0.0
    %3511 = vmatpush1.msra.mxu0 0.0
    %3512 = vmatprep.subr.mxu0 0.0
    %3513 = vmatpush1.msra.mxu0 0.0
    %3514 = vmatprep.subr.mxu0 0.0
    %3515 = vmatpush1.msra.mxu0 0.0
    %3516 = vmatprep.subr.mxu0 0.0
    %3517 = vmatpush1.msra.mxu0 0.0
    %3518 = vmatprep.subr.mxu0 0.0
    %3519 = vmatpush1.msra.mxu0 0.0
    %3520 = vmatprep.subr.mxu0 0.0
    %3521 = vmatpush1.msra.mxu0 0.0
    %3522 = vmatprep.subr.mxu0 0.0
    %3523 = vmatpush1.msra.mxu0 0.0
    %3524 = vmatprep.subr.mxu0 0.0
    %3525 = vmatpush1.msra.mxu0 0.0
    %3526 = vmatprep.subr.mxu0 0.0
    %3527 = vmatpush1.msra.mxu0 0.0
    %3528 = vmatprep.subr.mxu0 0.0
    %3529 = vmatpush1.msra.mxu0 0.0
    %3530 = vmatprep.subr.mxu0 0.0
    %3531 = vmatpush1.msra.mxu0 0.0
    %3532 = vmatprep.subr.mxu0 0.0
    %3533 = vmatpush1.msra.mxu0 0.0
    %3534 = vmatprep.subr.mxu0 0.0
    %3535 = vmatpush1.msra.mxu0 0.0
    %3536 = vmatprep.subr.mxu0 0.0
    %3537 = vmatpush1.msra.mxu0 0.0
    %3538 = vmatprep.subr.mxu0 0.0
    %3539 = vmatpush1.msra.mxu0 0.0
    %3540 = vmatprep.subr.mxu0 0.0
    %3541 = vmatpush1.msra.mxu0 0.0
    %3542 = vmatprep.subr.mxu0 0.0
    %3543 = vmatpush1.msra.mxu0 0.0
    %3544 = vmatprep.mubr.f32.mxu0 0.0
    %3545 = vmatmul.mubr.f32.gmra.mrb[0].mxu0 %v3194
    %v3546 = vpop.f32.mrb[0].mxu0
    %v3547 = vadd.f32 %v3163, %v3546
    %v3548 = vpop.f32.mrb[0].mxu0
    %v3549 = vadd.f32 %v3167, %v3548
    %3550 = vdwg.mxu0
    %3551 = vmatprep.subr.mxu0 %v3031
    %3552 = vmatpush1.msra.mxu0 %v3030
    %3553 = vmatprep.subr.mxu0 %v3044
    %3554 = vmatpush1.msra.mxu0 %v3043
    %3555 = vmatprep.subr.mxu0 %v3057
    %3556 = vmatpush1.msra.mxu0 %v3056
    %3557 = vmatprep.subr.mxu0 %v3070
    %3558 = vmatpush1.msra.mxu0 %v3069
    %3559 = vmatprep.subr.mxu0 %v3083
    %3560 = vmatpush1.msra.mxu0 %v3082
    %3561 = vmatprep.subr.mxu0 %v3096
    %3562 = vmatpush1.msra.mxu0 %v3095
    %3563 = vmatprep.subr.mxu0 %v3109
    %3564 = vmatpush1.msra.mxu0 %v3108
    %3565 = vmatprep.subr.mxu0 %v3122
    %3566 = vmatpush1.msra.mxu0 %v3121
    %3567 = vmatprep.subr.mxu0 0.0
    %3568 = vmatpush1.msra.mxu0 0.0
    %3569 = vmatprep.subr.mxu0 0.0
    %3570 = vmatpush1.msra.mxu0 0.0
    %3571 = vmatprep.subr.mxu0 0.0
    %3572 = vmatpush1.msra.mxu0 0.0
    %3573 = vmatprep.subr.mxu0 0.0
    %3574 = vmatpush1.msra.mxu0 0.0
    %3575 = vmatprep.subr.mxu0 0.0
    %3576 = vmatpush1.msra.mxu0 0.0
    %3577 = vmatprep.subr.mxu0 0.0
    %3578 = vmatpush1.msra.mxu0 0.0
    %3579 = vmatprep.subr.mxu0 0.0
    %3580 = vmatpush1.msra.mxu0 0.0
    %3581 = vmatprep.subr.mxu0 0.0
    %3582 = vmatpush1.msra.mxu0 0.0
    %3583 = vmatprep.subr.mxu0 0.0
    %3584 = vmatpush1.msra.mxu0 0.0
    %3585 = vmatprep.subr.mxu0 0.0
    %3586 = vmatpush1.msra.mxu0 0.0
    %3587 = vmatprep.subr.mxu0 0.0
    %3588 = vmatpush1.msra.mxu0 0.0
    %3589 = vmatprep.subr.mxu0 0.0
    %3590 = vmatpush1.msra.mxu0 0.0
    %3591 = vmatprep.subr.mxu0 0.0
    %3592 = vmatpush1.msra.mxu0 0.0
    %3593 = vmatprep.subr.mxu0 0.0
    %3594 = vmatpush1.msra.mxu0 0.0
    %3595 = vmatprep.subr.mxu0 0.0
    %3596 = vmatpush1.msra.mxu0 0.0
    %3597 = vmatprep.subr.mxu0 0.0
    %3598 = vmatpush1.msra.mxu0 0.0
    %3599 = vmatprep.subr.mxu0 0.0
    %3600 = vmatpush1.msra.mxu0 0.0
    %3601 = vmatprep.subr.mxu0 0.0
    %3602 = vmatpush1.msra.mxu0 0.0
    %3603 = vmatprep.subr.mxu0 0.0
    %3604 = vmatpush1.msra.mxu0 0.0
    %3605 = vmatprep.subr.mxu0 0.0
    %3606 = vmatpush1.msra.mxu0 0.0
    %3607 = vmatprep.subr.mxu0 0.0
    %3608 = vmatpush1.msra.mxu0 0.0
    %3609 = vmatprep.subr.mxu0 0.0
    %3610 = vmatpush1.msra.mxu0 0.0
    %3611 = vmatprep.subr.mxu0 0.0
    %3612 = vmatpush1.msra.mxu0 0.0
    %3613 = vmatprep.subr.mxu0 0.0
    %3614 = vmatpush1.msra.mxu0 0.0
    %3615 = vmatprep.mubr.f32.mxu0 0.0
    %3616 = vmatmul.mubr.f32.gmra.mrb[0].mxu0 %v3194
    %v3617 = vpop.f32.mrb[0].mxu0
    %v3618 = vadd.f32 %v3171, %v3617
    %v3619 = vpop.f32.mrb[0].mxu0
    %v3620 = vadd.f32 %v3175, %v3619
    %3621 = vdwg.mxu0
    %3622 = vmatprep.subr.mxu0 0.0
    %3623 = vmatpush1.msra.mxu0 %v3032
    %3624 = vmatprep.subr.mxu0 0.0
    %3625 = vmatpush1.msra.mxu0 %v3045
    %3626 = vmatprep.subr.mxu0 0.0
    %3627 = vmatpush1.msra.mxu0 %v3058
    %3628 = vmatprep.subr.mxu0 0.0
    %3629 = vmatpush1.msra.mxu0 %v3071
    %3630 = vmatprep.subr.mxu0 0.0
    %3631 = vmatpush1.msra.mxu0 %v3084
    %3632 = vmatprep.subr.mxu0 0.0
    %3633 = vmatpush1.msra.mxu0 %v3097
    %3634 = vmatprep.subr.mxu0 0.0
    %3635 = vmatpush1.msra.mxu0 %v3110
    %3636 = vmatprep.subr.mxu0 0.0
    %3637 = vmatpush1.msra.mxu0 %v3123
    %3638 = vmatprep.subr.mxu0 0.0
    %3639 = vmatpush1.msra.mxu0 0.0
    %3640 = vmatprep.subr.mxu0 0.0
    %3641 = vmatpush1.msra.mxu0 0.0
    %3642 = vmatprep.subr.mxu0 0.0
    %3643 = vmatpush1.msra.mxu0 0.0
    %3644 = vmatprep.subr.mxu0 0.0
    %3645 = vmatpush1.msra.mxu0 0.0
    %3646 = vmatprep.subr.mxu0 0.0
    %3647 = vmatpush1.msra.mxu0 0.0
    %3648 = vmatprep.subr.mxu0 0.0
    %3649 = vmatpush1.msra.mxu0 0.0
    %3650 = vmatprep.subr.mxu0 0.0
    %3651 = vmatpush1.msra.mxu0 0.0
    %3652 = vmatprep.subr.mxu0 0.0
    %3653 = vmatpush1.msra.mxu0 0.0
    %3654 = vmatprep.subr.mxu0 0.0
    %3655 = vmatpush1.msra.mxu0 0.0
    %3656 = vmatprep.subr.mxu0 0.0
    %3657 = vmatpush1.msra.mxu0 0.0
    %3658 = vmatprep.subr.mxu0 0.0
    %3659 = vmatpush1.msra.mxu0 0.0
    %3660 = vmatprep.subr.mxu0 0.0
    %3661 = vmatpush1.msra.mxu0 0.0
    %3662 = vmatprep.subr.mxu0 0.0
    %3663 = vmatpush1.msra.mxu0 0.0
    %3664 = vmatprep.subr.mxu0 0.0
    %3665 = vmatpush1.msra.mxu0 0.0
    %3666 = vmatprep.subr.mxu0 0.0
    %3667 = vmatpush1.msra.mxu0 0.0
    %3668 = vmatprep.subr.mxu0 0.0
    %3669 = vmatpush1.msra.mxu0 0.0
    %3670 = vmatprep.subr.mxu0 0.0
    %3671 = vmatpush1.msra.mxu0 0.0
    %3672 = vmatprep.subr.mxu0 0.0
    %3673 = vmatpush1.msra.mxu0 0.0
    %3674 = vmatprep.subr.mxu0 0.0
    %3675 = vmatpush1.msra.mxu0 0.0
    %3676 = vmatprep.subr.mxu0 0.0
    %3677 = vmatpush1.msra.mxu0 0.0
    %3678 = vmatprep.subr.mxu0 0.0
    %3679 = vmatpush1.msra.mxu0 0.0
    %3680 = vmatprep.subr.mxu0 0.0
    %3681 = vmatpush1.msra.mxu0 0.0
    %3682 = vmatprep.subr.mxu0 0.0
    %3683 = vmatpush1.msra.mxu0 0.0
    %3684 = vmatprep.subr.mxu0 0.0
    %3685 = vmatpush1.msra.mxu0 0.0
    %3686 = vmatprep.mubr.f32.mxu0 0.0
    %3687 = vmatmul.mubr.f32.gmra.mrb[0].mxu0 %v3194
    %v3688 = vpop.f32.mrb[0].mxu0
    %v3689 = vadd.f32 %v3179, %v3688
    %v3690 = vpop.f32.mrb[0].mxu0
    %3691 = vdwg.mxu0
    %v3692 = vmax.f32 %v3263, 0.0
    %v3693 = vmax.f32 %v3265, 0.0
    %v3694 = vmax.f32 %v3334, 0.0
    %v3695 = vmax.f32 %v3336, 0.0
    %v3696 = vmax.f32 %v3405, 0.0
    %v3697 = vmax.f32 %v3407, 0.0
    %v3698 = vmax.f32 %v3476, 0.0
    %v3699 = vmax.f32 %v3478, 0.0
    %v3700 = vmax.f32 %v3547, 0.0
    %v3701 = vmax.f32 %v3549, 0.0
    %v3702 = vmax.f32 %v3618, 0.0
    %v3703 = vmax.f32 %v3620, 0.0
    %v3704 = vmax.f32 %v3689, 0.0
    %v3705 = vld [vmem:[#allocation16] sm:$0xff]
    %v3706 = vld [vmem:[#allocation16 + $0x8] sm:$0x1f]
    %v3709 = vlaneseq
    %v3710 = vshrl.u32 %v3709, 7
    %v3711 = vsub.s32 0, %v3710
    %v3712 = vrot.slane %v3705, %v3711
    %v3713 = vlaneseq
    %v3714 = vshrl.u32 %v3713, 7
    %v3715 = vsub.s32 1, %v3714
    %v3716 = vrot.slane %v3705, %v3715
    %v3717 = vlaneseq
    %v3718 = vshrl.u32 %v3717, 7
    %v3719 = vsub.s32 2, %v3718
    %v3720 = vrot.slane %v3705, %v3719
    %v3721 = vlaneseq
    %v3722 = vshrl.u32 %v3721, 7
    %v3723 = vsub.s32 3, %v3722
    %v3724 = vrot.slane %v3705, %v3723
    %v3725 = vlaneseq
    %v3726 = vshrl.u32 %v3725, 7
    %v3727 = vsub.s32 4, %v3726
    %v3728 = vrot.slane %v3705, %v3727
    %v3729 = vlaneseq
    %v3730 = vshrl.u32 %v3729, 7
    %v3731 = vsub.s32 5, %v3730
    %v3732 = vrot.slane %v3705, %v3731
    %v3733 = vlaneseq
    %v3734 = vshrl.u32 %v3733, 7
    %v3735 = vsub.s32 6, %v3734
    %v3736 = vrot.slane %v3705, %v3735
    %v3737 = vlaneseq
    %v3738 = vshrl.u32 %v3737, 7
    %v3739 = vsub.s32 7, %v3738
    %v3740 = vrot.slane %v3705, %v3739
    %v3741 = vlaneseq
    %v3742 = vshrl.u32 %v3741, 7
    %v3743 = vsub.s32 0, %v3742
    %v3744 = vrot.slane %v3706, %v3743
    %v3745 = vlaneseq
    %v3746 = vshrl.u32 %v3745, 7
    %v3747 = vsub.s32 1, %v3746
    %v3748 = vrot.slane %v3706, %v3747
    %v3749 = vlaneseq
    %v3750 = vshrl.u32 %v3749, 7
    %v3751 = vsub.s32 2, %v3750
    %v3752 = vrot.slane %v3706, %v3751
    %v3753 = vlaneseq
    %v3754 = vshrl.u32 %v3753, 7
    %v3755 = vsub.s32 3, %v3754
    %v3756 = vrot.slane %v3706, %v3755
    %v3757 = vlaneseq
    %v3758 = vshrl.u32 %v3757, 7
    %v3759 = vsub.s32 4, %v3758
    %v3760 = vrot.slane %v3706, %v3759
    %v3774 = vmul.f32 %v3692, %v3712
    %v3775 = vmul.f32 %v3693, %v3716
    %v3776 = vmul.f32 %v3694, %v3720
    %v3777 = vmul.f32 %v3695, %v3724
    %v3778 = vmul.f32 %v3696, %v3728
    %v3779 = vmul.f32 %v3697, %v3732
    %v3780 = vmul.f32 %v3698, %v3736
    %v3781 = vmul.f32 %v3699, %v3740
    %v3782 = vmul.f32 %v3700, %v3744
    %v3783 = vmul.f32 %v3701, %v3748
    %v3784 = vmul.f32 %v3702, %v3752
    %v3785 = vmul.f32 %v3703, %v3756
    %v3786 = vmul.f32 %v3704, %v3760
    %v3787 = vadd.f32 %v3774, %v3775
    %v3788 = vadd.f32 %v3787, %v3776
    %v3789 = vadd.f32 %v3788, %v3777
    %v3790 = vadd.f32 %v3789, %v3778
    %v3791 = vadd.f32 %v3790, %v3779
    %v3792 = vadd.f32 %v3791, %v3780
    %v3793 = vadd.f32 %v3792, %v3781
    %v3794 = vadd.f32 %v3793, %v3782
    %v3795 = vadd.f32 %v3794, %v3783
    %v3796 = vadd.f32 %v3795, %v3784
    %v3797 = vadd.f32 %v3796, %v3785
    %v3798 = vadd.f32 %v3797, %v3786
    %3799 = vadd.xlane.f32.xlu0 %v3798
    %v3800 = vpop.xlane.xlu0 %3799
    %v3801 = vld [vmem:[#allocation2] sm:$0x1]
    %v3803 = vlaneseq
    %v3804 = vshrl.u32 %v3803, 7
    %v3805 = vsub.s32 0, %v3804
    %v3806 = vrot.slane %v3801, %v3805
    %v3808 = vadd.f32 %v3800, %v3806
    %vm3809 = vcmask 7168
    %3810 = vst.msk [vmem:[%s16] sm:$0xff] %vm3809, %v3808
    // Predicated region
    $region102: #{bilstm_forward.1} parent=1 // pred_check
      _
    $region103: #{bilstm_forward.1} parent=1 // pred_check_branch
      %3812 = sbr.rel (0) target = $region105
    $region104: #{bilstm_forward.1} parent=1 // pred_region
      _
    $region105: #{bilstm_forward.1} parent=1 // pred_fallthru
      _
    // Predicated region
    $region106: #{bilstm_forward.1} parent=1 // pred_check
      _
    $region107: #{bilstm_forward.1} parent=1 // pred_check_branch
      %3814 = sbr.rel (0) target = $region109
    $region108: #{bilstm_forward.1} parent=1 // pred_region
      _
    $region109: #{bilstm_forward.1} parent=1 // pred_fallthru
      _
    %3815 = vsyncpa [#allocation4], 1
    %3816 = vsyncpa [#allocation6], 1
    %3817 = vsyncpa [#allocation9], 1
    %3818 = vsyncpa [#allocation12], 1
    %3819 = vsyncpa [#allocation15], 1

</llo_original>
